<compile_context>
chip_gen: v6e
topology: v6e:2x2x1
jax: 0.10.0
libtpu: 0.0.40
codegen_flags: <defaults>
</compile_context>

<pallas_src>
import jax
import jax.numpy as jnp
from jax.experimental import pallas as pl
from jax.experimental.pallas import tpu as pltpu

LANE = 128  # TPU lane width; all GEMM N dims are padded to this.


# ---------------------------------------------------------------------------
# Pallas kernels
# ---------------------------------------------------------------------------
def _conv_relu_pool_kernel(p0_ref, p1_ref, p2_ref, p3_ref, w_ref, b_ref, o_ref):
    """Fused conv(im2col GEMM) + bias + ReLU + 2x2 maxpool for one image.

    p*_ref: (1, S, K) im2col patches for the 4 pool-window positions,
    w_ref:  (K, 128) weights (lane-padded OC), b_ref: (1, 128),
    o_ref:  (1, S, 128) pooled output tile (S = ph*pw).
    """
    w = w_ref[...]

    def gemm(p_ref):
        return jnp.dot(p_ref[0], w, preferred_element_type=jnp.float32)

    # max over the 2x2 pool window; bias added once after the max (equivalent),
    # ReLU after max == max of ReLUs (both monotone).
    m = jnp.maximum(jnp.maximum(gemm(p0_ref), gemm(p1_ref)),
                    jnp.maximum(gemm(p2_ref), gemm(p3_ref)))
    o_ref[0] = jnp.maximum(m + b_ref[...], 0.0).astype(o_ref.dtype)


def _fc_head_kernel(x_ref, w1_ref, b1_ref, w2_ref, b2_ref, w3_ref, b3_ref,
                    o_ref):
    """Fused fc1+ReLU -> fc2+ReLU -> fc3.  All intermediates stay in VMEM."""
    h = jnp.dot(x_ref[...], w1_ref[...],
                preferred_element_type=jnp.float32) + b1_ref[...]
    h = jnp.maximum(h, 0.0)
    h = jnp.dot(h, w2_ref[...],
                preferred_element_type=jnp.float32) + b2_ref[...]
    h = jnp.maximum(h, 0.0)
    out = jnp.dot(h, w3_ref[...],
                  preferred_element_type=jnp.float32) + b3_ref[...]
    o_ref[...] = out.astype(o_ref.dtype)


# ---------------------------------------------------------------------------
# im2col glue (NHWC, pooled ordering) + pallas_call wrappers
# ---------------------------------------------------------------------------
def _pooled_patches(x, kh, kw):
    """x: [B, H, W, C] NHWC.  Valid conv (stride 1) followed by 2x2/2 pool.

    Returns four patch matrices (one per pool-window position (di, dj)),
    each [B, ph*pw, kh*kw*C] with K ordered (ki, kj, c), plus (ph, pw).
    """
    B, H, W, C = x.shape
    oh, ow = H - kh + 1, W - kw + 1
    ph, pw = oh // 2, ow // 2
    outs = []
    for di in (0, 1):
        for dj in (0, 1):
            cols = []
            for ki in range(kh):
                for kj in range(kw):
                    r0, c0 = di + ki, dj + kj
                    v = x[:, r0:r0 + 2 * ph:2, c0:c0 + 2 * pw:2, :]
                    cols.append(v)                      # [B, ph, pw, C]
            p = jnp.stack(cols, axis=3)                 # [B, ph, pw, kh*kw, C]
            outs.append(p.reshape(B, ph * pw, kh * kw * C))
    return outs, (ph, pw)


def pallas_conv_relu_pool(x_nhwc, w_kn, b_n, kh=5, kw=5):
    """Fused conv+ReLU+pool.  x: [B,H,W,C] NHWC, w_kn: [kh*kw*C, 128]."""
    B = x_nhwc.shape[0]
    patches, (ph, pw) = _pooled_patches(x_nhwc, kh, kw)
    S = ph * pw
    K = patches[0].shape[-1]
    N = w_kn.shape[1]
    out = pl.pallas_call(
        _conv_relu_pool_kernel,
        out_shape=jax.ShapeDtypeStruct((B, S, N), jnp.float32),
        grid=(B,),
        in_specs=[pl.BlockSpec((1, S, K), lambda b: (b, 0, 0))
                  for _ in range(4)]
        + [pl.BlockSpec((K, N), lambda b: (0, 0)),
           pl.BlockSpec((1, N), lambda b: (0, 0))],
        out_specs=pl.BlockSpec((1, S, N), lambda b: (b, 0, 0)),
        compiler_params=pltpu.CompilerParams(
            dimension_semantics=("parallel",)),
    )(*patches, w_kn, b_n)
    return out, (ph, pw)                                # [B, ph*pw, 128]


def pallas_fc_head(feats, w1, b1, w2, b2, w3, b3):
    """Fused fc1/fc2/fc3 head.  feats: [B, K1]; all N dims lane-padded."""
    B, K1 = feats.shape
    N = w1.shape[1]
    return pl.pallas_call(
        _fc_head_kernel,
        out_shape=jax.ShapeDtypeStruct((B, N), jnp.float32),
        grid=(1,),
        in_specs=[pl.BlockSpec((B, K1), lambda i: (0, 0)),
                  pl.BlockSpec(w1.shape, lambda i: (0, 0)),
                  pl.BlockSpec((1, N), lambda i: (0, 0)),
                  pl.BlockSpec(w2.shape, lambda i: (0, 0)),
                  pl.BlockSpec((1, N), lambda i: (0, 0)),
                  pl.BlockSpec(w3.shape, lambda i: (0, 0)),
                  pl.BlockSpec((1, N), lambda i: (0, 0))],
        out_specs=pl.BlockSpec((B, N), lambda i: (0, 0)),
        compiler_params=pltpu.CompilerParams(
            dimension_semantics=("arbitrary",)),
    )(feats, w1, b1, w2, b2, w3, b3)


# ---------------------------------------------------------------------------
# Parameter init (PyTorch layout) and one-time kernel-layout prep
# ---------------------------------------------------------------------------
def _init_params(key):
    def uniform(key, shape, fan_in):
        bound = 1.0 / jnp.sqrt(fan_in)
        return jax.random.uniform(key, shape, jnp.float32, -bound, bound)

    ks = jax.random.split(key, 10)
    return {
        "conv1_w": uniform(ks[0], (6, 3, 5, 5), 3 * 5 * 5),
        "conv1_b": uniform(ks[1], (6,), 3 * 5 * 5),
        "conv2_w": uniform(ks[2], (16, 6, 5, 5), 6 * 5 * 5),
        "conv2_b": uniform(ks[3], (16,), 6 * 5 * 5),
        "fc1_w": uniform(ks[4], (120, 16 * 5 * 5), 16 * 5 * 5),
        "fc1_b": uniform(ks[5], (120,), 16 * 5 * 5),
        "fc2_w": uniform(ks[6], (84, 120), 120),
        "fc2_b": uniform(ks[7], (84,), 120),
        "fc3_w": uniform(ks[8], (10, 84), 84),
        "fc3_b": uniform(ks[9], (10,), 84),
    }


def _pad_axis(a, axis, target):
    pad = [(0, 0)] * a.ndim
    pad[axis] = (0, target - a.shape[axis])
    return jnp.pad(a, pad)


def _prep_params(p):
    """Pre-transpose / zero-pad all weights ONCE into kernel-ready layout."""
    def conv(w, b):
        oc, ic, kh, kw = w.shape
        # [OC, IC, KH, KW] -> [KH, KW, IC, OC] -> [KH*KW*IC, OC] -> pad N->128
        wk = jnp.transpose(w, (2, 3, 1, 0)).reshape(kh * kw * ic, oc)
        return _pad_axis(wk, 1, LANE), _pad_axis(b, 0, LANE).reshape(1, LANE)

    def fc(w, b):
        wt = jnp.transpose(w)                       # [K, N]
        wt = _pad_axis(wt, 0, LANE)                 # zero rows for padded K
        return _pad_axis(wt, 1, LANE), _pad_axis(b, 0, LANE).reshape(1, LANE)

    # fc1: reorder K from PyTorch's (c, h, w) flatten to the kernel's
    # lane-padded NHWC flatten (h, w, c_pad) so the conv2 output can flow
    # into the FC head with a plain reshape (no transpose, no channel slice).
    f1 = p["fc1_w"].reshape(120, 16, 5, 5)          # [N, C, H, W]
    f1 = jnp.transpose(f1, (2, 3, 1, 0))            # [H, W, C, N]
    f1 = _pad_axis(f1, 2, LANE)                     # pad C 16 -> 128 (zeros)
    f1 = f1.reshape(5 * 5 * LANE, 120)              # K = (h, w, c_pad)

    kp = {}
    kp["c1_w"], kp["c1_b"] = conv(p["conv1_w"], p["conv1_b"])
    kp["c2_w"], kp["c2_b"] = conv(p["conv2_w"], p["conv2_b"])
    kp["f1_w"] = _pad_axis(f1, 1, LANE)
    kp["f1_b"] = _pad_axis(p["fc1_b"], 0, LANE).reshape(1, LANE)
    kp["f2_w"], kp["f2_b"] = fc(p["fc2_w"], p["fc2_b"])
    kp["f3_w"], kp["f3_b"] = fc(p["fc3_w"], p["fc3_b"])
    return kp


# ---------------------------------------------------------------------------
# Forward pass (mirrors Net.forward)
# ---------------------------------------------------------------------------
def net_forward(kp, x_nchw):
    B = x_nchw.shape[0]
    x = jnp.transpose(x_nchw, (0, 2, 3, 1))                       # NHWC once

    # conv1 + ReLU + pool (fused): [B, 14*14, 128]
    y, (ph, pw) = pallas_conv_relu_pool(x, kp["c1_w"], kp["c1_b"])
    # slim the lane padding back to the 6 real channels before the next
    # im2col (keeping 128 would inflate conv2's K and patch traffic ~21x).
    y = y.reshape(B, ph, pw, LANE)[..., :6]

    # conv2 + ReLU + pool (fused): [B, 5*5, 128]
    y, (ph, pw) = pallas_conv_relu_pool(y, kp["c2_w"], kp["c2_b"])

    # lane-padded NHWC flatten feeds the fused FC head directly (fc1 weights
    # were reordered/padded at init to match).
    feats = y.reshape(B, ph * pw * LANE)                          # [B, 3200]
    logits = pallas_fc_head(feats, kp["f1_w"], kp["f1_b"],
                            kp["f2_w"], kp["f2_b"],
                            kp["f3_w"], kp["f3_b"])               # [B, 128]
    return logits[:, :10]                                         # slice last


# Pure-JAX reference (uses the raw PyTorch-layout params).
def _ref_forward(params, x):
    def conv(x, w, b):
        y = jax.lax.conv_general_dilated(
            x, w, window_strides=(1, 1), padding="VALID",
            dimension_numbers=("NCHW", "OIHW", "NCHW"))
        return jax.nn.relu(y + b[None, :, None, None])

    def pool(x):
        return jax.lax.reduce_window(
            x, -jnp.inf, jax.lax.max, (1, 1, 2, 2), (1, 1, 2, 2), "VALID")

    x = pool(conv(x, params["conv1_w"], params["conv1_b"]))
    x = pool(conv(x, params["conv2_w"], params["conv2_b"]))
    x = x.reshape(-1, 16 * 5 * 5)
    x = jax.nn.relu(x @ params["fc1_w"].T + params["fc1_b"])
    x = jax.nn.relu(x @ params["fc2_w"].T + params["fc2_b"])
    return x @ params["fc3_w"].T + params["fc3_b"]


if __name__ == "__main__":
    key = jax.random.PRNGKey(0)
    pkey, xkey = jax.random.split(key)
    raw_params = _init_params(pkey)
    kernel_params = _prep_params(raw_params)

    # Net.forward requires 32x32 spatial input (16*5*5 flatten after 2 convs).
    x = jax.random.normal(xkey, (2, 3, 32, 32), jnp.float32)

    fwd = jax.jit(net_forward)
    out = jax.block_until_ready(fwd(kernel_params, x))
    assert out.shape == (2, 10), out.shape

    ref = jax.block_until_ready(_ref_forward(raw_params, x))
    assert jnp.allclose(out, ref, atol=1e-4, rtol=1e-4), \
        "mismatch vs JAX reference"

    print("KERNEL_OK")
</pallas_src>

<mosaic_0001>
module attributes {stable_mosaic.version = 11 : i64} {
  func.func @_conv_relu_pool_kernel(%arg0: i32, %arg1: memref<1x196x75xf32, #tpu.memory_space<vmem>>, %arg2: memref<1x196x75xf32, #tpu.memory_space<vmem>>, %arg3: memref<1x196x75xf32, #tpu.memory_space<vmem>>, %arg4: memref<1x196x75xf32, #tpu.memory_space<vmem>>, %arg5: memref<75x128xf32, #tpu.memory_space<vmem>>, %arg6: memref<1x128xf32, #tpu.memory_space<vmem>>, %arg7: memref<1x196x128xf32, #tpu.memory_space<vmem>>) attributes {dimension_semantics = [#tpu.dimension_semantics<parallel>], iteration_bounds = array<i64: 2>, scalar_prefetch = 0 : i64, scratch_operands = 0 : i64, tpu.core_type = #tpu.core_type<tc>, window_params = [{transform_indices = @transform_0, window_bounds = array<i64: 1, 196, 75>}, {transform_indices = @transform_1, window_bounds = array<i64: 1, 196, 75>}, {transform_indices = @transform_2, window_bounds = array<i64: 1, 196, 75>}, {transform_indices = @transform_3, window_bounds = array<i64: 1, 196, 75>}, {pipeline_mode = #tpu.pipeline_mode<synchronous>, transform_indices = @transform_4, window_bounds = array<i64: 75, 128>}, {pipeline_mode = #tpu.pipeline_mode<synchronous>, transform_indices = @transform_5, window_bounds = array<i64: 1, 128>}, {transform_indices = @transform_6, window_bounds = array<i64: 1, 196, 128>}]} {
    %c0 = arith.constant 0 : index
    %c0_0 = arith.constant 0 : index
    %0 = vector.load %arg5[%c0, %c0_0] : memref<75x128xf32, #tpu.memory_space<vmem>>, vector<75x128xf32>
    %c0_1 = arith.constant 0 : index
    %c0_2 = arith.constant 0 : index
    %c0_3 = arith.constant 0 : index
    %1 = vector.load %arg1[%c0_1, %c0_2, %c0_3] : memref<1x196x75xf32, #tpu.memory_space<vmem>>, vector<1x196x75xf32>
    %2 = vector.shape_cast %1 : vector<1x196x75xf32> to vector<196x75xf32>
    %cst = arith.constant dense<0.000000e+00> : vector<196x128xf32>
    %3 = tpu.matmul %2, %0, %cst {dimension_numbers = #tpu.dot_dimension_numbers<[1], [0], [0], [1], [0, 0, 1, 1], [], []>} : vector<196x75xf32>, vector<75x128xf32>, vector<196x128xf32> -> vector<196x128xf32>
    %c0_4 = arith.constant 0 : index
    %c0_5 = arith.constant 0 : index
    %c0_6 = arith.constant 0 : index
    %4 = vector.load %arg2[%c0_4, %c0_5, %c0_6] : memref<1x196x75xf32, #tpu.memory_space<vmem>>, vector<1x196x75xf32>
    %5 = vector.shape_cast %4 : vector<1x196x75xf32> to vector<196x75xf32>
    %cst_7 = arith.constant dense<0.000000e+00> : vector<196x128xf32>
    %6 = tpu.matmul %5, %0, %cst_7 {dimension_numbers = #tpu.dot_dimension_numbers<[1], [0], [0], [1], [0, 0, 1, 1], [], []>} : vector<196x75xf32>, vector<75x128xf32>, vector<196x128xf32> -> vector<196x128xf32>
    %7 = arith.maximumf %3, %6 : vector<196x128xf32>
    %c0_8 = arith.constant 0 : index
    %c0_9 = arith.constant 0 : index
    %c0_10 = arith.constant 0 : index
    %8 = vector.load %arg3[%c0_8, %c0_9, %c0_10] : memref<1x196x75xf32, #tpu.memory_space<vmem>>, vector<1x196x75xf32>
    %9 = vector.shape_cast %8 : vector<1x196x75xf32> to vector<196x75xf32>
    %cst_11 = arith.constant dense<0.000000e+00> : vector<196x128xf32>
    %10 = tpu.matmul %9, %0, %cst_11 {dimension_numbers = #tpu.dot_dimension_numbers<[1], [0], [0], [1], [0, 0, 1, 1], [], []>} : vector<196x75xf32>, vector<75x128xf32>, vector<196x128xf32> -> vector<196x128xf32>
    %c0_12 = arith.constant 0 : index
    %c0_13 = arith.constant 0 : index
    %c0_14 = arith.constant 0 : index
    %11 = vector.load %arg4[%c0_12, %c0_13, %c0_14] : memref<1x196x75xf32, #tpu.memory_space<vmem>>, vector<1x196x75xf32>
    %12 = vector.shape_cast %11 : vector<1x196x75xf32> to vector<196x75xf32>
    %cst_15 = arith.constant dense<0.000000e+00> : vector<196x128xf32>
    %13 = tpu.matmul %12, %0, %cst_15 {dimension_numbers = #tpu.dot_dimension_numbers<[1], [0], [0], [1], [0, 0, 1, 1], [], []>} : vector<196x75xf32>, vector<75x128xf32>, vector<196x128xf32> -> vector<196x128xf32>
    %14 = arith.maximumf %10, %13 : vector<196x128xf32>
    %15 = arith.maximumf %7, %14 : vector<196x128xf32>
    %c0_16 = arith.constant 0 : index
    %c0_17 = arith.constant 0 : index
    %16 = vector.load %arg6[%c0_16, %c0_17] : memref<1x128xf32, #tpu.memory_space<vmem>>, vector<1x128xf32>
    %17 = vector.broadcast %16 : vector<1x128xf32> to vector<196x128xf32>
    %18 = arith.addf %15, %17 : vector<196x128xf32>
    %cst_18 = arith.constant 0.000000e+00 : f32
    %19 = vector.broadcast %cst_18 : f32 to vector<196x128xf32>
    %20 = arith.maximumf %18, %19 : vector<196x128xf32>
    %c0_19 = arith.constant 0 : index
    %c0_20 = arith.constant 0 : index
    %c0_21 = arith.constant 0 : index
    %21 = vector.load %arg7[%c0_19, %c0_20, %c0_21] : memref<1x196x128xf32, #tpu.memory_space<vmem>>, vector<1x196x128xf32>
    %22 = vector.shape_cast %21 : vector<1x196x128xf32> to vector<196x128xf32>
    %23 = vector.shape_cast %20 : vector<196x128xf32> to vector<1x196x128xf32>
    tpu.vector_store %arg7[%c0_19, %c0_20, %c0_21], %23 {strides = array<i32>} : memref<1x196x128xf32, #tpu.memory_space<vmem>>, vector<1x196x128xf32>,
    return
  }
  func.func @transform_0(%arg0: i32) -> (i32, i32, i32) {
    %c0_i32 = arith.constant 0 : i32
    %c0_i32_0 = arith.constant 0 : i32
    %c0_i32_1 = arith.constant 0 : i32
    return %arg0, %c0_i32, %c0_i32_0 : i32, i32, i32
  }
  func.func @transform_1(%arg0: i32) -> (i32, i32, i32) {
    %c0_i32 = arith.constant 0 : i32
    %c0_i32_0 = arith.constant 0 : i32
    %c0_i32_1 = arith.constant 0 : i32
    return %arg0, %c0_i32, %c0_i32_0 : i32, i32, i32
  }
  func.func @transform_2(%arg0: i32) -> (i32, i32, i32) {
    %c0_i32 = arith.constant 0 : i32
    %c0_i32_0 = arith.constant 0 : i32
    %c0_i32_1 = arith.constant 0 : i32
    return %arg0, %c0_i32, %c0_i32_0 : i32, i32, i32
  }
  func.func @transform_3(%arg0: i32) -> (i32, i32, i32) {
    %c0_i32 = arith.constant 0 : i32
    %c0_i32_0 = arith.constant 0 : i32
    %c0_i32_1 = arith.constant 0 : i32
    return %arg0, %c0_i32, %c0_i32_0 : i32, i32, i32
  }
  func.func @transform_4(%arg0: i32) -> (i32, i32) {
    %c0_i32 = arith.constant 0 : i32
    %c0_i32_0 = arith.constant 0 : i32
    %c0_i32_1 = arith.constant 0 : i32
    return %c0_i32, %c0_i32_0 : i32, i32
  }
  func.func @transform_5(%arg0: i32) -> (i32, i32) {
    %c0_i32 = arith.constant 0 : i32
    %c0_i32_0 = arith.constant 0 : i32
    %c0_i32_1 = arith.constant 0 : i32
    return %c0_i32, %c0_i32_0 : i32, i32
  }
  func.func @transform_6(%arg0: i32) -> (i32, i32, i32) {
    %c0_i32 = arith.constant 0 : i32
    %c0_i32_0 = arith.constant 0 : i32
    %c0_i32_1 = arith.constant 0 : i32
    return %arg0, %c0_i32, %c0_i32_0 : i32, i32, i32
  }
}

module attributes {stable_mosaic.version = 11 : i64} {
  func.func @_conv_relu_pool_kernel(%arg0: i32, %arg1: memref<1x25x150xf32, #tpu.memory_space<vmem>>, %arg2: memref<1x25x150xf32, #tpu.memory_space<vmem>>, %arg3: memref<1x25x150xf32, #tpu.memory_space<vmem>>, %arg4: memref<1x25x150xf32, #tpu.memory_space<vmem>>, %arg5: memref<150x128xf32, #tpu.memory_space<vmem>>, %arg6: memref<1x128xf32, #tpu.memory_space<vmem>>, %arg7: memref<1x25x128xf32, #tpu.memory_space<vmem>>) attributes {dimension_semantics = [#tpu.dimension_semantics<parallel>], iteration_bounds = array<i64: 2>, scalar_prefetch = 0 : i64, scratch_operands = 0 : i64, tpu.core_type = #tpu.core_type<tc>, window_params = [{transform_indices = @transform_0, window_bounds = array<i64: 1, 25, 150>}, {transform_indices = @transform_1, window_bounds = array<i64: 1, 25, 150>}, {transform_indices = @transform_2, window_bounds = array<i64: 1, 25, 150>}, {transform_indices = @transform_3, window_bounds = array<i64: 1, 25, 150>}, {pipeline_mode = #tpu.pipeline_mode<synchronous>, transform_indices = @transform_4, window_bounds = array<i64: 150, 128>}, {pipeline_mode = #tpu.pipeline_mode<synchronous>, transform_indices = @transform_5, window_bounds = array<i64: 1, 128>}, {transform_indices = @transform_6, window_bounds = array<i64: 1, 25, 128>}]} {
    %c0 = arith.constant 0 : index
    %c0_0 = arith.constant 0 : index
    %0 = vector.load %arg5[%c0, %c0_0] : memref<150x128xf32, #tpu.memory_space<vmem>>, vector<150x128xf32>
    %c0_1 = arith.constant 0 : index
    %c0_2 = arith.constant 0 : index
    %c0_3 = arith.constant 0 : index
    %1 = vector.load %arg1[%c0_1, %c0_2, %c0_3] : memref<1x25x150xf32, #tpu.memory_space<vmem>>, vector<1x25x150xf32>
    %2 = vector.shape_cast %1 : vector<1x25x150xf32> to vector<25x150xf32>
    %cst = arith.constant dense<0.000000e+00> : vector<25x128xf32>
    %3 = tpu.matmul %2, %0, %cst {dimension_numbers = #tpu.dot_dimension_numbers<[1], [0], [0], [1], [0, 0, 1, 1], [], []>} : vector<25x150xf32>, vector<150x128xf32>, vector<25x128xf32> -> vector<25x128xf32>
    %c0_4 = arith.constant 0 : index
    %c0_5 = arith.constant 0 : index
    %c0_6 = arith.constant 0 : index
    %4 = vector.load %arg2[%c0_4, %c0_5, %c0_6] : memref<1x25x150xf32, #tpu.memory_space<vmem>>, vector<1x25x150xf32>
    %5 = vector.shape_cast %4 : vector<1x25x150xf32> to vector<25x150xf32>
    %cst_7 = arith.constant dense<0.000000e+00> : vector<25x128xf32>
    %6 = tpu.matmul %5, %0, %cst_7 {dimension_numbers = #tpu.dot_dimension_numbers<[1], [0], [0], [1], [0, 0, 1, 1], [], []>} : vector<25x150xf32>, vector<150x128xf32>, vector<25x128xf32> -> vector<25x128xf32>
    %7 = arith.maximumf %3, %6 : vector<25x128xf32>
    %c0_8 = arith.constant 0 : index
    %c0_9 = arith.constant 0 : index
    %c0_10 = arith.constant 0 : index
    %8 = vector.load %arg3[%c0_8, %c0_9, %c0_10] : memref<1x25x150xf32, #tpu.memory_space<vmem>>, vector<1x25x150xf32>
    %9 = vector.shape_cast %8 : vector<1x25x150xf32> to vector<25x150xf32>
    %cst_11 = arith.constant dense<0.000000e+00> : vector<25x128xf32>
    %10 = tpu.matmul %9, %0, %cst_11 {dimension_numbers = #tpu.dot_dimension_numbers<[1], [0], [0], [1], [0, 0, 1, 1], [], []>} : vector<25x150xf32>, vector<150x128xf32>, vector<25x128xf32> -> vector<25x128xf32>
    %c0_12 = arith.constant 0 : index
    %c0_13 = arith.constant 0 : index
    %c0_14 = arith.constant 0 : index
    %11 = vector.load %arg4[%c0_12, %c0_13, %c0_14] : memref<1x25x150xf32, #tpu.memory_space<vmem>>, vector<1x25x150xf32>
    %12 = vector.shape_cast %11 : vector<1x25x150xf32> to vector<25x150xf32>
    %cst_15 = arith.constant dense<0.000000e+00> : vector<25x128xf32>
    %13 = tpu.matmul %12, %0, %cst_15 {dimension_numbers = #tpu.dot_dimension_numbers<[1], [0], [0], [1], [0, 0, 1, 1], [], []>} : vector<25x150xf32>, vector<150x128xf32>, vector<25x128xf32> -> vector<25x128xf32>
    %14 = arith.maximumf %10, %13 : vector<25x128xf32>
    %15 = arith.maximumf %7, %14 : vector<25x128xf32>
    %c0_16 = arith.constant 0 : index
    %c0_17 = arith.constant 0 : index
    %16 = vector.load %arg6[%c0_16, %c0_17] : memref<1x128xf32, #tpu.memory_space<vmem>>, vector<1x128xf32>
    %17 = vector.broadcast %16 : vector<1x128xf32> to vector<25x128xf32>
    %18 = arith.addf %15, %17 : vector<25x128xf32>
    %cst_18 = arith.constant 0.000000e+00 : f32
    %19 = vector.broadcast %cst_18 : f32 to vector<25x128xf32>
    %20 = arith.maximumf %18, %19 : vector<25x128xf32>
    %c0_19 = arith.constant 0 : index
    %c0_20 = arith.constant 0 : index
    %c0_21 = arith.constant 0 : index
    %21 = vector.load %arg7[%c0_19, %c0_20, %c0_21] : memref<1x25x128xf32, #tpu.memory_space<vmem>>, vector<1x25x128xf32>
    %22 = vector.shape_cast %21 : vector<1x25x128xf32> to vector<25x128xf32>
    %23 = vector.shape_cast %20 : vector<25x128xf32> to vector<1x25x128xf32>
    tpu.vector_store %arg7[%c0_19, %c0_20, %c0_21], %23 {strides = array<i32>} : memref<1x25x128xf32, #tpu.memory_space<vmem>>, vector<1x25x128xf32>,
    return
  }
  func.func @transform_0(%arg0: i32) -> (i32, i32, i32) {
    %c0_i32 = arith.constant 0 : i32
    %c0_i32_0 = arith.constant 0 : i32
    %c0_i32_1 = arith.constant 0 : i32
    return %arg0, %c0_i32, %c0_i32_0 : i32, i32, i32
  }
  func.func @transform_1(%arg0: i32) -> (i32, i32, i32) {
    %c0_i32 = arith.constant 0 : i32
    %c0_i32_0 = arith.constant 0 : i32
    %c0_i32_1 = arith.constant 0 : i32
    return %arg0, %c0_i32, %c0_i32_0 : i32, i32, i32
  }
  func.func @transform_2(%arg0: i32) -> (i32, i32, i32) {
    %c0_i32 = arith.constant 0 : i32
    %c0_i32_0 = arith.constant 0 : i32
    %c0_i32_1 = arith.constant 0 : i32
    return %arg0, %c0_i32, %c0_i32_0 : i32, i32, i32
  }
  func.func @transform_3(%arg0: i32) -> (i32, i32, i32) {
    %c0_i32 = arith.constant 0 : i32
    %c0_i32_0 = arith.constant 0 : i32
    %c0_i32_1 = arith.constant 0 : i32
    return %arg0, %c0_i32, %c0_i32_0 : i32, i32, i32
  }
  func.func @transform_4(%arg0: i32) -> (i32, i32) {
    %c0_i32 = arith.constant 0 : i32
    %c0_i32_0 = arith.constant 0 : i32
    %c0_i32_1 = arith.constant 0 : i32
    return %c0_i32, %c0_i32_0 : i32, i32
  }
  func.func @transform_5(%arg0: i32) -> (i32, i32) {
    %c0_i32 = arith.constant 0 : i32
    %c0_i32_0 = arith.constant 0 : i32
    %c0_i32_1 = arith.constant 0 : i32
    return %c0_i32, %c0_i32_0 : i32, i32
  }
  func.func @transform_6(%arg0: i32) -> (i32, i32, i32) {
    %c0_i32 = arith.constant 0 : i32
    %c0_i32_0 = arith.constant 0 : i32
    %c0_i32_1 = arith.constant 0 : i32
    return %arg0, %c0_i32, %c0_i32_0 : i32, i32, i32
  }
}

module attributes {stable_mosaic.version = 11 : i64} {
  func.func @_fc_head_kernel(%arg0: i32, %arg1: memref<2x3200xf32, #tpu.memory_space<vmem>>, %arg2: memref<3200x128xf32, #tpu.memory_space<vmem>>, %arg3: memref<1x128xf32, #tpu.memory_space<vmem>>, %arg4: memref<128x128xf32, #tpu.memory_space<vmem>>, %arg5: memref<1x128xf32, #tpu.memory_space<vmem>>, %arg6: memref<128x128xf32, #tpu.memory_space<vmem>>, %arg7: memref<1x128xf32, #tpu.memory_space<vmem>>, %arg8: memref<2x128xf32, #tpu.memory_space<vmem>>) attributes {dimension_semantics = [#tpu.dimension_semantics<arbitrary>], iteration_bounds = array<i64: 1>, scalar_prefetch = 0 : i64, scratch_operands = 0 : i64, tpu.core_type = #tpu.core_type<tc>, window_params = [{pipeline_mode = #tpu.pipeline_mode<synchronous>, transform_indices = @transform_0, window_bounds = array<i64: 2, 3200>}, {pipeline_mode = #tpu.pipeline_mode<synchronous>, transform_indices = @transform_1, window_bounds = array<i64: 3200, 128>}, {pipeline_mode = #tpu.pipeline_mode<synchronous>, transform_indices = @transform_2, window_bounds = array<i64: 1, 128>}, {pipeline_mode = #tpu.pipeline_mode<synchronous>, transform_indices = @transform_3, window_bounds = array<i64: 128, 128>}, {pipeline_mode = #tpu.pipeline_mode<synchronous>, transform_indices = @transform_4, window_bounds = array<i64: 1, 128>}, {pipeline_mode = #tpu.pipeline_mode<synchronous>, transform_indices = @transform_5, window_bounds = array<i64: 128, 128>}, {pipeline_mode = #tpu.pipeline_mode<synchronous>, transform_indices = @transform_6, window_bounds = array<i64: 1, 128>}, {pipeline_mode = #tpu.pipeline_mode<synchronous>, transform_indices = @transform_7, window_bounds = array<i64: 2, 128>}]} {
    %c0 = arith.constant 0 : index
    %c0_0 = arith.constant 0 : index
    %0 = vector.load %arg1[%c0, %c0_0] : memref<2x3200xf32, #tpu.memory_space<vmem>>, vector<2x3200xf32>
    %c0_1 = arith.constant 0 : index
    %c0_2 = arith.constant 0 : index
    %1 = vector.load %arg2[%c0_1, %c0_2] : memref<3200x128xf32, #tpu.memory_space<vmem>>, vector<3200x128xf32>
    %cst = arith.constant dense<0.000000e+00> : vector<2x128xf32>
    %2 = tpu.matmul %0, %1, %cst {dimension_numbers = #tpu.dot_dimension_numbers<[1], [0], [0], [1], [0, 0, 1, 1], [], []>} : vector<2x3200xf32>, vector<3200x128xf32>, vector<2x128xf32> -> vector<2x128xf32>
    %c0_3 = arith.constant 0 : index
    %c0_4 = arith.constant 0 : index
    %3 = vector.load %arg3[%c0_3, %c0_4] : memref<1x128xf32, #tpu.memory_space<vmem>>, vector<1x128xf32>
    %4 = vector.broadcast %3 : vector<1x128xf32> to vector<2x128xf32>
    %5 = arith.addf %2, %4 : vector<2x128xf32>
    %cst_5 = arith.constant 0.000000e+00 : f32
    %6 = vector.broadcast %cst_5 : f32 to vector<2x128xf32>
    %7 = arith.maximumf %5, %6 : vector<2x128xf32>
    %c0_6 = arith.constant 0 : index
    %c0_7 = arith.constant 0 : index
    %8 = vector.load %arg4[%c0_6, %c0_7] : memref<128x128xf32, #tpu.memory_space<vmem>>, vector<128x128xf32>
    %cst_8 = arith.constant dense<0.000000e+00> : vector<2x128xf32>
    %9 = tpu.matmul %7, %8, %cst_8 {dimension_numbers = #tpu.dot_dimension_numbers<[1], [0], [0], [1], [0, 0, 1, 1], [], []>} : vector<2x128xf32>, vector<128x128xf32>, vector<2x128xf32> -> vector<2x128xf32>
    %c0_9 = arith.constant 0 : index
    %c0_10 = arith.constant 0 : index
    %10 = vector.load %arg5[%c0_9, %c0_10] : memref<1x128xf32, #tpu.memory_space<vmem>>, vector<1x128xf32>
    %11 = vector.broadcast %10 : vector<1x128xf32> to vector<2x128xf32>
    %12 = arith.addf %9, %11 : vector<2x128xf32>
    %cst_11 = arith.constant 0.000000e+00 : f32
    %13 = vector.broadcast %cst_11 : f32 to vector<2x128xf32>
    %14 = arith.maximumf %12, %13 : vector<2x128xf32>
    %c0_12 = arith.constant 0 : index
    %c0_13 = arith.constant 0 : index
    %15 = vector.load %arg6[%c0_12, %c0_13] : memref<128x128xf32, #tpu.memory_space<vmem>>, vector<128x128xf32>
    %cst_14 = arith.constant dense<0.000000e+00> : vector<2x128xf32>
    %16 = tpu.matmul %14, %15, %cst_14 {dimension_numbers = #tpu.dot_dimension_numbers<[1], [0], [0], [1], [0, 0, 1, 1], [], []>} : vector<2x128xf32>, vector<128x128xf32>, vector<2x128xf32> -> vector<2x128xf32>
    %c0_15 = arith.constant 0 : index
    %c0_16 = arith.constant 0 : index
    %17 = vector.load %arg7[%c0_15, %c0_16] : memref<1x128xf32, #tpu.memory_space<vmem>>, vector<1x128xf32>
    %18 = vector.broadcast %17 : vector<1x128xf32> to vector<2x128xf32>
    %19 = arith.addf %16, %18 : vector<2x128xf32>
    %c0_17 = arith.constant 0 : index
    %c0_18 = arith.constant 0 : index
    %20 = vector.load %arg8[%c0_17, %c0_18] : memref<2x128xf32, #tpu.memory_space<vmem>>, vector<2x128xf32>
    tpu.vector_store %arg8[%c0_17, %c0_18], %19 {strides = array<i32>} : memref<2x128xf32, #tpu.memory_space<vmem>>, vector<2x128xf32>,
    return
  }
  func.func @transform_0(%arg0: i32) -> (i32, i32) {
    %c0_i32 = arith.constant 0 : i32
    %c0_i32_0 = arith.constant 0 : i32
    %c0_i32_1 = arith.constant 0 : i32
    return %c0_i32, %c0_i32_0 : i32, i32
  }
  func.func @transform_1(%arg0: i32) -> (i32, i32) {
    %c0_i32 = arith.constant 0 : i32
    %c0_i32_0 = arith.constant 0 : i32
    %c0_i32_1 = arith.constant 0 : i32
    return %c0_i32, %c0_i32_0 : i32, i32
  }
  func.func @transform_2(%arg0: i32) -> (i32, i32) {
    %c0_i32 = arith.constant 0 : i32
    %c0_i32_0 = arith.constant 0 : i32
    %c0_i32_1 = arith.constant 0 : i32
    return %c0_i32, %c0_i32_0 : i32, i32
  }
  func.func @transform_3(%arg0: i32) -> (i32, i32) {
    %c0_i32 = arith.constant 0 : i32
    %c0_i32_0 = arith.constant 0 : i32
    %c0_i32_1 = arith.constant 0 : i32
    return %c0_i32, %c0_i32_0 : i32, i32
  }
  func.func @transform_4(%arg0: i32) -> (i32, i32) {
    %c0_i32 = arith.constant 0 : i32
    %c0_i32_0 = arith.constant 0 : i32
    %c0_i32_1 = arith.constant 0 : i32
    return %c0_i32, %c0_i32_0 : i32, i32
  }
  func.func @transform_5(%arg0: i32) -> (i32, i32) {
    %c0_i32 = arith.constant 0 : i32
    %c0_i32_0 = arith.constant 0 : i32
    %c0_i32_1 = arith.constant 0 : i32
    return %c0_i32, %c0_i32_0 : i32, i32
  }
  func.func @transform_6(%arg0: i32) -> (i32, i32) {
    %c0_i32 = arith.constant 0 : i32
    %c0_i32_0 = arith.constant 0 : i32
    %c0_i32_1 = arith.constant 0 : i32
    return %c0_i32, %c0_i32_0 : i32, i32
  }
  func.func @transform_7(%arg0: i32) -> (i32, i32) {
    %c0_i32 = arith.constant 0 : i32
    %c0_i32_0 = arith.constant 0 : i32
    %c0_i32_1 = arith.constant 0 : i32
    return %c0_i32, %c0_i32_0 : i32, i32
  }
}

</mosaic_0001>

<llo_original>
// kernel: net_forward.3
$region0: #{net_forward.3}
  #allocation0 [shape = 'u32[]', space=smem, size = 0x4, offset = 0x4, fixed_abs, tag = 'smem constant byte address 0x4 - core index']
  #allocation1 [shape = 'u32[144,128]{1,0:T(1,128)}', space=vmem, size = 0x12000, scoped, tag = 'internal scratch']
  %s0 = inlined_call_operand.vmem [shape: f32[2,196,75], index: 0, kind: input, shape index: {}]
  %s1 = inlined_call_operand.vmem [shape: f32[2,196,75], index: 1, kind: input, shape index: {}]
  %s2 = inlined_call_operand.vmem [shape: f32[2,196,75], index: 2, kind: input, shape index: {}]
  %s3 = inlined_call_operand.vmem [shape: f32[2,196,75], index: 3, kind: input, shape index: {}]
  %s4 = inlined_call_operand.vmem [shape: f32[75,128], index: 4, kind: input, shape index: {}]
  %s5 = inlined_call_operand.vmem [shape: f32[1,128], index: 5, kind: input, shape index: {}]
  %s6 = inlined_call_operand.vmem [shape: f32[2,196,128], index: 6, kind: output, shape index: {}]
  %s7 = sld [smem:[#allocation0]]
  $region57: #{net_forward.3} parent=0
    _
  %s9 = ssub.s32 1, %s7
  %s10 = scalar_select 0, %s9, %s7
  loop: start=0, step=1, limit=4
  $region2: #{net_forward.3} parent=0 // loop_pre_header
    _
  $region3: #{net_forward.3} parent=0 // loop_header
    %s12 = sphi 0, %s16
    %p13 = scmp.ge.s32.totalorder %s12, 4
    %s22 = sphi 0, %s24
    %s25 = sphi 0, %s22
    %s26 = sphi 0, %s25
    %s42 = sphi 0, %s26
    %s48 = sphi 0, %s50
    %s51 = sphi 0, %s48
    %s52 = sphi 0, %s51
    %s68 = sphi 0, %s52
    %s74 = sphi 0, %s76
    %s77 = sphi 0, %s74
    %s78 = sphi 0, %s77
    %s94 = sphi 0, %s78
    %s100 = sphi 0, %s102
    %s103 = sphi 0, %s100
    %s104 = sphi 0, %s103
    %s120 = sphi 0, %s104
    %s124 = sphi 0, %s124
    %s126 = sphi 0, %s124
    %s127 = sphi 0, %s126
    %s141 = sphi 0, %s127
    %s145 = sphi 0, %s145
    %s147 = sphi 0, %s145
    %s148 = sphi 0, %s147
    %s162 = sphi 0, %s148
    %s168 = sphi 0, %s170
    %s171 = sphi 0, %s168
    %s172 = sphi 0, %s171
    %s188 = sphi 0, %s172
  $region4: #{net_forward.3} parent=0 // loop_header_branch
    %15 = sbr.rel (%p13) target = $region8
  $region5: #{net_forward.3} parent=0 // loop_body
    %s17 = ssub.s32 %s12, 1
    %s18 = ssub.s32 %s12, 2
    %s19 = sadd.s32 %s12, 1
    %s20 = ssub.s32 %s12, %s19
    %p21 = scmp.eq.s32.totalorder %s20, 0
    %s23 = sadd.s32 %s22, 1
    %s24 = scalar_select %p21, %s22, %s23
    %p27 = pneg %p21
    %p28 = scmp.eq.s32.totalorder %s12, 1
    %p29 = por %p27, %p28
    %p30 = scmp.ne.s32.totalorder %s22, %s25
    %p31 = scmp.eq.s32.totalorder %s12, 0
    %p32 = por %p30, %p31
    %p33 = scmp.ne.s32.totalorder %s22, %s25
    %p34 = scmp.eq.s32.totalorder %s17, 1
    %p35 = por %p33, %p34
    %p36 = scmp.ne.s32.totalorder %s25, %s26
    %p37 = scmp.eq.s32.totalorder %s17, 0
    %p38 = por %p36, %p37
    %p39 = scmp.ne.s32.totalorder %s25, %s26
    %p40 = scmp.eq.s32.totalorder %s18, 1
    %p41 = por %p39, %p40
    %p43 = scmp.ne.s32.totalorder %s26, %s42
    %p44 = scmp.eq.s32.totalorder %s18, 0
    %p45 = por %p43, %p44
    %s46 = ssub.s32 %s12, %s19
    %p47 = scmp.eq.s32.totalorder %s46, 0
    %s49 = sadd.s32 %s48, 1
    %s50 = scalar_select %p47, %s48, %s49
    %p53 = pneg %p47
    %p54 = scmp.eq.s32.totalorder %s12, 1
    %p55 = por %p53, %p54
    %p56 = scmp.ne.s32.totalorder %s48, %s51
    %p57 = scmp.eq.s32.totalorder %s12, 0
    %p58 = por %p56, %p57
    %p59 = scmp.ne.s32.totalorder %s48, %s51
    %p60 = scmp.eq.s32.totalorder %s17, 1
    %p61 = por %p59, %p60
    %p62 = scmp.ne.s32.totalorder %s51, %s52
    %p63 = scmp.eq.s32.totalorder %s17, 0
    %p64 = por %p62, %p63
    %p65 = scmp.ne.s32.totalorder %s51, %s52
    %p66 = scmp.eq.s32.totalorder %s18, 1
    %p67 = por %p65, %p66
    %p69 = scmp.ne.s32.totalorder %s52, %s68
    %p70 = scmp.eq.s32.totalorder %s18, 0
    %p71 = por %p69, %p70
    %s72 = ssub.s32 %s12, %s19
    %p73 = scmp.eq.s32.totalorder %s72, 0
    %s75 = sadd.s32 %s74, 1
    %s76 = scalar_select %p73, %s74, %s75
    %p79 = pneg %p73
    %p80 = scmp.eq.s32.totalorder %s12, 1
    %p81 = por %p79, %p80
    %p82 = scmp.ne.s32.totalorder %s74, %s77
    %p83 = scmp.eq.s32.totalorder %s12, 0
    %p84 = por %p82, %p83
    %p85 = scmp.ne.s32.totalorder %s74, %s77
    %p86 = scmp.eq.s32.totalorder %s17, 1
    %p87 = por %p85, %p86
    %p88 = scmp.ne.s32.totalorder %s77, %s78
    %p89 = scmp.eq.s32.totalorder %s17, 0
    %p90 = por %p88, %p89
    %p91 = scmp.ne.s32.totalorder %s77, %s78
    %p92 = scmp.eq.s32.totalorder %s18, 1
    %p93 = por %p91, %p92
    %p95 = scmp.ne.s32.totalorder %s78, %s94
    %p96 = scmp.eq.s32.totalorder %s18, 0
    %p97 = por %p95, %p96
    %s98 = ssub.s32 %s12, %s19
    %p99 = scmp.eq.s32.totalorder %s98, 0
    %s101 = sadd.s32 %s100, 1
    %s102 = scalar_select %p99, %s100, %s101
    %p105 = pneg %p99
    %p106 = scmp.eq.s32.totalorder %s12, 1
    %p107 = por %p105, %p106
    %p108 = scmp.ne.s32.totalorder %s100, %s103
    %p109 = scmp.eq.s32.totalorder %s12, 0
    %p110 = por %p108, %p109
    %p111 = scmp.ne.s32.totalorder %s100, %s103
    %p112 = scmp.eq.s32.totalorder %s17, 1
    %p113 = por %p111, %p112
    %p114 = scmp.ne.s32.totalorder %s103, %s104
    %p115 = scmp.eq.s32.totalorder %s17, 0
    %p116 = por %p114, %p115
    %p117 = scmp.ne.s32.totalorder %s103, %s104
    %p118 = scmp.eq.s32.totalorder %s18, 1
    %p119 = por %p117, %p118
    %p121 = scmp.ne.s32.totalorder %s104, %s120
    %p122 = scmp.eq.s32.totalorder %s18, 0
    %p123 = por %p121, %p122
    %s125 = sadd.s32 %s124, 1
    %p128 = scmp.eq.s32.totalorder %s12, 1
    %p129 = scmp.ne.s32.totalorder %s124, %s126
    %p130 = scmp.eq.s32.totalorder %s12, 0
    %p131 = por %p129, %p130
    %p132 = scmp.ne.s32.totalorder %s124, %s126
    %p133 = scmp.eq.s32.totalorder %s17, 1
    %p134 = por %p132, %p133
    %p135 = scmp.ne.s32.totalorder %s126, %s127
    %p136 = scmp.eq.s32.totalorder %s17, 0
    %p137 = por %p135, %p136
    %p138 = scmp.ne.s32.totalorder %s126, %s127
    %p139 = scmp.eq.s32.totalorder %s18, 1
    %p140 = por %p138, %p139
    %p142 = scmp.ne.s32.totalorder %s127, %s141
    %p143 = scmp.eq.s32.totalorder %s18, 0
    %p144 = por %p142, %p143
    %s146 = sadd.s32 %s145, 1
    %p149 = scmp.eq.s32.totalorder %s12, 1
    %p150 = scmp.ne.s32.totalorder %s145, %s147
    %p151 = scmp.eq.s32.totalorder %s12, 0
    %p152 = por %p150, %p151
    %p153 = scmp.ne.s32.totalorder %s145, %s147
    %p154 = scmp.eq.s32.totalorder %s17, 1
    %p155 = por %p153, %p154
    %p156 = scmp.ne.s32.totalorder %s147, %s148
    %p157 = scmp.eq.s32.totalorder %s17, 0
    %p158 = por %p156, %p157
    %p159 = scmp.ne.s32.totalorder %s147, %s148
    %p160 = scmp.eq.s32.totalorder %s18, 1
    %p161 = por %p159, %p160
    %p163 = scmp.ne.s32.totalorder %s148, %s162
    %p164 = scmp.eq.s32.totalorder %s18, 0
    %p165 = por %p163, %p164
    %s166 = ssub.s32 %s12, %s19
    %p167 = scmp.eq.s32.totalorder %s166, 0
    %s169 = sadd.s32 %s168, 1
    %s170 = scalar_select %p167, %s168, %s169
    %p173 = pneg %p167
    %p174 = scmp.eq.s32.totalorder %s12, 1
    %p175 = por %p173, %p174
    %p176 = scmp.ne.s32.totalorder %s168, %s171
    %p177 = scmp.eq.s32.totalorder %s12, 0
    %p178 = por %p176, %p177
    %p179 = scmp.ne.s32.totalorder %s168, %s171
    %p180 = scmp.eq.s32.totalorder %s17, 1
    %p181 = por %p179, %p180
    %p182 = scmp.ne.s32.totalorder %s171, %s172
    %p183 = scmp.eq.s32.totalorder %s17, 0
    %p184 = por %p182, %p183
    %p185 = scmp.ne.s32.totalorder %s171, %s172
    %p186 = scmp.eq.s32.totalorder %s18, 1
    %p187 = por %p185, %p186
    %p189 = scmp.ne.s32.totalorder %s172, %s188
    %p190 = scmp.eq.s32.totalorder %s18, 0
    %p191 = por %p189, %p190
    %p192 = scmp.le.s32.totalorder 1, %s12
    %p193 = scmp.lt.s32.totalorder %s12, 3
    %p194 = pnand %p192, %p193
    %p195 = pneg %p194
    // Predicated region
    $region9: #{net_forward.3} parent=5 // pred_check
      _
    $region10: #{net_forward.3} parent=5 // pred_check_branch
      %197 = sbr.rel (%p194) target = $region12
    $region11: #{net_forward.3} parent=5 // pred_region
      %s198 = ssub.s32 %s12, 1
      // Predicated region
      $region13: #{net_forward.3} parent=11 // pred_check
        %p199 = pneg %p137
      $region14: #{net_forward.3} parent=11 // pred_check_branch
        %201 = sbr.rel (%p199) target = $region16
      $region15: #{net_forward.3} parent=11 // pred_region
        _
      $region16: #{net_forward.3} parent=11 // pred_fallthru
        _
      // Predicated region
      $region17: #{net_forward.3} parent=11 // pred_check
        %p202 = pneg %p158
      $region18: #{net_forward.3} parent=11 // pred_check_branch
        %204 = sbr.rel (%p202) target = $region20
      $region19: #{net_forward.3} parent=11 // pred_region
        _
      $region20: #{net_forward.3} parent=11 // pred_fallthru
        _
    $region12: #{net_forward.3} parent=5 // pred_fallthru
      _
    %p205 = scmp.lt.s32.totalorder %s12, 2
    // Predicated region
    $region21: #{net_forward.3} parent=5 // pred_check
      %p206 = pneg %p205
    $region22: #{net_forward.3} parent=5 // pred_check_branch
      %208 = sbr.rel (%p206) target = $region24
    $region23: #{net_forward.3} parent=5 // pred_region
      // Predicated region
      $region25: #{net_forward.3} parent=23 // pred_check
        %p209 = pneg %p32
      $region26: #{net_forward.3} parent=23 // pred_check_branch
        %211 = sbr.rel (%p209) target = $region28
      $region27: #{net_forward.3} parent=23 // pred_region
        %p212 = scmp.lt.s32.totalorder %s12, 1
        %s213 = scalar_select %p212, %s12, 1
        %s214 = smul.addr %s213, 25
        %s215 = smul.addr %s214, 8
        %s216 = scalar_lea.vmem %s0, %s215
      $region28: #{net_forward.3} parent=23 // pred_fallthru
        _
      // Predicated region
      $region29: #{net_forward.3} parent=23 // pred_check
        %p217 = pneg %p58
      $region30: #{net_forward.3} parent=23 // pred_check_branch
        %219 = sbr.rel (%p217) target = $region32
      $region31: #{net_forward.3} parent=23 // pred_region
        %p220 = scmp.lt.s32.totalorder %s12, 1
        %s221 = scalar_select %p220, %s12, 1
        %s222 = smul.addr %s221, 25
        %s223 = smul.addr %s222, 8
        %s224 = scalar_lea.vmem %s1, %s223
      $region32: #{net_forward.3} parent=23 // pred_fallthru
        _
      // Predicated region
      $region33: #{net_forward.3} parent=23 // pred_check
        %p225 = pneg %p84
      $region34: #{net_forward.3} parent=23 // pred_check_branch
        %227 = sbr.rel (%p225) target = $region36
      $region35: #{net_forward.3} parent=23 // pred_region
        %p228 = scmp.lt.s32.totalorder %s12, 1
        %s229 = scalar_select %p228, %s12, 1
        %s230 = smul.addr %s229, 25
        %s231 = smul.addr %s230, 8
        %s232 = scalar_lea.vmem %s2, %s231
      $region36: #{net_forward.3} parent=23 // pred_fallthru
        _
      // Predicated region
      $region37: #{net_forward.3} parent=23 // pred_check
        %p233 = pneg %p110
      $region38: #{net_forward.3} parent=23 // pred_check_branch
        %235 = sbr.rel (%p233) target = $region40
      $region39: #{net_forward.3} parent=23 // pred_region
        %p236 = scmp.lt.s32.totalorder %s12, 1
        %s237 = scalar_select %p236, %s12, 1
        %s238 = smul.addr %s237, 25
        %s239 = smul.addr %s238, 8
        %s240 = scalar_lea.vmem %s3, %s239
      $region40: #{net_forward.3} parent=23 // pred_fallthru
        _
    $region24: #{net_forward.3} parent=5 // pred_fallthru
      _
    %p241 = scmp.le.s32.totalorder 1, %s12
    %p242 = scmp.lt.s32.totalorder %s12, 3
    %p243 = pnand %p241, %p242
    %p244 = pneg %p243
    // Predicated region
    $region41: #{net_forward.3} parent=5 // pred_check
      _
    $region42: #{net_forward.3} parent=5 // pred_check_branch
      %246 = sbr.rel (%p243) target = $region44
    $region43: #{net_forward.3} parent=5 // pred_region
      %s247 = ssub.s32 %s12, 1
      %p248 = scmp.lt.s32.totalorder %s17, 1
      %s249 = scalar_select %p248, %s17, 1
      %s250 = smul.addr %s249, 25
      %s251 = smul.addr %s250, 8
      %s252 = scalar_lea.vmem %s0, %s251
      %p253 = pneg %p38
      %p254 = pneg %p35
      %p255 = scmp.lt.s32.totalorder %s17, 1
      %s256 = scalar_select %p255, %s17, 1
      %s257 = smul.addr %s256, 25
      %s258 = smul.addr %s257, 8
      %s259 = scalar_lea.vmem %s1, %s258
      %p260 = pneg %p64
      %p261 = pneg %p61
      %p262 = scmp.lt.s32.totalorder %s17, 1
      %s263 = scalar_select %p262, %s17, 1
      %s264 = smul.addr %s263, 25
      %s265 = smul.addr %s264, 8
      %s266 = scalar_lea.vmem %s2, %s265
      %p267 = pneg %p90
      %p268 = pneg %p87
      %p269 = scmp.lt.s32.totalorder %s17, 1
      %s270 = scalar_select %p269, %s17, 1
      %s271 = smul.addr %s270, 25
      %s272 = smul.addr %s271, 8
      %s273 = scalar_lea.vmem %s3, %s272
      %p274 = pneg %p116
      %p275 = pneg %p113
      %p276 = pneg %p137
      %p277 = pneg %p134
      %p278 = pneg %p158
      %p279 = pneg %p155
      %p280 = pneg %p184
      %p281 = pneg %p181
      %p282 = scmp.lt.s32.totalorder %s17, 1
      %s283 = scalar_select %p282, %s17, 1
      %s284 = smul.addr %s283, 25
      %s285 = smul.addr %s284, 8
      %s286 = scalar_lea.vmem %s6, %s285
      %p287 = scmp.lt.s32.totalorder %s17, 1
      %s288 = scalar_select %p287, %s17, 1
      %s289 = smul.addr %s288, 25
      %s290 = smul.addr %s289, 8
      %s291 = scalar_lea.vmem %s0, %s290
      %p292 = scmp.lt.s32.totalorder %s17, 1
      %s293 = scalar_select %p292, %s17, 1
      %s294 = smul.addr %s293, 25
      %s295 = smul.addr %s294, 8
      %s296 = scalar_lea.vmem %s1, %s295
      %p297 = scmp.lt.s32.totalorder %s17, 1
      %s298 = scalar_select %p297, %s17, 1
      %s299 = smul.addr %s298, 25
      %s300 = smul.addr %s299, 8
      %s301 = scalar_lea.vmem %s2, %s300
      %p302 = scmp.lt.s32.totalorder %s17, 1
      %s303 = scalar_select %p302, %s17, 1
      %s304 = smul.addr %s303, 25
      %s305 = smul.addr %s304, 8
      %s306 = scalar_lea.vmem %s3, %s305
      %p307 = scmp.lt.s32.totalorder %s17, 1
      %s308 = scalar_select %p307, %s17, 1
      %s309 = smul.addr %s308, 25
      %s310 = smul.addr %s309, 8
      %s311 = scalar_lea.vmem %s6, %s310
      %v312 = vld [vmem:[%s4] sm:$0xff]
      %v313 = vld [vmem:[%s4 + $0x8] sm:$0xff]
      %v314 = vld [vmem:[%s4 + $0x10] sm:$0xff]
      %v315 = vld [vmem:[%s4 + $0x18] sm:$0xff]
      %v316 = vld [vmem:[%s4 + $0x20] sm:$0xff]
      %v317 = vld [vmem:[%s4 + $0x28] sm:$0xff]
      %v318 = vld [vmem:[%s4 + $0x30] sm:$0xff]
      %v319 = vld [vmem:[%s4 + $0x38] sm:$0xff]
      %v320 = vld [vmem:[%s4 + $0x40] sm:$0xff]
      %v321 = vld [vmem:[%s4 + $0x48] sm:$0x7]
      %v322 = vld [vmem:[%s291] sm:$0xff]
      %v323 = vld [vmem:[%s291 + $0x8] sm:$0xff]
      %v324 = vld [vmem:[%s291 + $0x10] sm:$0xff]
      %v325 = vld [vmem:[%s291 + $0x18] sm:$0xff]
      %v326 = vld [vmem:[%s291 + $0x20] sm:$0xff]
      %v327 = vld [vmem:[%s291 + $0x28] sm:$0xff]
      %v328 = vld [vmem:[%s291 + $0x30] sm:$0xff]
      %v329 = vld [vmem:[%s291 + $0x38] sm:$0xff]
      %v330 = vld [vmem:[%s291 + $0x40] sm:$0xff]
      %v331 = vld [vmem:[%s291 + $0x48] sm:$0xff]
      %v332 = vld [vmem:[%s291 + $0x50] sm:$0xff]
      %v333 = vld [vmem:[%s291 + $0x58] sm:$0xff]
      %v334 = vld [vmem:[%s291 + $0x60] sm:$0xff]
      %v335 = vld [vmem:[%s291 + $0x68] sm:$0xff]
      %v336 = vld [vmem:[%s291 + $0x70] sm:$0xff]
      %v337 = vld [vmem:[%s291 + $0x78] sm:$0xff]
      %v338 = vld [vmem:[%s291 + $0x80] sm:$0xff]
      %v339 = vld [vmem:[%s291 + $0x88] sm:$0xff]
      %v340 = vld [vmem:[%s291 + $0x90] sm:$0xff]
      %v341 = vld [vmem:[%s291 + $0x98] sm:$0xff]
      %v342 = vld [vmem:[%s291 + $0xa0] sm:$0xff]
      %v343 = vld [vmem:[%s291 + $0xa8] sm:$0xff]
      %v344 = vld [vmem:[%s291 + $0xb0] sm:$0xff]
      %v345 = vld [vmem:[%s291 + $0xb8] sm:$0xff]
      %v346 = vld [vmem:[%s291 + $0xc0] sm:$0xf]
      %vm347 = vcmask 613376
      %v349 = vsel %vm347, %v322, 0
      %v352 = vsel %vm347, %v323, 0
      %v355 = vsel %vm347, %v324, 0
      %v358 = vsel %vm347, %v325, 0
      %v361 = vsel %vm347, %v326, 0
      %v364 = vsel %vm347, %v327, 0
      %v367 = vsel %vm347, %v328, 0
      %v370 = vsel %vm347, %v329, 0
      %v373 = vsel %vm347, %v330, 0
      %v376 = vsel %vm347, %v331, 0
      %v379 = vsel %vm347, %v332, 0
      %v382 = vsel %vm347, %v333, 0
      %v385 = vsel %vm347, %v334, 0
      %v388 = vsel %vm347, %v335, 0
      %v391 = vsel %vm347, %v336, 0
      %v394 = vsel %vm347, %v337, 0
      %v397 = vsel %vm347, %v338, 0
      %v400 = vsel %vm347, %v339, 0
      %v403 = vsel %vm347, %v340, 0
      %v406 = vsel %vm347, %v341, 0
      %v409 = vsel %vm347, %v342, 0
      %v412 = vsel %vm347, %v343, 0
      %v415 = vsel %vm347, %v344, 0
      %v418 = vsel %vm347, %v345, 0
      %v421 = vsel %vm347, %v346, 0
      %vm423 = vcmask 1042432
      %v425 = vsel %vm423, %v321, 0
      %427 = vmatprep.subr.mxu0 0.0
      %428 = vmatpush1.msra.mxu0 0.0
      %429 = vmatprep.subr.mxu0 0.0
      %430 = vmatpush1.msra.mxu0 0.0
      %431 = vmatprep.subr.mxu0 0.0
      %432 = vmatpush1.msra.mxu0 0.0
      %433 = vmatprep.subr.mxu0 0.0
      %434 = vmatpush1.msra.mxu0 0.0
      %435 = vmatprep.subr.mxu0 0.0
      %436 = vmatpush1.msra.mxu0 0.0
      %437 = vmatprep.subr.mxu0 0.0
      %438 = vmatpush1.msra.mxu0 0.0
      %439 = vmatprep.subr.mxu0 0.0
      %440 = vmatpush1.msra.mxu0 %v425
      %441 = vmatprep.subr.mxu0 0.0
      %442 = vmatpush1.msra.mxu0 %v320
      %443 = vmatprep.subr.mxu0 0.0
      %444 = vmatpush1.msra.mxu0 %v319
      %445 = vmatprep.subr.mxu0 0.0
      %446 = vmatpush1.msra.mxu0 %v318
      %447 = vmatprep.subr.mxu0 0.0
      %448 = vmatpush1.msra.mxu0 %v317
      %449 = vmatprep.subr.mxu0 0.0
      %450 = vmatpush1.msra.mxu0 %v316
      %451 = vmatprep.subr.mxu0 0.0
      %452 = vmatpush1.msra.mxu0 %v315
      %453 = vmatprep.subr.mxu0 0.0
      %454 = vmatpush1.msra.mxu0 %v314
      %455 = vmatprep.subr.mxu0 0.0
      %456 = vmatpush1.msra.mxu0 %v313
      %457 = vmatprep.subr.mxu0 0.0
      %458 = vmatpush1.msra.mxu0 %v312
      %459 = vmatprep.subr.mxu0 0.0
      %460 = vmatpush2.msra.mxu0 0.0
      %461 = vmatprep.subr.mxu0 0.0
      %462 = vmatpush2.msra.mxu0 0.0
      %463 = vmatprep.subr.mxu0 0.0
      %464 = vmatpush2.msra.mxu0 0.0
      %465 = vmatprep.subr.mxu0 0.0
      %466 = vmatpush2.msra.mxu0 0.0
      %467 = vmatprep.subr.mxu0 0.0
      %468 = vmatpush2.msra.mxu0 0.0
      %469 = vmatprep.subr.mxu0 0.0
      %470 = vmatpush2.msra.mxu0 0.0
      %471 = vmatprep.subr.mxu0 0.0
      %472 = vmatpush2.msra.mxu0 0.0
      %473 = vmatprep.subr.mxu0 0.0
      %474 = vmatpush2.msra.mxu0 0.0
      %475 = vmatprep.subr.mxu0 0.0
      %476 = vmatpush2.msra.mxu0 0.0
      %477 = vmatprep.subr.mxu0 0.0
      %478 = vmatpush2.msra.mxu0 0.0
      %479 = vmatprep.subr.mxu0 0.0
      %480 = vmatpush2.msra.mxu0 0.0
      %481 = vmatprep.subr.mxu0 0.0
      %482 = vmatpush2.msra.mxu0 0.0
      %483 = vmatprep.subr.mxu0 0.0
      %484 = vmatpush2.msra.mxu0 0.0
      %485 = vmatprep.subr.mxu0 0.0
      %486 = vmatpush2.msra.mxu0 0.0
      %487 = vmatprep.subr.mxu0 0.0
      %488 = vmatpush2.msra.mxu0 0.0
      %489 = vmatprep.subr.mxu0 0.0
      %490 = vmatpush2.msra.mxu0 0.0
      %491 = vmatprep.mubr.f32.mxu0 0.0
      %492 = vmatmul.mubr.f32.gmra.mxu0 %v349
      %v493 = vpop.f32.mrf.mxu0
      %v494 = vadd.f32 0.0, %v493
      %v495 = vpop.f32.mrf.mxu0
      %496 = vmatprep.mubr.f32.mxu0 0.0
      %497 = vmatmul.mubr.f32.gmra.mxu0 %v352
      %v498 = vpop.f32.mrf.mxu0
      %v499 = vadd.f32 0.0, %v498
      %v500 = vpop.f32.mrf.mxu0
      %501 = vmatprep.mubr.f32.mxu0 0.0
      %502 = vmatmul.mubr.f32.gmra.mxu0 %v355
      %v503 = vpop.f32.mrf.mxu0
      %v504 = vadd.f32 0.0, %v503
      %v505 = vpop.f32.mrf.mxu0
      %506 = vmatprep.mubr.f32.mxu0 0.0
      %507 = vmatmul.mubr.f32.gmra.mxu0 %v358
      %v508 = vpop.f32.mrf.mxu0
      %v509 = vadd.f32 0.0, %v508
      %v510 = vpop.f32.mrf.mxu0
      %511 = vmatprep.mubr.f32.mxu0 0.0
      %512 = vmatmul.mubr.f32.gmra.mxu0 %v361
      %v513 = vpop.f32.mrf.mxu0
      %v514 = vadd.f32 0.0, %v513
      %v515 = vpop.f32.mrf.mxu0
      %516 = vmatprep.mubr.f32.mxu0 0.0
      %517 = vmatmul.mubr.f32.gmra.mxu0 %v364
      %v518 = vpop.f32.mrf.mxu0
      %v519 = vadd.f32 0.0, %v518
      %v520 = vpop.f32.mrf.mxu0
      %521 = vmatprep.mubr.f32.mxu0 0.0
      %522 = vmatmul.mubr.f32.gmra.mxu0 %v367
      %v523 = vpop.f32.mrf.mxu0
      %v524 = vadd.f32 0.0, %v523
      %v525 = vpop.f32.mrf.mxu0
      %526 = vmatprep.mubr.f32.mxu0 0.0
      %527 = vmatmul.mubr.f32.gmra.mxu0 %v370
      %v528 = vpop.f32.mrf.mxu0
      %v529 = vadd.f32 0.0, %v528
      %v530 = vpop.f32.mrf.mxu0
      %531 = vmatprep.mubr.f32.mxu0 0.0
      %532 = vmatmul.mubr.f32.gmra.mxu0 %v373
      %v533 = vpop.f32.mrf.mxu0
      %v534 = vadd.f32 0.0, %v533
      %v535 = vpop.f32.mrf.mxu0
      %536 = vmatprep.mubr.f32.mxu0 0.0
      %537 = vmatmul.mubr.f32.gmra.mxu0 %v376
      %v538 = vpop.f32.mrf.mxu0
      %v539 = vadd.f32 0.0, %v538
      %v540 = vpop.f32.mrf.mxu0
      %541 = vmatprep.mubr.f32.mxu0 0.0
      %542 = vmatmul.mubr.f32.gmra.mxu0 %v379
      %v543 = vpop.f32.mrf.mxu0
      %v544 = vadd.f32 0.0, %v543
      %v545 = vpop.f32.mrf.mxu0
      %546 = vmatprep.mubr.f32.mxu0 0.0
      %547 = vmatmul.mubr.f32.gmra.mxu0 %v382
      %v548 = vpop.f32.mrf.mxu0
      %v549 = vadd.f32 0.0, %v548
      %v550 = vpop.f32.mrf.mxu0
      %551 = vmatprep.mubr.f32.mxu0 0.0
      %552 = vmatmul.mubr.f32.gmra.mxu0 %v385
      %v553 = vpop.f32.mrf.mxu0
      %v554 = vadd.f32 0.0, %v553
      %v555 = vpop.f32.mrf.mxu0
      %556 = vmatprep.mubr.f32.mxu0 0.0
      %557 = vmatmul.mubr.f32.gmra.mxu0 %v388
      %v558 = vpop.f32.mrf.mxu0
      %v559 = vadd.f32 0.0, %v558
      %v560 = vpop.f32.mrf.mxu0
      %561 = vmatprep.mubr.f32.mxu0 0.0
      %562 = vmatmul.mubr.f32.gmra.mxu0 %v391
      %v563 = vpop.f32.mrf.mxu0
      %v564 = vadd.f32 0.0, %v563
      %v565 = vpop.f32.mrf.mxu0
      %566 = vmatprep.mubr.f32.mxu0 0.0
      %567 = vmatmul.mubr.f32.gmra.mxu0 %v394
      %v568 = vpop.f32.mrf.mxu0
      %v569 = vadd.f32 0.0, %v568
      %v570 = vpop.f32.mrf.mxu0
      %571 = vmatprep.mubr.f32.mxu0 0.0
      %572 = vmatmul.mubr.f32.gmra.mxu0 %v397
      %v573 = vpop.f32.mrf.mxu0
      %v574 = vadd.f32 0.0, %v573
      %v575 = vpop.f32.mrf.mxu0
      %576 = vmatprep.mubr.f32.mxu0 0.0
      %577 = vmatmul.mubr.f32.gmra.mxu0 %v400
      %v578 = vpop.f32.mrf.mxu0
      %v579 = vadd.f32 0.0, %v578
      %v580 = vpop.f32.mrf.mxu0
      %581 = vmatprep.mubr.f32.mxu0 0.0
      %582 = vmatmul.mubr.f32.gmra.mxu0 %v403
      %v583 = vpop.f32.mrf.mxu0
      %v584 = vadd.f32 0.0, %v583
      %v585 = vpop.f32.mrf.mxu0
      %586 = vmatprep.mubr.f32.mxu0 0.0
      %587 = vmatmul.mubr.f32.gmra.mxu0 %v406
      %v588 = vpop.f32.mrf.mxu0
      %v589 = vadd.f32 0.0, %v588
      %v590 = vpop.f32.mrf.mxu0
      %591 = vmatprep.mubr.f32.mxu0 0.0
      %592 = vmatmul.mubr.f32.gmra.mxu0 %v409
      %v593 = vpop.f32.mrf.mxu0
      %v594 = vadd.f32 0.0, %v593
      %v595 = vpop.f32.mrf.mxu0
      %596 = vmatprep.mubr.f32.mxu0 0.0
      %597 = vmatmul.mubr.f32.gmra.mxu0 %v412
      %v598 = vpop.f32.mrf.mxu0
      %v599 = vadd.f32 0.0, %v598
      %v600 = vpop.f32.mrf.mxu0
      %601 = vmatprep.mubr.f32.mxu0 0.0
      %602 = vmatmul.mubr.f32.gmra.mxu0 %v415
      %v603 = vpop.f32.mrf.mxu0
      %v604 = vadd.f32 0.0, %v603
      %v605 = vpop.f32.mrf.mxu0
      %606 = vmatprep.mubr.f32.mxu0 0.0
      %607 = vmatmul.mubr.f32.gmra.mxu0 %v418
      %v608 = vpop.f32.mrf.mxu0
      %v609 = vadd.f32 0.0, %v608
      %v610 = vpop.f32.mrf.mxu0
      %611 = vmatprep.mubr.f32.mxu0 0.0
      %612 = vmatmul.mubr.f32.gmra.mxu0 %v421
      %v613 = vpop.f32.mrf.mxu0
      %v614 = vadd.f32 0.0, %v613
      %v615 = vpop.f32.mrf.mxu0
      %616 = vdwg.mxu0
      %v617 = vld [vmem:[%s296] sm:$0xff]
      %v618 = vld [vmem:[%s296 + $0x8] sm:$0xff]
      %v619 = vld [vmem:[%s296 + $0x10] sm:$0xff]
      %v620 = vld [vmem:[%s296 + $0x18] sm:$0xff]
      %v621 = vld [vmem:[%s296 + $0x20] sm:$0xff]
      %v622 = vld [vmem:[%s296 + $0x28] sm:$0xff]
      %v623 = vld [vmem:[%s296 + $0x30] sm:$0xff]
      %v624 = vld [vmem:[%s296 + $0x38] sm:$0xff]
      %v625 = vld [vmem:[%s296 + $0x40] sm:$0xff]
      %v626 = vld [vmem:[%s296 + $0x48] sm:$0xff]
      %v627 = vld [vmem:[%s296 + $0x50] sm:$0xff]
      %v628 = vld [vmem:[%s296 + $0x58] sm:$0xff]
      %v629 = vld [vmem:[%s296 + $0x60] sm:$0xff]
      %v630 = vld [vmem:[%s296 + $0x68] sm:$0xff]
      %v631 = vld [vmem:[%s296 + $0x70] sm:$0xff]
      %v632 = vld [vmem:[%s296 + $0x78] sm:$0xff]
      %v633 = vld [vmem:[%s296 + $0x80] sm:$0xff]
      %v634 = vld [vmem:[%s296 + $0x88] sm:$0xff]
      %v635 = vld [vmem:[%s296 + $0x90] sm:$0xff]
      %v636 = vld [vmem:[%s296 + $0x98] sm:$0xff]
      %v637 = vld [vmem:[%s296 + $0xa0] sm:$0xff]
      %v638 = vld [vmem:[%s296 + $0xa8] sm:$0xff]
      %v639 = vld [vmem:[%s296 + $0xb0] sm:$0xff]
      %v640 = vld [vmem:[%s296 + $0xb8] sm:$0xff]
      %v641 = vld [vmem:[%s296 + $0xc0] sm:$0xf]
      %v643 = vsel %vm347, %v617, 0
      %v646 = vsel %vm347, %v618, 0
      %v649 = vsel %vm347, %v619, 0
      %v652 = vsel %vm347, %v620, 0
      %v655 = vsel %vm347, %v621, 0
      %v658 = vsel %vm347, %v622, 0
      %v661 = vsel %vm347, %v623, 0
      %v664 = vsel %vm347, %v624, 0
      %v667 = vsel %vm347, %v625, 0
      %v670 = vsel %vm347, %v626, 0
      %v673 = vsel %vm347, %v627, 0
      %v676 = vsel %vm347, %v628, 0
      %v679 = vsel %vm347, %v629, 0
      %v682 = vsel %vm347, %v630, 0
      %v685 = vsel %vm347, %v631, 0
      %v688 = vsel %vm347, %v632, 0
      %v691 = vsel %vm347, %v633, 0
      %v694 = vsel %vm347, %v634, 0
      %v697 = vsel %vm347, %v635, 0
      %v700 = vsel %vm347, %v636, 0
      %v703 = vsel %vm347, %v637, 0
      %v706 = vsel %vm347, %v638, 0
      %v709 = vsel %vm347, %v639, 0
      %v712 = vsel %vm347, %v640, 0
      %v715 = vsel %vm347, %v641, 0
      %717 = vmatprep.subr.mxu0 0.0
      %718 = vmatpush1.msra.mxu0 0.0
      %719 = vmatprep.subr.mxu0 0.0
      %720 = vmatpush1.msra.mxu0 0.0
      %721 = vmatprep.subr.mxu0 0.0
      %722 = vmatpush1.msra.mxu0 0.0
      %723 = vmatprep.subr.mxu0 0.0
      %724 = vmatpush1.msra.mxu0 0.0
      %725 = vmatprep.subr.mxu0 0.0
      %726 = vmatpush1.msra.mxu0 0.0
      %727 = vmatprep.subr.mxu0 0.0
      %728 = vmatpush1.msra.mxu0 0.0
      %729 = vmatprep.subr.mxu0 0.0
      %730 = vmatpush1.msra.mxu0 %v425
      %731 = vmatprep.subr.mxu0 0.0
      %732 = vmatpush1.msra.mxu0 %v320
      %733 = vmatprep.subr.mxu0 0.0
      %734 = vmatpush1.msra.mxu0 %v319
      %735 = vmatprep.subr.mxu0 0.0
      %736 = vmatpush1.msra.mxu0 %v318
      %737 = vmatprep.subr.mxu0 0.0
      %738 = vmatpush1.msra.mxu0 %v317
      %739 = vmatprep.subr.mxu0 0.0
      %740 = vmatpush1.msra.mxu0 %v316
      %741 = vmatprep.subr.mxu0 0.0
      %742 = vmatpush1.msra.mxu0 %v315
      %743 = vmatprep.subr.mxu0 0.0
      %744 = vmatpush1.msra.mxu0 %v314
      %745 = vmatprep.subr.mxu0 0.0
      %746 = vmatpush1.msra.mxu0 %v313
      %747 = vmatprep.subr.mxu0 0.0
      %748 = vmatpush1.msra.mxu0 %v312
      %749 = vmatprep.subr.mxu0 0.0
      %750 = vmatpush2.msra.mxu0 0.0
      %751 = vmatprep.subr.mxu0 0.0
      %752 = vmatpush2.msra.mxu0 0.0
      %753 = vmatprep.subr.mxu0 0.0
      %754 = vmatpush2.msra.mxu0 0.0
      %755 = vmatprep.subr.mxu0 0.0
      %756 = vmatpush2.msra.mxu0 0.0
      %757 = vmatprep.subr.mxu0 0.0
      %758 = vmatpush2.msra.mxu0 0.0
      %759 = vmatprep.subr.mxu0 0.0
      %760 = vmatpush2.msra.mxu0 0.0
      %761 = vmatprep.subr.mxu0 0.0
      %762 = vmatpush2.msra.mxu0 0.0
      %763 = vmatprep.subr.mxu0 0.0
      %764 = vmatpush2.msra.mxu0 0.0
      %765 = vmatprep.subr.mxu0 0.0
      %766 = vmatpush2.msra.mxu0 0.0
      %767 = vmatprep.subr.mxu0 0.0
      %768 = vmatpush2.msra.mxu0 0.0
      %769 = vmatprep.subr.mxu0 0.0
      %770 = vmatpush2.msra.mxu0 0.0
      %771 = vmatprep.subr.mxu0 0.0
      %772 = vmatpush2.msra.mxu0 0.0
      %773 = vmatprep.subr.mxu0 0.0
      %774 = vmatpush2.msra.mxu0 0.0
      %775 = vmatprep.subr.mxu0 0.0
      %776 = vmatpush2.msra.mxu0 0.0
      %777 = vmatprep.subr.mxu0 0.0
      %778 = vmatpush2.msra.mxu0 0.0
      %779 = vmatprep.subr.mxu0 0.0
      %780 = vmatpush2.msra.mxu0 0.0
      %781 = vmatprep.mubr.f32.mxu0 0.0
      %782 = vmatmul.mubr.f32.gmra.mxu0 %v643
      %v783 = vpop.f32.mrf.mxu0
      %v784 = vadd.f32 0.0, %v783
      %v785 = vpop.f32.mrf.mxu0
      %786 = vmatprep.mubr.f32.mxu0 0.0
      %787 = vmatmul.mubr.f32.gmra.mxu0 %v646
      %v788 = vpop.f32.mrf.mxu0
      %v789 = vadd.f32 0.0, %v788
      %v790 = vpop.f32.mrf.mxu0
      %791 = vmatprep.mubr.f32.mxu0 0.0
      %792 = vmatmul.mubr.f32.gmra.mxu0 %v649
      %v793 = vpop.f32.mrf.mxu0
      %v794 = vadd.f32 0.0, %v793
      %v795 = vpop.f32.mrf.mxu0
      %796 = vmatprep.mubr.f32.mxu0 0.0
      %797 = vmatmul.mubr.f32.gmra.mxu0 %v652
      %v798 = vpop.f32.mrf.mxu0
      %v799 = vadd.f32 0.0, %v798
      %v800 = vpop.f32.mrf.mxu0
      %801 = vmatprep.mubr.f32.mxu0 0.0
      %802 = vmatmul.mubr.f32.gmra.mxu0 %v655
      %v803 = vpop.f32.mrf.mxu0
      %v804 = vadd.f32 0.0, %v803
      %v805 = vpop.f32.mrf.mxu0
      %806 = vmatprep.mubr.f32.mxu0 0.0
      %807 = vmatmul.mubr.f32.gmra.mxu0 %v658
      %v808 = vpop.f32.mrf.mxu0
      %v809 = vadd.f32 0.0, %v808
      %v810 = vpop.f32.mrf.mxu0
      %811 = vmatprep.mubr.f32.mxu0 0.0
      %812 = vmatmul.mubr.f32.gmra.mxu0 %v661
      %v813 = vpop.f32.mrf.mxu0
      %v814 = vadd.f32 0.0, %v813
      %v815 = vpop.f32.mrf.mxu0
      %816 = vmatprep.mubr.f32.mxu0 0.0
      %817 = vmatmul.mubr.f32.gmra.mxu0 %v664
      %v818 = vpop.f32.mrf.mxu0
      %v819 = vadd.f32 0.0, %v818
      %v820 = vpop.f32.mrf.mxu0
      %821 = vmatprep.mubr.f32.mxu0 0.0
      %822 = vmatmul.mubr.f32.gmra.mxu0 %v667
      %v823 = vpop.f32.mrf.mxu0
      %v824 = vadd.f32 0.0, %v823
      %v825 = vpop.f32.mrf.mxu0
      %826 = vmatprep.mubr.f32.mxu0 0.0
      %827 = vmatmul.mubr.f32.gmra.mxu0 %v670
      %v828 = vpop.f32.mrf.mxu0
      %v829 = vadd.f32 0.0, %v828
      %v830 = vpop.f32.mrf.mxu0
      %831 = vmatprep.mubr.f32.mxu0 0.0
      %832 = vmatmul.mubr.f32.gmra.mxu0 %v673
      %v833 = vpop.f32.mrf.mxu0
      %v834 = vadd.f32 0.0, %v833
      %v835 = vpop.f32.mrf.mxu0
      %836 = vmatprep.mubr.f32.mxu0 0.0
      %837 = vmatmul.mubr.f32.gmra.mxu0 %v676
      %v838 = vpop.f32.mrf.mxu0
      %v839 = vadd.f32 0.0, %v838
      %v840 = vpop.f32.mrf.mxu0
      %841 = vmatprep.mubr.f32.mxu0 0.0
      %842 = vmatmul.mubr.f32.gmra.mxu0 %v679
      %v843 = vpop.f32.mrf.mxu0
      %v844 = vadd.f32 0.0, %v843
      %v845 = vpop.f32.mrf.mxu0
      %846 = vmatprep.mubr.f32.mxu0 0.0
      %847 = vmatmul.mubr.f32.gmra.mxu0 %v682
      %v848 = vpop.f32.mrf.mxu0
      %v849 = vadd.f32 0.0, %v848
      %v850 = vpop.f32.mrf.mxu0
      %851 = vmatprep.mubr.f32.mxu0 0.0
      %852 = vmatmul.mubr.f32.gmra.mxu0 %v685
      %v853 = vpop.f32.mrf.mxu0
      %v854 = vadd.f32 0.0, %v853
      %v855 = vpop.f32.mrf.mxu0
      %856 = vmatprep.mubr.f32.mxu0 0.0
      %857 = vmatmul.mubr.f32.gmra.mxu0 %v688
      %v858 = vpop.f32.mrf.mxu0
      %v859 = vadd.f32 0.0, %v858
      %v860 = vpop.f32.mrf.mxu0
      %861 = vmatprep.mubr.f32.mxu0 0.0
      %862 = vmatmul.mubr.f32.gmra.mxu0 %v691
      %v863 = vpop.f32.mrf.mxu0
      %v864 = vadd.f32 0.0, %v863
      %v865 = vpop.f32.mrf.mxu0
      %866 = vmatprep.mubr.f32.mxu0 0.0
      %867 = vmatmul.mubr.f32.gmra.mxu0 %v694
      %v868 = vpop.f32.mrf.mxu0
      %v869 = vadd.f32 0.0, %v868
      %v870 = vpop.f32.mrf.mxu0
      %871 = vmatprep.mubr.f32.mxu0 0.0
      %872 = vmatmul.mubr.f32.gmra.mxu0 %v697
      %v873 = vpop.f32.mrf.mxu0
      %v874 = vadd.f32 0.0, %v873
      %v875 = vpop.f32.mrf.mxu0
      %876 = vmatprep.mubr.f32.mxu0 0.0
      %877 = vmatmul.mubr.f32.gmra.mxu0 %v700
      %v878 = vpop.f32.mrf.mxu0
      %v879 = vadd.f32 0.0, %v878
      %v880 = vpop.f32.mrf.mxu0
      %881 = vmatprep.mubr.f32.mxu0 0.0
      %882 = vmatmul.mubr.f32.gmra.mxu0 %v703
      %v883 = vpop.f32.mrf.mxu0
      %v884 = vadd.f32 0.0, %v883
      %v885 = vpop.f32.mrf.mxu0
      %886 = vmatprep.mubr.f32.mxu0 0.0
      %887 = vmatmul.mubr.f32.gmra.mxu0 %v706
      %v888 = vpop.f32.mrf.mxu0
      %v889 = vadd.f32 0.0, %v888
      %v890 = vpop.f32.mrf.mxu0
      %891 = vmatprep.mubr.f32.mxu0 0.0
      %892 = vmatmul.mubr.f32.gmra.mxu0 %v709
      %v893 = vpop.f32.mrf.mxu0
      %v894 = vadd.f32 0.0, %v893
      %v895 = vpop.f32.mrf.mxu0
      %896 = vmatprep.mubr.f32.mxu0 0.0
      %897 = vmatmul.mubr.f32.gmra.mxu0 %v712
      %v898 = vpop.f32.mrf.mxu0
      %v899 = vadd.f32 0.0, %v898
      %v900 = vpop.f32.mrf.mxu0
      %901 = vmatprep.mubr.f32.mxu0 0.0
      %902 = vmatmul.mubr.f32.gmra.mxu0 %v715
      %v903 = vpop.f32.mrf.mxu0
      %v904 = vadd.f32 0.0, %v903
      %v905 = vpop.f32.mrf.mxu0
      %906 = vdwg.mxu0
      %v907 = vmax.f32 %v494, %v784
      %v908 = vmax.f32 %v499, %v789
      %v909 = vmax.f32 %v504, %v794
      %v910 = vmax.f32 %v509, %v799
      %v911 = vmax.f32 %v514, %v804
      %v912 = vmax.f32 %v519, %v809
      %v913 = vmax.f32 %v524, %v814
      %v914 = vmax.f32 %v529, %v819
      %v915 = vmax.f32 %v534, %v824
      %v916 = vmax.f32 %v539, %v829
      %v917 = vmax.f32 %v544, %v834
      %v918 = vmax.f32 %v549, %v839
      %v919 = vmax.f32 %v554, %v844
      %v920 = vmax.f32 %v559, %v849
      %v921 = vmax.f32 %v564, %v854
      %v922 = vmax.f32 %v569, %v859
      %v923 = vmax.f32 %v574, %v864
      %v924 = vmax.f32 %v579, %v869
      %v925 = vmax.f32 %v584, %v874
      %v926 = vmax.f32 %v589, %v879
      %v927 = vmax.f32 %v594, %v884
      %v928 = vmax.f32 %v599, %v889
      %v929 = vmax.f32 %v604, %v894
      %v930 = vmax.f32 %v609, %v899
      %v931 = vmax.f32 %v614, %v904
      %v932 = vld [vmem:[%s301] sm:$0xff]
      %v933 = vld [vmem:[%s301 + $0x8] sm:$0xff]
      %v934 = vld [vmem:[%s301 + $0x10] sm:$0xff]
      %v935 = vld [vmem:[%s301 + $0x18] sm:$0xff]
      %v936 = vld [vmem:[%s301 + $0x20] sm:$0xff]
      %v937 = vld [vmem:[%s301 + $0x28] sm:$0xff]
      %v938 = vld [vmem:[%s301 + $0x30] sm:$0xff]
      %v939 = vld [vmem:[%s301 + $0x38] sm:$0xff]
      %v940 = vld [vmem:[%s301 + $0x40] sm:$0xff]
      %v941 = vld [vmem:[%s301 + $0x48] sm:$0xff]
      %v942 = vld [vmem:[%s301 + $0x50] sm:$0xff]
      %v943 = vld [vmem:[%s301 + $0x58] sm:$0xff]
      %v944 = vld [vmem:[%s301 + $0x60] sm:$0xff]
      %v945 = vld [vmem:[%s301 + $0x68] sm:$0xff]
      %v946 = vld [vmem:[%s301 + $0x70] sm:$0xff]
      %v947 = vld [vmem:[%s301 + $0x78] sm:$0xff]
      %v948 = vld [vmem:[%s301 + $0x80] sm:$0xff]
      %v949 = vld [vmem:[%s301 + $0x88] sm:$0xff]
      %v950 = vld [vmem:[%s301 + $0x90] sm:$0xff]
      %v951 = vld [vmem:[%s301 + $0x98] sm:$0xff]
      %v952 = vld [vmem:[%s301 + $0xa0] sm:$0xff]
      %v953 = vld [vmem:[%s301 + $0xa8] sm:$0xff]
      %v954 = vld [vmem:[%s301 + $0xb0] sm:$0xff]
      %v955 = vld [vmem:[%s301 + $0xb8] sm:$0xff]
      %v956 = vld [vmem:[%s301 + $0xc0] sm:$0xf]
      %v958 = vsel %vm347, %v932, 0
      %v961 = vsel %vm347, %v933, 0
      %v964 = vsel %vm347, %v934, 0
      %v967 = vsel %vm347, %v935, 0
      %v970 = vsel %vm347, %v936, 0
      %v973 = vsel %vm347, %v937, 0
      %v976 = vsel %vm347, %v938, 0
      %v979 = vsel %vm347, %v939, 0
      %v982 = vsel %vm347, %v940, 0
      %v985 = vsel %vm347, %v941, 0
      %v988 = vsel %vm347, %v942, 0
      %v991 = vsel %vm347, %v943, 0
      %v994 = vsel %vm347, %v944, 0
      %v997 = vsel %vm347, %v945, 0
      %v1000 = vsel %vm347, %v946, 0
      %v1003 = vsel %vm347, %v947, 0
      %v1006 = vsel %vm347, %v948, 0
      %v1009 = vsel %vm347, %v949, 0
      %v1012 = vsel %vm347, %v950, 0
      %v1015 = vsel %vm347, %v951, 0
      %v1018 = vsel %vm347, %v952, 0
      %v1021 = vsel %vm347, %v953, 0
      %v1024 = vsel %vm347, %v954, 0
      %v1027 = vsel %vm347, %v955, 0
      %v1030 = vsel %vm347, %v956, 0
      %1032 = vmatprep.subr.mxu0 0.0
      %1033 = vmatpush1.msra.mxu0 0.0
      %1034 = vmatprep.subr.mxu0 0.0
      %1035 = vmatpush1.msra.mxu0 0.0
      %1036 = vmatprep.subr.mxu0 0.0
      %1037 = vmatpush1.msra.mxu0 0.0
      %1038 = vmatprep.subr.mxu0 0.0
      %1039 = vmatpush1.msra.mxu0 0.0
      %1040 = vmatprep.subr.mxu0 0.0
      %1041 = vmatpush1.msra.mxu0 0.0
      %1042 = vmatprep.subr.mxu0 0.0
      %1043 = vmatpush1.msra.mxu0 0.0
      %1044 = vmatprep.subr.mxu0 0.0
      %1045 = vmatpush1.msra.mxu0 %v425
      %1046 = vmatprep.subr.mxu0 0.0
      %1047 = vmatpush1.msra.mxu0 %v320
      %1048 = vmatprep.subr.mxu0 0.0
      %1049 = vmatpush1.msra.mxu0 %v319
      %1050 = vmatprep.subr.mxu0 0.0
      %1051 = vmatpush1.msra.mxu0 %v318
      %1052 = vmatprep.subr.mxu0 0.0
      %1053 = vmatpush1.msra.mxu0 %v317
      %1054 = vmatprep.subr.mxu0 0.0
      %1055 = vmatpush1.msra.mxu0 %v316
      %1056 = vmatprep.subr.mxu0 0.0
      %1057 = vmatpush1.msra.mxu0 %v315
      %1058 = vmatprep.subr.mxu0 0.0
      %1059 = vmatpush1.msra.mxu0 %v314
      %1060 = vmatprep.subr.mxu0 0.0
      %1061 = vmatpush1.msra.mxu0 %v313
      %1062 = vmatprep.subr.mxu0 0.0
      %1063 = vmatpush1.msra.mxu0 %v312
      %1064 = vmatprep.subr.mxu0 0.0
      %1065 = vmatpush2.msra.mxu0 0.0
      %1066 = vmatprep.subr.mxu0 0.0
      %1067 = vmatpush2.msra.mxu0 0.0
      %1068 = vmatprep.subr.mxu0 0.0
      %1069 = vmatpush2.msra.mxu0 0.0
      %1070 = vmatprep.subr.mxu0 0.0
      %1071 = vmatpush2.msra.mxu0 0.0
      %1072 = vmatprep.subr.mxu0 0.0
      %1073 = vmatpush2.msra.mxu0 0.0
      %1074 = vmatprep.subr.mxu0 0.0
      %1075 = vmatpush2.msra.mxu0 0.0
      %1076 = vmatprep.subr.mxu0 0.0
      %1077 = vmatpush2.msra.mxu0 0.0
      %1078 = vmatprep.subr.mxu0 0.0
      %1079 = vmatpush2.msra.mxu0 0.0
      %1080 = vmatprep.subr.mxu0 0.0
      %1081 = vmatpush2.msra.mxu0 0.0
      %1082 = vmatprep.subr.mxu0 0.0
      %1083 = vmatpush2.msra.mxu0 0.0
      %1084 = vmatprep.subr.mxu0 0.0
      %1085 = vmatpush2.msra.mxu0 0.0
      %1086 = vmatprep.subr.mxu0 0.0
      %1087 = vmatpush2.msra.mxu0 0.0
      %1088 = vmatprep.subr.mxu0 0.0
      %1089 = vmatpush2.msra.mxu0 0.0
      %1090 = vmatprep.subr.mxu0 0.0
      %1091 = vmatpush2.msra.mxu0 0.0
      %1092 = vmatprep.subr.mxu0 0.0
      %1093 = vmatpush2.msra.mxu0 0.0
      %1094 = vmatprep.subr.mxu0 0.0
      %1095 = vmatpush2.msra.mxu0 0.0
      %1096 = vmatprep.mubr.f32.mxu0 0.0
      %1097 = vmatmul.mubr.f32.gmra.mxu0 %v958
      %v1098 = vpop.f32.mrf.mxu0
      %v1099 = vadd.f32 0.0, %v1098
      %v1100 = vpop.f32.mrf.mxu0
      %1101 = vmatprep.mubr.f32.mxu0 0.0
      %1102 = vmatmul.mubr.f32.gmra.mxu0 %v961
      %v1103 = vpop.f32.mrf.mxu0
      %v1104 = vadd.f32 0.0, %v1103
      %v1105 = vpop.f32.mrf.mxu0
      %1106 = vmatprep.mubr.f32.mxu0 0.0
      %1107 = vmatmul.mubr.f32.gmra.mxu0 %v964
      %v1108 = vpop.f32.mrf.mxu0
      %v1109 = vadd.f32 0.0, %v1108
      %v1110 = vpop.f32.mrf.mxu0
      %1111 = vmatprep.mubr.f32.mxu0 0.0
      %1112 = vmatmul.mubr.f32.gmra.mxu0 %v967
      %v1113 = vpop.f32.mrf.mxu0
      %v1114 = vadd.f32 0.0, %v1113
      %v1115 = vpop.f32.mrf.mxu0
      %1116 = vmatprep.mubr.f32.mxu0 0.0
      %1117 = vmatmul.mubr.f32.gmra.mxu0 %v970
      %v1118 = vpop.f32.mrf.mxu0
      %v1119 = vadd.f32 0.0, %v1118
      %v1120 = vpop.f32.mrf.mxu0
      %1121 = vmatprep.mubr.f32.mxu0 0.0
      %1122 = vmatmul.mubr.f32.gmra.mxu0 %v973
      %v1123 = vpop.f32.mrf.mxu0
      %v1124 = vadd.f32 0.0, %v1123
      %v1125 = vpop.f32.mrf.mxu0
      %1126 = vmatprep.mubr.f32.mxu0 0.0
      %1127 = vmatmul.mubr.f32.gmra.mxu0 %v976
      %v1128 = vpop.f32.mrf.mxu0
      %v1129 = vadd.f32 0.0, %v1128
      %v1130 = vpop.f32.mrf.mxu0
      %1131 = vmatprep.mubr.f32.mxu0 0.0
      %1132 = vmatmul.mubr.f32.gmra.mxu0 %v979
      %v1133 = vpop.f32.mrf.mxu0
      %v1134 = vadd.f32 0.0, %v1133
      %v1135 = vpop.f32.mrf.mxu0
      %1136 = vmatprep.mubr.f32.mxu0 0.0
      %1137 = vmatmul.mubr.f32.gmra.mxu0 %v982
      %v1138 = vpop.f32.mrf.mxu0
      %v1139 = vadd.f32 0.0, %v1138
      %v1140 = vpop.f32.mrf.mxu0
      %1141 = vmatprep.mubr.f32.mxu0 0.0
      %1142 = vmatmul.mubr.f32.gmra.mxu0 %v985
      %v1143 = vpop.f32.mrf.mxu0
      %v1144 = vadd.f32 0.0, %v1143
      %v1145 = vpop.f32.mrf.mxu0
      %1146 = vmatprep.mubr.f32.mxu0 0.0
      %1147 = vmatmul.mubr.f32.gmra.mxu0 %v988
      %v1148 = vpop.f32.mrf.mxu0
      %v1149 = vadd.f32 0.0, %v1148
      %v1150 = vpop.f32.mrf.mxu0
      %1151 = vmatprep.mubr.f32.mxu0 0.0
      %1152 = vmatmul.mubr.f32.gmra.mxu0 %v991
      %v1153 = vpop.f32.mrf.mxu0
      %v1154 = vadd.f32 0.0, %v1153
      %v1155 = vpop.f32.mrf.mxu0
      %1156 = vmatprep.mubr.f32.mxu0 0.0
      %1157 = vmatmul.mubr.f32.gmra.mxu0 %v994
      %v1158 = vpop.f32.mrf.mxu0
      %v1159 = vadd.f32 0.0, %v1158
      %v1160 = vpop.f32.mrf.mxu0
      %1161 = vmatprep.mubr.f32.mxu0 0.0
      %1162 = vmatmul.mubr.f32.gmra.mxu0 %v997
      %v1163 = vpop.f32.mrf.mxu0
      %v1164 = vadd.f32 0.0, %v1163
      %v1165 = vpop.f32.mrf.mxu0
      %1166 = vmatprep.mubr.f32.mxu0 0.0
      %1167 = vmatmul.mubr.f32.gmra.mxu0 %v1000
      %v1168 = vpop.f32.mrf.mxu0
      %v1169 = vadd.f32 0.0, %v1168
      %v1170 = vpop.f32.mrf.mxu0
      %1171 = vmatprep.mubr.f32.mxu0 0.0
      %1172 = vmatmul.mubr.f32.gmra.mxu0 %v1003
      %v1173 = vpop.f32.mrf.mxu0
      %v1174 = vadd.f32 0.0, %v1173
      %v1175 = vpop.f32.mrf.mxu0
      %1176 = vmatprep.mubr.f32.mxu0 0.0
      %1177 = vmatmul.mubr.f32.gmra.mxu0 %v1006
      %v1178 = vpop.f32.mrf.mxu0
      %v1179 = vadd.f32 0.0, %v1178
      %v1180 = vpop.f32.mrf.mxu0
      %1181 = vmatprep.mubr.f32.mxu0 0.0
      %1182 = vmatmul.mubr.f32.gmra.mxu0 %v1009
      %v1183 = vpop.f32.mrf.mxu0
      %v1184 = vadd.f32 0.0, %v1183
      %v1185 = vpop.f32.mrf.mxu0
      %1186 = vmatprep.mubr.f32.mxu0 0.0
      %1187 = vmatmul.mubr.f32.gmra.mxu0 %v1012
      %v1188 = vpop.f32.mrf.mxu0
      %v1189 = vadd.f32 0.0, %v1188
      %v1190 = vpop.f32.mrf.mxu0
      %1191 = vmatprep.mubr.f32.mxu0 0.0
      %1192 = vmatmul.mubr.f32.gmra.mxu0 %v1015
      %v1193 = vpop.f32.mrf.mxu0
      %v1194 = vadd.f32 0.0, %v1193
      %v1195 = vpop.f32.mrf.mxu0
      %1196 = vmatprep.mubr.f32.mxu0 0.0
      %1197 = vmatmul.mubr.f32.gmra.mxu0 %v1018
      %v1198 = vpop.f32.mrf.mxu0
      %v1199 = vadd.f32 0.0, %v1198
      %v1200 = vpop.f32.mrf.mxu0
      %1201 = vmatprep.mubr.f32.mxu0 0.0
      %1202 = vmatmul.mubr.f32.gmra.mxu0 %v1021
      %v1203 = vpop.f32.mrf.mxu0
      %v1204 = vadd.f32 0.0, %v1203
      %v1205 = vpop.f32.mrf.mxu0
      %1206 = vmatprep.mubr.f32.mxu0 0.0
      %1207 = vmatmul.mubr.f32.gmra.mxu0 %v1024
      %v1208 = vpop.f32.mrf.mxu0
      %v1209 = vadd.f32 0.0, %v1208
      %v1210 = vpop.f32.mrf.mxu0
      %1211 = vmatprep.mubr.f32.mxu0 0.0
      %1212 = vmatmul.mubr.f32.gmra.mxu0 %v1027
      %v1213 = vpop.f32.mrf.mxu0
      %v1214 = vadd.f32 0.0, %v1213
      %v1215 = vpop.f32.mrf.mxu0
      %1216 = vmatprep.mubr.f32.mxu0 0.0
      %1217 = vmatmul.mubr.f32.gmra.mxu0 %v1030
      %v1218 = vpop.f32.mrf.mxu0
      %v1219 = vadd.f32 0.0, %v1218
      %v1220 = vpop.f32.mrf.mxu0
      %1221 = vdwg.mxu0
      %v1222 = vld [vmem:[%s306] sm:$0xff]
      %v1223 = vld [vmem:[%s306 + $0x8] sm:$0xff]
      %v1224 = vld [vmem:[%s306 + $0x10] sm:$0xff]
      %v1225 = vld [vmem:[%s306 + $0x18] sm:$0xff]
      %v1226 = vld [vmem:[%s306 + $0x20] sm:$0xff]
      %v1227 = vld [vmem:[%s306 + $0x28] sm:$0xff]
      %v1228 = vld [vmem:[%s306 + $0x30] sm:$0xff]
      %v1229 = vld [vmem:[%s306 + $0x38] sm:$0xff]
      %v1230 = vld [vmem:[%s306 + $0x40] sm:$0xff]
      %v1231 = vld [vmem:[%s306 + $0x48] sm:$0xff]
      %v1232 = vld [vmem:[%s306 + $0x50] sm:$0xff]
      %v1233 = vld [vmem:[%s306 + $0x58] sm:$0xff]
      %v1234 = vld [vmem:[%s306 + $0x60] sm:$0xff]
      %v1235 = vld [vmem:[%s306 + $0x68] sm:$0xff]
      %v1236 = vld [vmem:[%s306 + $0x70] sm:$0xff]
      %v1237 = vld [vmem:[%s306 + $0x78] sm:$0xff]
      %v1238 = vld [vmem:[%s306 + $0x80] sm:$0xff]
      %v1239 = vld [vmem:[%s306 + $0x88] sm:$0xff]
      %v1240 = vld [vmem:[%s306 + $0x90] sm:$0xff]
      %v1241 = vld [vmem:[%s306 + $0x98] sm:$0xff]
      %v1242 = vld [vmem:[%s306 + $0xa0] sm:$0xff]
      %v1243 = vld [vmem:[%s306 + $0xa8] sm:$0xff]
      %v1244 = vld [vmem:[%s306 + $0xb0] sm:$0xff]
      %v1245 = vld [vmem:[%s306 + $0xb8] sm:$0xff]
      %v1246 = vld [vmem:[%s306 + $0xc0] sm:$0xf]
      %v1248 = vsel %vm347, %v1222, 0
      %v1251 = vsel %vm347, %v1223, 0
      %v1254 = vsel %vm347, %v1224, 0
      %v1257 = vsel %vm347, %v1225, 0
      %v1260 = vsel %vm347, %v1226, 0
      %v1263 = vsel %vm347, %v1227, 0
      %v1266 = vsel %vm347, %v1228, 0
      %v1269 = vsel %vm347, %v1229, 0
      %v1272 = vsel %vm347, %v1230, 0
      %v1275 = vsel %vm347, %v1231, 0
      %v1278 = vsel %vm347, %v1232, 0
      %v1281 = vsel %vm347, %v1233, 0
      %v1284 = vsel %vm347, %v1234, 0
      %v1287 = vsel %vm347, %v1235, 0
      %v1290 = vsel %vm347, %v1236, 0
      %v1293 = vsel %vm347, %v1237, 0
      %v1296 = vsel %vm347, %v1238, 0
      %v1299 = vsel %vm347, %v1239, 0
      %v1302 = vsel %vm347, %v1240, 0
      %v1305 = vsel %vm347, %v1241, 0
      %v1308 = vsel %vm347, %v1242, 0
      %v1311 = vsel %vm347, %v1243, 0
      %v1314 = vsel %vm347, %v1244, 0
      %v1317 = vsel %vm347, %v1245, 0
      %v1320 = vsel %vm347, %v1246, 0
      %1322 = vmatprep.subr.mxu0 0.0
      %1323 = vmatpush1.msra.mxu0 0.0
      %1324 = vmatprep.subr.mxu0 0.0
      %1325 = vmatpush1.msra.mxu0 0.0
      %1326 = vmatprep.subr.mxu0 0.0
      %1327 = vmatpush1.msra.mxu0 0.0
      %1328 = vmatprep.subr.mxu0 0.0
      %1329 = vmatpush1.msra.mxu0 0.0
      %1330 = vmatprep.subr.mxu0 0.0
      %1331 = vmatpush1.msra.mxu0 0.0
      %1332 = vmatprep.subr.mxu0 0.0
      %1333 = vmatpush1.msra.mxu0 0.0
      %1334 = vmatprep.subr.mxu0 0.0
      %1335 = vmatpush1.msra.mxu0 %v425
      %1336 = vmatprep.subr.mxu0 0.0
      %1337 = vmatpush1.msra.mxu0 %v320
      %1338 = vmatprep.subr.mxu0 0.0
      %1339 = vmatpush1.msra.mxu0 %v319
      %1340 = vmatprep.subr.mxu0 0.0
      %1341 = vmatpush1.msra.mxu0 %v318
      %1342 = vmatprep.subr.mxu0 0.0
      %1343 = vmatpush1.msra.mxu0 %v317
      %1344 = vmatprep.subr.mxu0 0.0
      %1345 = vmatpush1.msra.mxu0 %v316
      %1346 = vmatprep.subr.mxu0 0.0
      %1347 = vmatpush1.msra.mxu0 %v315
      %1348 = vmatprep.subr.mxu0 0.0
      %1349 = vmatpush1.msra.mxu0 %v314
      %1350 = vmatprep.subr.mxu0 0.0
      %1351 = vmatpush1.msra.mxu0 %v313
      %1352 = vmatprep.subr.mxu0 0.0
      %1353 = vmatpush1.msra.mxu0 %v312
      %1354 = vmatprep.subr.mxu0 0.0
      %1355 = vmatpush2.msra.mxu0 0.0
      %1356 = vmatprep.subr.mxu0 0.0
      %1357 = vmatpush2.msra.mxu0 0.0
      %1358 = vmatprep.subr.mxu0 0.0
      %1359 = vmatpush2.msra.mxu0 0.0
      %1360 = vmatprep.subr.mxu0 0.0
      %1361 = vmatpush2.msra.mxu0 0.0
      %1362 = vmatprep.subr.mxu0 0.0
      %1363 = vmatpush2.msra.mxu0 0.0
      %1364 = vmatprep.subr.mxu0 0.0
      %1365 = vmatpush2.msra.mxu0 0.0
      %1366 = vmatprep.subr.mxu0 0.0
      %1367 = vmatpush2.msra.mxu0 0.0
      %1368 = vmatprep.subr.mxu0 0.0
      %1369 = vmatpush2.msra.mxu0 0.0
      %1370 = vmatprep.subr.mxu0 0.0
      %1371 = vmatpush2.msra.mxu0 0.0
      %1372 = vmatprep.subr.mxu0 0.0
      %1373 = vmatpush2.msra.mxu0 0.0
      %1374 = vmatprep.subr.mxu0 0.0
      %1375 = vmatpush2.msra.mxu0 0.0
      %1376 = vmatprep.subr.mxu0 0.0
      %1377 = vmatpush2.msra.mxu0 0.0
      %1378 = vmatprep.subr.mxu0 0.0
      %1379 = vmatpush2.msra.mxu0 0.0
      %1380 = vmatprep.subr.mxu0 0.0
      %1381 = vmatpush2.msra.mxu0 0.0
      %1382 = vmatprep.subr.mxu0 0.0
      %1383 = vmatpush2.msra.mxu0 0.0
      %1384 = vmatprep.subr.mxu0 0.0
      %1385 = vmatpush2.msra.mxu0 0.0
      %1386 = vmatprep.mubr.f32.mxu0 0.0
      %1387 = vmatmul.mubr.f32.gmra.mxu0 %v1248
      %v1388 = vpop.f32.mrf.mxu0
      %v1389 = vadd.f32 0.0, %v1388
      %v1390 = vpop.f32.mrf.mxu0
      %1391 = vmatprep.mubr.f32.mxu0 0.0
      %1392 = vmatmul.mubr.f32.gmra.mxu0 %v1251
      %v1393 = vpop.f32.mrf.mxu0
      %v1394 = vadd.f32 0.0, %v1393
      %v1395 = vpop.f32.mrf.mxu0
      %1396 = vmatprep.mubr.f32.mxu0 0.0
      %1397 = vmatmul.mubr.f32.gmra.mxu0 %v1254
      %v1398 = vpop.f32.mrf.mxu0
      %v1399 = vadd.f32 0.0, %v1398
      %v1400 = vpop.f32.mrf.mxu0
      %1401 = vmatprep.mubr.f32.mxu0 0.0
      %1402 = vmatmul.mubr.f32.gmra.mxu0 %v1257
      %v1403 = vpop.f32.mrf.mxu0
      %v1404 = vadd.f32 0.0, %v1403
      %v1405 = vpop.f32.mrf.mxu0
      %1406 = vmatprep.mubr.f32.mxu0 0.0
      %1407 = vmatmul.mubr.f32.gmra.mxu0 %v1260
      %v1408 = vpop.f32.mrf.mxu0
      %v1409 = vadd.f32 0.0, %v1408
      %v1410 = vpop.f32.mrf.mxu0
      %1411 = vmatprep.mubr.f32.mxu0 0.0
      %1412 = vmatmul.mubr.f32.gmra.mxu0 %v1263
      %v1413 = vpop.f32.mrf.mxu0
      %v1414 = vadd.f32 0.0, %v1413
      %v1415 = vpop.f32.mrf.mxu0
      %1416 = vmatprep.mubr.f32.mxu0 0.0
      %1417 = vmatmul.mubr.f32.gmra.mxu0 %v1266
      %v1418 = vpop.f32.mrf.mxu0
      %v1419 = vadd.f32 0.0, %v1418
      %v1420 = vpop.f32.mrf.mxu0
      %1421 = vmatprep.mubr.f32.mxu0 0.0
      %1422 = vmatmul.mubr.f32.gmra.mxu0 %v1269
      %v1423 = vpop.f32.mrf.mxu0
      %v1424 = vadd.f32 0.0, %v1423
      %v1425 = vpop.f32.mrf.mxu0
      %1426 = vmatprep.mubr.f32.mxu0 0.0
      %1427 = vmatmul.mubr.f32.gmra.mxu0 %v1272
      %v1428 = vpop.f32.mrf.mxu0
      %v1429 = vadd.f32 0.0, %v1428
      %v1430 = vpop.f32.mrf.mxu0
      %1431 = vmatprep.mubr.f32.mxu0 0.0
      %1432 = vmatmul.mubr.f32.gmra.mxu0 %v1275
      %v1433 = vpop.f32.mrf.mxu0
      %v1434 = vadd.f32 0.0, %v1433
      %v1435 = vpop.f32.mrf.mxu0
      %1436 = vmatprep.mubr.f32.mxu0 0.0
      %1437 = vmatmul.mubr.f32.gmra.mxu0 %v1278
      %v1438 = vpop.f32.mrf.mxu0
      %v1439 = vadd.f32 0.0, %v1438
      %v1440 = vpop.f32.mrf.mxu0
      %1441 = vmatprep.mubr.f32.mxu0 0.0
      %1442 = vmatmul.mubr.f32.gmra.mxu0 %v1281
      %v1443 = vpop.f32.mrf.mxu0
      %v1444 = vadd.f32 0.0, %v1443
      %v1445 = vpop.f32.mrf.mxu0
      %1446 = vmatprep.mubr.f32.mxu0 0.0
      %1447 = vmatmul.mubr.f32.gmra.mxu0 %v1284
      %v1448 = vpop.f32.mrf.mxu0
      %v1449 = vadd.f32 0.0, %v1448
      %v1450 = vpop.f32.mrf.mxu0
      %1451 = vmatprep.mubr.f32.mxu0 0.0
      %1452 = vmatmul.mubr.f32.gmra.mxu0 %v1287
      %v1453 = vpop.f32.mrf.mxu0
      %v1454 = vadd.f32 0.0, %v1453
      %v1455 = vpop.f32.mrf.mxu0
      %1456 = vmatprep.mubr.f32.mxu0 0.0
      %1457 = vmatmul.mubr.f32.gmra.mxu0 %v1290
      %v1458 = vpop.f32.mrf.mxu0
      %v1459 = vadd.f32 0.0, %v1458
      %v1460 = vpop.f32.mrf.mxu0
      %1461 = vmatprep.mubr.f32.mxu0 0.0
      %1462 = vmatmul.mubr.f32.gmra.mxu0 %v1293
      %v1463 = vpop.f32.mrf.mxu0
      %v1464 = vadd.f32 0.0, %v1463
      %v1465 = vpop.f32.mrf.mxu0
      %1466 = vmatprep.mubr.f32.mxu0 0.0
      %1467 = vmatmul.mubr.f32.gmra.mxu0 %v1296
      %v1468 = vpop.f32.mrf.mxu0
      %v1469 = vadd.f32 0.0, %v1468
      %v1470 = vpop.f32.mrf.mxu0
      %1471 = vmatprep.mubr.f32.mxu0 0.0
      %1472 = vmatmul.mubr.f32.gmra.mxu0 %v1299
      %v1473 = vpop.f32.mrf.mxu0
      %v1474 = vadd.f32 0.0, %v1473
      %v1475 = vpop.f32.mrf.mxu0
      %1476 = vmatprep.mubr.f32.mxu0 0.0
      %1477 = vmatmul.mubr.f32.gmra.mxu0 %v1302
      %v1478 = vpop.f32.mrf.mxu0
      %v1479 = vadd.f32 0.0, %v1478
      %v1480 = vpop.f32.mrf.mxu0
      %1481 = vmatprep.mubr.f32.mxu0 0.0
      %1482 = vmatmul.mubr.f32.gmra.mxu0 %v1305
      %v1483 = vpop.f32.mrf.mxu0
      %v1484 = vadd.f32 0.0, %v1483
      %v1485 = vpop.f32.mrf.mxu0
      %1486 = vmatprep.mubr.f32.mxu0 0.0
      %1487 = vmatmul.mubr.f32.gmra.mxu0 %v1308
      %v1488 = vpop.f32.mrf.mxu0
      %v1489 = vadd.f32 0.0, %v1488
      %v1490 = vpop.f32.mrf.mxu0
      %1491 = vmatprep.mubr.f32.mxu0 0.0
      %1492 = vmatmul.mubr.f32.gmra.mxu0 %v1311
      %v1493 = vpop.f32.mrf.mxu0
      %v1494 = vadd.f32 0.0, %v1493
      %v1495 = vpop.f32.mrf.mxu0
      %1496 = vmatprep.mubr.f32.mxu0 0.0
      %1497 = vmatmul.mubr.f32.gmra.mxu0 %v1314
      %v1498 = vpop.f32.mrf.mxu0
      %v1499 = vadd.f32 0.0, %v1498
      %v1500 = vpop.f32.mrf.mxu0
      %1501 = vmatprep.mubr.f32.mxu0 0.0
      %1502 = vmatmul.mubr.f32.gmra.mxu0 %v1317
      %v1503 = vpop.f32.mrf.mxu0
      %v1504 = vadd.f32 0.0, %v1503
      %v1505 = vpop.f32.mrf.mxu0
      %1506 = vmatprep.mubr.f32.mxu0 0.0
      %1507 = vmatmul.mubr.f32.gmra.mxu0 %v1320
      %v1508 = vpop.f32.mrf.mxu0
      %v1509 = vadd.f32 0.0, %v1508
      %v1510 = vpop.f32.mrf.mxu0
      %1511 = vdwg.mxu0
      %v1512 = vmax.f32 %v1099, %v1389
      %v1513 = vmax.f32 %v1104, %v1394
      %v1514 = vmax.f32 %v1109, %v1399
      %v1515 = vmax.f32 %v1114, %v1404
      %v1516 = vmax.f32 %v1119, %v1409
      %v1517 = vmax.f32 %v1124, %v1414
      %v1518 = vmax.f32 %v1129, %v1419
      %v1519 = vmax.f32 %v1134, %v1424
      %v1520 = vmax.f32 %v1139, %v1429
      %v1521 = vmax.f32 %v1144, %v1434
      %v1522 = vmax.f32 %v1149, %v1439
      %v1523 = vmax.f32 %v1154, %v1444
      %v1524 = vmax.f32 %v1159, %v1449
      %v1525 = vmax.f32 %v1164, %v1454
      %v1526 = vmax.f32 %v1169, %v1459
      %v1527 = vmax.f32 %v1174, %v1464
      %v1528 = vmax.f32 %v1179, %v1469
      %v1529 = vmax.f32 %v1184, %v1474
      %v1530 = vmax.f32 %v1189, %v1479
      %v1531 = vmax.f32 %v1194, %v1484
      %v1532 = vmax.f32 %v1199, %v1489
      %v1533 = vmax.f32 %v1204, %v1494
      %v1534 = vmax.f32 %v1209, %v1499
      %v1535 = vmax.f32 %v1214, %v1504
      %v1536 = vmax.f32 %v1219, %v1509
      %v1537 = vmax.f32 %v907, %v1512
      %v1538 = vmax.f32 %v908, %v1513
      %v1539 = vmax.f32 %v909, %v1514
      %v1540 = vmax.f32 %v910, %v1515
      %v1541 = vmax.f32 %v911, %v1516
      %v1542 = vmax.f32 %v912, %v1517
      %v1543 = vmax.f32 %v913, %v1518
      %v1544 = vmax.f32 %v914, %v1519
      %v1545 = vmax.f32 %v915, %v1520
      %v1546 = vmax.f32 %v916, %v1521
      %v1547 = vmax.f32 %v917, %v1522
      %v1548 = vmax.f32 %v918, %v1523
      %v1549 = vmax.f32 %v919, %v1524
      %v1550 = vmax.f32 %v920, %v1525
      %v1551 = vmax.f32 %v921, %v1526
      %v1552 = vmax.f32 %v922, %v1527
      %v1553 = vmax.f32 %v923, %v1528
      %v1554 = vmax.f32 %v924, %v1529
      %v1555 = vmax.f32 %v925, %v1530
      %v1556 = vmax.f32 %v926, %v1531
      %v1557 = vmax.f32 %v927, %v1532
      %v1558 = vmax.f32 %v928, %v1533
      %v1559 = vmax.f32 %v929, %v1534
      %v1560 = vmax.f32 %v930, %v1535
      %v1561 = vmax.f32 %v931, %v1536
      %v1562 = vld [vmem:[%s5] sm:$0x1]
      %v1564 = vlaneseq
      %v1565 = vshrl.u32 %v1564, 7
      %v1566 = vsub.s32 0, %v1565
      %v1567 = vrot.slane %v1562, %v1566
      %v1569 = vadd.f32 %v1537, %v1567
      %v1570 = vadd.f32 %v1538, %v1567
      %v1571 = vadd.f32 %v1539, %v1567
      %v1572 = vadd.f32 %v1540, %v1567
      %v1573 = vadd.f32 %v1541, %v1567
      %v1574 = vadd.f32 %v1542, %v1567
      %v1575 = vadd.f32 %v1543, %v1567
      %v1576 = vadd.f32 %v1544, %v1567
      %v1577 = vadd.f32 %v1545, %v1567
      %v1578 = vadd.f32 %v1546, %v1567
      %v1579 = vadd.f32 %v1547, %v1567
      %v1580 = vadd.f32 %v1548, %v1567
      %v1581 = vadd.f32 %v1549, %v1567
      %v1582 = vadd.f32 %v1550, %v1567
      %v1583 = vadd.f32 %v1551, %v1567
      %v1584 = vadd.f32 %v1552, %v1567
      %v1585 = vadd.f32 %v1553, %v1567
      %v1586 = vadd.f32 %v1554, %v1567
      %v1587 = vadd.f32 %v1555, %v1567
      %v1588 = vadd.f32 %v1556, %v1567
      %v1589 = vadd.f32 %v1557, %v1567
      %v1590 = vadd.f32 %v1558, %v1567
      %v1591 = vadd.f32 %v1559, %v1567
      %v1592 = vadd.f32 %v1560, %v1567
      %v1593 = vadd.f32 %v1561, %v1567
      %v1594 = vmax.f32 %v1569, 0.0
      %v1595 = vmax.f32 %v1570, 0.0
      %v1596 = vmax.f32 %v1571, 0.0
      %v1597 = vmax.f32 %v1572, 0.0
      %v1598 = vmax.f32 %v1573, 0.0
      %v1599 = vmax.f32 %v1574, 0.0
      %v1600 = vmax.f32 %v1575, 0.0
      %v1601 = vmax.f32 %v1576, 0.0
      %v1602 = vmax.f32 %v1577, 0.0
      %v1603 = vmax.f32 %v1578, 0.0
      %v1604 = vmax.f32 %v1579, 0.0
      %v1605 = vmax.f32 %v1580, 0.0
      %v1606 = vmax.f32 %v1581, 0.0
      %v1607 = vmax.f32 %v1582, 0.0
      %v1608 = vmax.f32 %v1583, 0.0
      %v1609 = vmax.f32 %v1584, 0.0
      %v1610 = vmax.f32 %v1585, 0.0
      %v1611 = vmax.f32 %v1586, 0.0
      %v1612 = vmax.f32 %v1587, 0.0
      %v1613 = vmax.f32 %v1588, 0.0
      %v1614 = vmax.f32 %v1589, 0.0
      %v1615 = vmax.f32 %v1590, 0.0
      %v1616 = vmax.f32 %v1591, 0.0
      %v1617 = vmax.f32 %v1592, 0.0
      %v1618 = vmax.f32 %v1593, 0.0
      %1619 = vst [vmem:[%s311] sm:$0xff] %v1594
      %1620 = vst [vmem:[%s311 + $0x8] sm:$0xff] %v1595
      %1621 = vst [vmem:[%s311 + $0x10] sm:$0xff] %v1596
      %1622 = vst [vmem:[%s311 + $0x18] sm:$0xff] %v1597
      %1623 = vst [vmem:[%s311 + $0x20] sm:$0xff] %v1598
      %1624 = vst [vmem:[%s311 + $0x28] sm:$0xff] %v1599
      %1625 = vst [vmem:[%s311 + $0x30] sm:$0xff] %v1600
      %1626 = vst [vmem:[%s311 + $0x38] sm:$0xff] %v1601
      %1627 = vst [vmem:[%s311 + $0x40] sm:$0xff] %v1602
      %1628 = vst [vmem:[%s311 + $0x48] sm:$0xff] %v1603
      %1629 = vst [vmem:[%s311 + $0x50] sm:$0xff] %v1604
      %1630 = vst [vmem:[%s311 + $0x58] sm:$0xff] %v1605
      %1631 = vst [vmem:[%s311 + $0x60] sm:$0xff] %v1606
      %1632 = vst [vmem:[%s311 + $0x68] sm:$0xff] %v1607
      %1633 = vst [vmem:[%s311 + $0x70] sm:$0xff] %v1608
      %1634 = vst [vmem:[%s311 + $0x78] sm:$0xff] %v1609
      %1635 = vst [vmem:[%s311 + $0x80] sm:$0xff] %v1610
      %1636 = vst [vmem:[%s311 + $0x88] sm:$0xff] %v1611
      %1637 = vst [vmem:[%s311 + $0x90] sm:$0xff] %v1612
      %1638 = vst [vmem:[%s311 + $0x98] sm:$0xff] %v1613
      %1639 = vst [vmem:[%s311 + $0xa0] sm:$0xff] %v1614
      %1640 = vst [vmem:[%s311 + $0xa8] sm:$0xff] %v1615
      %1641 = vst [vmem:[%s311 + $0xb0] sm:$0xff] %v1616
      %1642 = vst [vmem:[%s311 + $0xb8] sm:$0xff] %v1617
      %1643 = vst [vmem:[%s311 + $0xc0] sm:$0xf] %v1618
      %p1644 = scmp.lt.s32.totalorder %s17, 1
      %s1645 = scalar_select %p1644, %s17, 1
      %s1646 = smul.addr %s1645, 25
      %s1647 = smul.addr %s1646, 8
      %s1648 = scalar_lea.vmem %s6, %s1647
      // Predicated region
      $region45: #{net_forward.3} parent=43 // pred_check
        %p1649 = pneg %p181
      $region46: #{net_forward.3} parent=43 // pred_check_branch
        %1651 = sbr.rel (%p1649) target = $region48
      $region47: #{net_forward.3} parent=43 // pred_region
        _
      $region48: #{net_forward.3} parent=43 // pred_fallthru
        _
    $region44: #{net_forward.3} parent=5 // pred_fallthru
      _
    %p1652 = scmp.le.s32.totalorder 2, %s12
    // Predicated region
    $region49: #{net_forward.3} parent=5 // pred_check
      %p1653 = pneg %p1652
    $region50: #{net_forward.3} parent=5 // pred_check_branch
      %1655 = sbr.rel (%p1653) target = $region52
    $region51: #{net_forward.3} parent=5 // pred_region
      %s1656 = ssub.s32 %s12, 2
      // Predicated region
      $region53: #{net_forward.3} parent=51 // pred_check
        %p1657 = pneg %p187
      $region54: #{net_forward.3} parent=51 // pred_check_branch
        %1659 = sbr.rel (%p1657) target = $region56
      $region55: #{net_forward.3} parent=51 // pred_region
        %p1660 = scmp.lt.s32.totalorder %s18, 1
        %s1661 = scalar_select %p1660, %s18, 1
        %s1662 = smul.addr %s1661, 25
        %s1663 = smul.addr %s1662, 8
        %s1664 = scalar_lea.vmem %s6, %s1663
      $region56: #{net_forward.3} parent=51 // pred_fallthru
        _
    $region52: #{net_forward.3} parent=5 // pred_fallthru
      _
  $region6: #{net_forward.3} parent=0 // loop_footer
    %s16 = sadd.s32 1, %s12
  $region7: #{net_forward.3} parent=0 // loop_footer_branch
    %11 = sbr.rel target = $region3
  $region8: #{net_forward.3} parent=0 // loop_exit
    _

// kernel: net_forward.4
$region0: #{net_forward.4}
  #allocation0 [shape = 'u32[]', space=smem, size = 0x4, offset = 0x4, fixed_abs, tag = 'smem constant byte address 0x4 - core index']
  #allocation1 [shape = 'u32[144,128]{1,0:T(1,128)}', space=vmem, size = 0x12000, scoped, tag = 'internal scratch']
  %s0 = inlined_call_operand.vmem [shape: f32[2,25,150], index: 0, kind: input, shape index: {}]
  %s1 = inlined_call_operand.vmem [shape: f32[2,25,150], index: 1, kind: input, shape index: {}]
  %s2 = inlined_call_operand.vmem [shape: f32[2,25,150], index: 2, kind: input, shape index: {}]
  %s3 = inlined_call_operand.vmem [shape: f32[2,25,150], index: 3, kind: input, shape index: {}]
  %s4 = inlined_call_operand.vmem [shape: f32[150,128], index: 4, kind: input, shape index: {}]
  %s5 = inlined_call_operand.vmem [shape: f32[1,128], index: 5, kind: input, shape index: {}]
  %s6 = inlined_call_operand.vmem [shape: f32[2,25,128], index: 6, kind: output, shape index: {}]
  %s7 = sld [smem:[#allocation0]]
  $region57: #{net_forward.4} parent=0
    _
  %s9 = ssub.s32 1, %s7
  %s10 = scalar_select 0, %s9, %s7
  loop: start=0, step=1, limit=4
  $region2: #{net_forward.4} parent=0 // loop_pre_header
    _
  $region3: #{net_forward.4} parent=0 // loop_header
    %s12 = sphi 0, %s16
    %p13 = scmp.ge.s32.totalorder %s12, 4
    %s22 = sphi 0, %s24
    %s25 = sphi 0, %s22
    %s26 = sphi 0, %s25
    %s42 = sphi 0, %s26
    %s48 = sphi 0, %s50
    %s51 = sphi 0, %s48
    %s52 = sphi 0, %s51
    %s68 = sphi 0, %s52
    %s74 = sphi 0, %s76
    %s77 = sphi 0, %s74
    %s78 = sphi 0, %s77
    %s94 = sphi 0, %s78
    %s100 = sphi 0, %s102
    %s103 = sphi 0, %s100
    %s104 = sphi 0, %s103
    %s120 = sphi 0, %s104
    %s124 = sphi 0, %s124
    %s126 = sphi 0, %s124
    %s127 = sphi 0, %s126
    %s141 = sphi 0, %s127
    %s145 = sphi 0, %s145
    %s147 = sphi 0, %s145
    %s148 = sphi 0, %s147
    %s162 = sphi 0, %s148
    %s168 = sphi 0, %s170
    %s171 = sphi 0, %s168
    %s172 = sphi 0, %s171
    %s188 = sphi 0, %s172
  $region4: #{net_forward.4} parent=0 // loop_header_branch
    %15 = sbr.rel (%p13) target = $region8
  $region5: #{net_forward.4} parent=0 // loop_body
    %s17 = ssub.s32 %s12, 1
    %s18 = ssub.s32 %s12, 2
    %s19 = sadd.s32 %s12, 1
    %s20 = ssub.s32 %s12, %s19
    %p21 = scmp.eq.s32.totalorder %s20, 0
    %s23 = sadd.s32 %s22, 1
    %s24 = scalar_select %p21, %s22, %s23
    %p27 = pneg %p21
    %p28 = scmp.eq.s32.totalorder %s12, 1
    %p29 = por %p27, %p28
    %p30 = scmp.ne.s32.totalorder %s22, %s25
    %p31 = scmp.eq.s32.totalorder %s12, 0
    %p32 = por %p30, %p31
    %p33 = scmp.ne.s32.totalorder %s22, %s25
    %p34 = scmp.eq.s32.totalorder %s17, 1
    %p35 = por %p33, %p34
    %p36 = scmp.ne.s32.totalorder %s25, %s26
    %p37 = scmp.eq.s32.totalorder %s17, 0
    %p38 = por %p36, %p37
    %p39 = scmp.ne.s32.totalorder %s25, %s26
    %p40 = scmp.eq.s32.totalorder %s18, 1
    %p41 = por %p39, %p40
    %p43 = scmp.ne.s32.totalorder %s26, %s42
    %p44 = scmp.eq.s32.totalorder %s18, 0
    %p45 = por %p43, %p44
    %s46 = ssub.s32 %s12, %s19
    %p47 = scmp.eq.s32.totalorder %s46, 0
    %s49 = sadd.s32 %s48, 1
    %s50 = scalar_select %p47, %s48, %s49
    %p53 = pneg %p47
    %p54 = scmp.eq.s32.totalorder %s12, 1
    %p55 = por %p53, %p54
    %p56 = scmp.ne.s32.totalorder %s48, %s51
    %p57 = scmp.eq.s32.totalorder %s12, 0
    %p58 = por %p56, %p57
    %p59 = scmp.ne.s32.totalorder %s48, %s51
    %p60 = scmp.eq.s32.totalorder %s17, 1
    %p61 = por %p59, %p60
    %p62 = scmp.ne.s32.totalorder %s51, %s52
    %p63 = scmp.eq.s32.totalorder %s17, 0
    %p64 = por %p62, %p63
    %p65 = scmp.ne.s32.totalorder %s51, %s52
    %p66 = scmp.eq.s32.totalorder %s18, 1
    %p67 = por %p65, %p66
    %p69 = scmp.ne.s32.totalorder %s52, %s68
    %p70 = scmp.eq.s32.totalorder %s18, 0
    %p71 = por %p69, %p70
    %s72 = ssub.s32 %s12, %s19
    %p73 = scmp.eq.s32.totalorder %s72, 0
    %s75 = sadd.s32 %s74, 1
    %s76 = scalar_select %p73, %s74, %s75
    %p79 = pneg %p73
    %p80 = scmp.eq.s32.totalorder %s12, 1
    %p81 = por %p79, %p80
    %p82 = scmp.ne.s32.totalorder %s74, %s77
    %p83 = scmp.eq.s32.totalorder %s12, 0
    %p84 = por %p82, %p83
    %p85 = scmp.ne.s32.totalorder %s74, %s77
    %p86 = scmp.eq.s32.totalorder %s17, 1
    %p87 = por %p85, %p86
    %p88 = scmp.ne.s32.totalorder %s77, %s78
    %p89 = scmp.eq.s32.totalorder %s17, 0
    %p90 = por %p88, %p89
    %p91 = scmp.ne.s32.totalorder %s77, %s78
    %p92 = scmp.eq.s32.totalorder %s18, 1
    %p93 = por %p91, %p92
    %p95 = scmp.ne.s32.totalorder %s78, %s94
    %p96 = scmp.eq.s32.totalorder %s18, 0
    %p97 = por %p95, %p96
    %s98 = ssub.s32 %s12, %s19
    %p99 = scmp.eq.s32.totalorder %s98, 0
    %s101 = sadd.s32 %s100, 1
    %s102 = scalar_select %p99, %s100, %s101
    %p105 = pneg %p99
    %p106 = scmp.eq.s32.totalorder %s12, 1
    %p107 = por %p105, %p106
    %p108 = scmp.ne.s32.totalorder %s100, %s103
    %p109 = scmp.eq.s32.totalorder %s12, 0
    %p110 = por %p108, %p109
    %p111 = scmp.ne.s32.totalorder %s100, %s103
    %p112 = scmp.eq.s32.totalorder %s17, 1
    %p113 = por %p111, %p112
    %p114 = scmp.ne.s32.totalorder %s103, %s104
    %p115 = scmp.eq.s32.totalorder %s17, 0
    %p116 = por %p114, %p115
    %p117 = scmp.ne.s32.totalorder %s103, %s104
    %p118 = scmp.eq.s32.totalorder %s18, 1
    %p119 = por %p117, %p118
    %p121 = scmp.ne.s32.totalorder %s104, %s120
    %p122 = scmp.eq.s32.totalorder %s18, 0
    %p123 = por %p121, %p122
    %s125 = sadd.s32 %s124, 1
    %p128 = scmp.eq.s32.totalorder %s12, 1
    %p129 = scmp.ne.s32.totalorder %s124, %s126
    %p130 = scmp.eq.s32.totalorder %s12, 0
    %p131 = por %p129, %p130
    %p132 = scmp.ne.s32.totalorder %s124, %s126
    %p133 = scmp.eq.s32.totalorder %s17, 1
    %p134 = por %p132, %p133
    %p135 = scmp.ne.s32.totalorder %s126, %s127
    %p136 = scmp.eq.s32.totalorder %s17, 0
    %p137 = por %p135, %p136
    %p138 = scmp.ne.s32.totalorder %s126, %s127
    %p139 = scmp.eq.s32.totalorder %s18, 1
    %p140 = por %p138, %p139
    %p142 = scmp.ne.s32.totalorder %s127, %s141
    %p143 = scmp.eq.s32.totalorder %s18, 0
    %p144 = por %p142, %p143
    %s146 = sadd.s32 %s145, 1
    %p149 = scmp.eq.s32.totalorder %s12, 1
    %p150 = scmp.ne.s32.totalorder %s145, %s147
    %p151 = scmp.eq.s32.totalorder %s12, 0
    %p152 = por %p150, %p151
    %p153 = scmp.ne.s32.totalorder %s145, %s147
    %p154 = scmp.eq.s32.totalorder %s17, 1
    %p155 = por %p153, %p154
    %p156 = scmp.ne.s32.totalorder %s147, %s148
    %p157 = scmp.eq.s32.totalorder %s17, 0
    %p158 = por %p156, %p157
    %p159 = scmp.ne.s32.totalorder %s147, %s148
    %p160 = scmp.eq.s32.totalorder %s18, 1
    %p161 = por %p159, %p160
    %p163 = scmp.ne.s32.totalorder %s148, %s162
    %p164 = scmp.eq.s32.totalorder %s18, 0
    %p165 = por %p163, %p164
    %s166 = ssub.s32 %s12, %s19
    %p167 = scmp.eq.s32.totalorder %s166, 0
    %s169 = sadd.s32 %s168, 1
    %s170 = scalar_select %p167, %s168, %s169
    %p173 = pneg %p167
    %p174 = scmp.eq.s32.totalorder %s12, 1
    %p175 = por %p173, %p174
    %p176 = scmp.ne.s32.totalorder %s168, %s171
    %p177 = scmp.eq.s32.totalorder %s12, 0
    %p178 = por %p176, %p177
    %p179 = scmp.ne.s32.totalorder %s168, %s171
    %p180 = scmp.eq.s32.totalorder %s17, 1
    %p181 = por %p179, %p180
    %p182 = scmp.ne.s32.totalorder %s171, %s172
    %p183 = scmp.eq.s32.totalorder %s17, 0
    %p184 = por %p182, %p183
    %p185 = scmp.ne.s32.totalorder %s171, %s172
    %p186 = scmp.eq.s32.totalorder %s18, 1
    %p187 = por %p185, %p186
    %p189 = scmp.ne.s32.totalorder %s172, %s188
    %p190 = scmp.eq.s32.totalorder %s18, 0
    %p191 = por %p189, %p190
    %p192 = scmp.le.s32.totalorder 1, %s12
    %p193 = scmp.lt.s32.totalorder %s12, 3
    %p194 = pnand %p192, %p193
    %p195 = pneg %p194
    // Predicated region
    $region9: #{net_forward.4} parent=5 // pred_check
      _
    $region10: #{net_forward.4} parent=5 // pred_check_branch
      %197 = sbr.rel (%p194) target = $region12
    $region11: #{net_forward.4} parent=5 // pred_region
      %s198 = ssub.s32 %s12, 1
      // Predicated region
      $region13: #{net_forward.4} parent=11 // pred_check
        %p199 = pneg %p137
      $region14: #{net_forward.4} parent=11 // pred_check_branch
        %201 = sbr.rel (%p199) target = $region16
      $region15: #{net_forward.4} parent=11 // pred_region
        _
      $region16: #{net_forward.4} parent=11 // pred_fallthru
        _
      // Predicated region
      $region17: #{net_forward.4} parent=11 // pred_check
        %p202 = pneg %p158
      $region18: #{net_forward.4} parent=11 // pred_check_branch
        %204 = sbr.rel (%p202) target = $region20
      $region19: #{net_forward.4} parent=11 // pred_region
        _
      $region20: #{net_forward.4} parent=11 // pred_fallthru
        _
    $region12: #{net_forward.4} parent=5 // pred_fallthru
      _
    %p205 = scmp.lt.s32.totalorder %s12, 2
    // Predicated region
    $region21: #{net_forward.4} parent=5 // pred_check
      %p206 = pneg %p205
    $region22: #{net_forward.4} parent=5 // pred_check_branch
      %208 = sbr.rel (%p206) target = $region24
    $region23: #{net_forward.4} parent=5 // pred_region
      // Predicated region
      $region25: #{net_forward.4} parent=23 // pred_check
        %p209 = pneg %p32
      $region26: #{net_forward.4} parent=23 // pred_check_branch
        %211 = sbr.rel (%p209) target = $region28
      $region27: #{net_forward.4} parent=23 // pred_region
        %p212 = scmp.lt.s32.totalorder %s12, 1
        %s213 = scalar_select %p212, %s12, 1
        %s214 = smul.addr %s213, 8
        %s215 = smul.addr %s214, 8
        %s216 = scalar_lea.vmem %s0, %s215
      $region28: #{net_forward.4} parent=23 // pred_fallthru
        _
      // Predicated region
      $region29: #{net_forward.4} parent=23 // pred_check
        %p217 = pneg %p58
      $region30: #{net_forward.4} parent=23 // pred_check_branch
        %219 = sbr.rel (%p217) target = $region32
      $region31: #{net_forward.4} parent=23 // pred_region
        %p220 = scmp.lt.s32.totalorder %s12, 1
        %s221 = scalar_select %p220, %s12, 1
        %s222 = smul.addr %s221, 8
        %s223 = smul.addr %s222, 8
        %s224 = scalar_lea.vmem %s1, %s223
      $region32: #{net_forward.4} parent=23 // pred_fallthru
        _
      // Predicated region
      $region33: #{net_forward.4} parent=23 // pred_check
        %p225 = pneg %p84
      $region34: #{net_forward.4} parent=23 // pred_check_branch
        %227 = sbr.rel (%p225) target = $region36
      $region35: #{net_forward.4} parent=23 // pred_region
        %p228 = scmp.lt.s32.totalorder %s12, 1
        %s229 = scalar_select %p228, %s12, 1
        %s230 = smul.addr %s229, 8
        %s231 = smul.addr %s230, 8
        %s232 = scalar_lea.vmem %s2, %s231
      $region36: #{net_forward.4} parent=23 // pred_fallthru
        _
      // Predicated region
      $region37: #{net_forward.4} parent=23 // pred_check
        %p233 = pneg %p110
      $region38: #{net_forward.4} parent=23 // pred_check_branch
        %235 = sbr.rel (%p233) target = $region40
      $region39: #{net_forward.4} parent=23 // pred_region
        %p236 = scmp.lt.s32.totalorder %s12, 1
        %s237 = scalar_select %p236, %s12, 1
        %s238 = smul.addr %s237, 8
        %s239 = smul.addr %s238, 8
        %s240 = scalar_lea.vmem %s3, %s239
      $region40: #{net_forward.4} parent=23 // pred_fallthru
        _
    $region24: #{net_forward.4} parent=5 // pred_fallthru
      _
    %p241 = scmp.le.s32.totalorder 1, %s12
    %p242 = scmp.lt.s32.totalorder %s12, 3
    %p243 = pnand %p241, %p242
    %p244 = pneg %p243
    // Predicated region
    $region41: #{net_forward.4} parent=5 // pred_check
      _
    $region42: #{net_forward.4} parent=5 // pred_check_branch
      %246 = sbr.rel (%p243) target = $region44
    $region43: #{net_forward.4} parent=5 // pred_region
      %s247 = ssub.s32 %s12, 1
      %p248 = scmp.lt.s32.totalorder %s17, 1
      %s249 = scalar_select %p248, %s17, 1
      %s250 = smul.addr %s249, 8
      %s251 = smul.addr %s250, 8
      %s252 = scalar_lea.vmem %s0, %s251
      %p253 = pneg %p38
      %p254 = pneg %p35
      %p255 = scmp.lt.s32.totalorder %s17, 1
      %s256 = scalar_select %p255, %s17, 1
      %s257 = smul.addr %s256, 8
      %s258 = smul.addr %s257, 8
      %s259 = scalar_lea.vmem %s1, %s258
      %p260 = pneg %p64
      %p261 = pneg %p61
      %p262 = scmp.lt.s32.totalorder %s17, 1
      %s263 = scalar_select %p262, %s17, 1
      %s264 = smul.addr %s263, 8
      %s265 = smul.addr %s264, 8
      %s266 = scalar_lea.vmem %s2, %s265
      %p267 = pneg %p90
      %p268 = pneg %p87
      %p269 = scmp.lt.s32.totalorder %s17, 1
      %s270 = scalar_select %p269, %s17, 1
      %s271 = smul.addr %s270, 8
      %s272 = smul.addr %s271, 8
      %s273 = scalar_lea.vmem %s3, %s272
      %p274 = pneg %p116
      %p275 = pneg %p113
      %p276 = pneg %p137
      %p277 = pneg %p134
      %p278 = pneg %p158
      %p279 = pneg %p155
      %p280 = pneg %p184
      %p281 = pneg %p181
      %p282 = scmp.lt.s32.totalorder %s17, 1
      %s283 = scalar_select %p282, %s17, 1
      %s284 = smul.addr %s283, 4
      %s285 = smul.addr %s284, 8
      %s286 = scalar_lea.vmem %s6, %s285
      %p287 = scmp.lt.s32.totalorder %s17, 1
      %s288 = scalar_select %p287, %s17, 1
      %s289 = smul.addr %s288, 8
      %s290 = smul.addr %s289, 8
      %s291 = scalar_lea.vmem %s0, %s290
      %p292 = scmp.lt.s32.totalorder %s17, 1
      %s293 = scalar_select %p292, %s17, 1
      %s294 = smul.addr %s293, 8
      %s295 = smul.addr %s294, 8
      %s296 = scalar_lea.vmem %s1, %s295
      %p297 = scmp.lt.s32.totalorder %s17, 1
      %s298 = scalar_select %p297, %s17, 1
      %s299 = smul.addr %s298, 8
      %s300 = smul.addr %s299, 8
      %s301 = scalar_lea.vmem %s2, %s300
      %p302 = scmp.lt.s32.totalorder %s17, 1
      %s303 = scalar_select %p302, %s17, 1
      %s304 = smul.addr %s303, 8
      %s305 = smul.addr %s304, 8
      %s306 = scalar_lea.vmem %s3, %s305
      %p307 = scmp.lt.s32.totalorder %s17, 1
      %s308 = scalar_select %p307, %s17, 1
      %s309 = smul.addr %s308, 4
      %s310 = smul.addr %s309, 8
      %s311 = scalar_lea.vmem %s6, %s310
      %v312 = vld [vmem:[%s4] sm:$0xff]
      %v313 = vld [vmem:[%s4 + $0x8] sm:$0xff]
      %v314 = vld [vmem:[%s4 + $0x10] sm:$0xff]
      %v315 = vld [vmem:[%s4 + $0x18] sm:$0xff]
      %v316 = vld [vmem:[%s4 + $0x20] sm:$0xff]
      %v317 = vld [vmem:[%s4 + $0x28] sm:$0xff]
      %v318 = vld [vmem:[%s4 + $0x30] sm:$0xff]
      %v319 = vld [vmem:[%s4 + $0x38] sm:$0xff]
      %v320 = vld [vmem:[%s4 + $0x40] sm:$0xff]
      %v321 = vld [vmem:[%s4 + $0x48] sm:$0xff]
      %v322 = vld [vmem:[%s4 + $0x50] sm:$0xff]
      %v323 = vld [vmem:[%s4 + $0x58] sm:$0xff]
      %v324 = vld [vmem:[%s4 + $0x60] sm:$0xff]
      %v325 = vld [vmem:[%s4 + $0x68] sm:$0xff]
      %v326 = vld [vmem:[%s4 + $0x70] sm:$0xff]
      %v327 = vld [vmem:[%s4 + $0x78] sm:$0xff]
      %v328 = vld [vmem:[%s4 + $0x80] sm:$0xff]
      %v329 = vld [vmem:[%s4 + $0x88] sm:$0xff]
      %v330 = vld [vmem:[%s4 + $0x90] sm:$0x3f]
      %v331 = vld [vmem:[%s291] sm:$0xff]
      %v332 = vld [vmem:[%s291 + $0x8] sm:$0xff]
      %v333 = vld [vmem:[%s291 + $0x10] sm:$0xff]
      %v334 = vld [vmem:[%s291 + $0x18] sm:$0xff]
      %v335 = vld [vmem:[%s291 + $0x20] sm:$0xff]
      %v336 = vld [vmem:[%s291 + $0x28] sm:$0xff]
      %v337 = vld [vmem:[%s291 + $0x30] sm:$0x1]
      %v338 = vld [vmem:[%s291 + $0x38] sm:$0x1]
      %vm339 = vcmask 179200
      %v341 = vsel %vm339, %v332, 0
      %v344 = vsel %vm339, %v334, 0
      %v347 = vsel %vm339, %v336, 0
      %v350 = vsel %vm339, %v338, 0
      %vm352 = vcmask 1045504
      %v354 = vsel %vm352, %v330, 0
      %356 = vmatprep.subr.mxu0 0.0
      %357 = vmatpush1.msra.mxu0 %v327
      %358 = vmatprep.subr.mxu0 0.0
      %359 = vmatpush1.msra.mxu0 %v326
      %360 = vmatprep.subr.mxu0 0.0
      %361 = vmatpush1.msra.mxu0 %v325
      %362 = vmatprep.subr.mxu0 0.0
      %363 = vmatpush1.msra.mxu0 %v324
      %364 = vmatprep.subr.mxu0 0.0
      %365 = vmatpush1.msra.mxu0 %v323
      %366 = vmatprep.subr.mxu0 0.0
      %367 = vmatpush1.msra.mxu0 %v322
      %368 = vmatprep.subr.mxu0 0.0
      %369 = vmatpush1.msra.mxu0 %v321
      %370 = vmatprep.subr.mxu0 0.0
      %371 = vmatpush1.msra.mxu0 %v320
      %372 = vmatprep.subr.mxu0 0.0
      %373 = vmatpush1.msra.mxu0 %v319
      %374 = vmatprep.subr.mxu0 0.0
      %375 = vmatpush1.msra.mxu0 %v318
      %376 = vmatprep.subr.mxu0 0.0
      %377 = vmatpush1.msra.mxu0 %v317
      %378 = vmatprep.subr.mxu0 0.0
      %379 = vmatpush1.msra.mxu0 %v316
      %380 = vmatprep.subr.mxu0 0.0
      %381 = vmatpush1.msra.mxu0 %v315
      %382 = vmatprep.subr.mxu0 0.0
      %383 = vmatpush1.msra.mxu0 %v314
      %384 = vmatprep.subr.mxu0 0.0
      %385 = vmatpush1.msra.mxu0 %v313
      %386 = vmatprep.subr.mxu0 0.0
      %387 = vmatpush1.msra.mxu0 %v312
      %388 = vmatprep.subr.mxu0 0.0
      %389 = vmatpush2.msra.mxu0 0.0
      %390 = vmatprep.subr.mxu0 0.0
      %391 = vmatpush2.msra.mxu0 0.0
      %392 = vmatprep.subr.mxu0 0.0
      %393 = vmatpush2.msra.mxu0 0.0
      %394 = vmatprep.subr.mxu0 0.0
      %395 = vmatpush2.msra.mxu0 0.0
      %396 = vmatprep.subr.mxu0 0.0
      %397 = vmatpush2.msra.mxu0 0.0
      %398 = vmatprep.subr.mxu0 0.0
      %399 = vmatpush2.msra.mxu0 0.0
      %400 = vmatprep.subr.mxu0 0.0
      %401 = vmatpush2.msra.mxu0 0.0
      %402 = vmatprep.subr.mxu0 0.0
      %403 = vmatpush2.msra.mxu0 0.0
      %404 = vmatprep.subr.mxu0 0.0
      %405 = vmatpush2.msra.mxu0 0.0
      %406 = vmatprep.subr.mxu0 0.0
      %407 = vmatpush2.msra.mxu0 0.0
      %408 = vmatprep.subr.mxu0 0.0
      %409 = vmatpush2.msra.mxu0 0.0
      %410 = vmatprep.subr.mxu0 0.0
      %411 = vmatpush2.msra.mxu0 0.0
      %412 = vmatprep.subr.mxu0 0.0
      %413 = vmatpush2.msra.mxu0 0.0
      %414 = vmatprep.subr.mxu0 0.0
      %415 = vmatpush2.msra.mxu0 %v354
      %416 = vmatprep.subr.mxu0 0.0
      %417 = vmatpush2.msra.mxu0 %v329
      %418 = vmatprep.subr.mxu0 0.0
      %419 = vmatpush2.msra.mxu0 %v328
      %420 = vmatprep.mubr.f32.mxu0 %v341
      %421 = vmatmul.mubr.f32.gmra.mxu0 %v331
      %v422 = vpop.f32.mrf.mxu0
      %v423 = vadd.f32 0.0, %v422
      %v424 = vpop.f32.mrf.mxu0
      %425 = vmatprep.mubr.f32.mxu0 %v344
      %426 = vmatmul.mubr.f32.gmra.mxu0 %v333
      %v427 = vpop.f32.mrf.mxu0
      %v428 = vadd.f32 0.0, %v427
      %v429 = vpop.f32.mrf.mxu0
      %430 = vmatprep.mubr.f32.mxu0 %v347
      %431 = vmatmul.mubr.f32.gmra.mxu0 %v335
      %v432 = vpop.f32.mrf.mxu0
      %v433 = vadd.f32 0.0, %v432
      %v434 = vpop.f32.mrf.mxu0
      %435 = vmatprep.mubr.f32.mxu0 %v350
      %436 = vmatmul.mubr.f32.gmra.mxu0 %v337
      %v437 = vpop.f32.mrf.mxu0
      %v438 = vadd.f32 0.0, %v437
      %v439 = vpop.f32.mrf.mxu0
      %440 = vdwg.mxu0
      %v441 = vld [vmem:[%s296] sm:$0xff]
      %v442 = vld [vmem:[%s296 + $0x8] sm:$0xff]
      %v443 = vld [vmem:[%s296 + $0x10] sm:$0xff]
      %v444 = vld [vmem:[%s296 + $0x18] sm:$0xff]
      %v445 = vld [vmem:[%s296 + $0x20] sm:$0xff]
      %v446 = vld [vmem:[%s296 + $0x28] sm:$0xff]
      %v447 = vld [vmem:[%s296 + $0x30] sm:$0x1]
      %v448 = vld [vmem:[%s296 + $0x38] sm:$0x1]
      %v450 = vsel %vm339, %v442, 0
      %v453 = vsel %vm339, %v444, 0
      %v456 = vsel %vm339, %v446, 0
      %v459 = vsel %vm339, %v448, 0
      %461 = vmatprep.subr.mxu0 0.0
      %462 = vmatpush1.msra.mxu0 %v327
      %463 = vmatprep.subr.mxu0 0.0
      %464 = vmatpush1.msra.mxu0 %v326
      %465 = vmatprep.subr.mxu0 0.0
      %466 = vmatpush1.msra.mxu0 %v325
      %467 = vmatprep.subr.mxu0 0.0
      %468 = vmatpush1.msra.mxu0 %v324
      %469 = vmatprep.subr.mxu0 0.0
      %470 = vmatpush1.msra.mxu0 %v323
      %471 = vmatprep.subr.mxu0 0.0
      %472 = vmatpush1.msra.mxu0 %v322
      %473 = vmatprep.subr.mxu0 0.0
      %474 = vmatpush1.msra.mxu0 %v321
      %475 = vmatprep.subr.mxu0 0.0
      %476 = vmatpush1.msra.mxu0 %v320
      %477 = vmatprep.subr.mxu0 0.0
      %478 = vmatpush1.msra.mxu0 %v319
      %479 = vmatprep.subr.mxu0 0.0
      %480 = vmatpush1.msra.mxu0 %v318
      %481 = vmatprep.subr.mxu0 0.0
      %482 = vmatpush1.msra.mxu0 %v317
      %483 = vmatprep.subr.mxu0 0.0
      %484 = vmatpush1.msra.mxu0 %v316
      %485 = vmatprep.subr.mxu0 0.0
      %486 = vmatpush1.msra.mxu0 %v315
      %487 = vmatprep.subr.mxu0 0.0
      %488 = vmatpush1.msra.mxu0 %v314
      %489 = vmatprep.subr.mxu0 0.0
      %490 = vmatpush1.msra.mxu0 %v313
      %491 = vmatprep.subr.mxu0 0.0
      %492 = vmatpush1.msra.mxu0 %v312
      %493 = vmatprep.subr.mxu0 0.0
      %494 = vmatpush2.msra.mxu0 0.0
      %495 = vmatprep.subr.mxu0 0.0
      %496 = vmatpush2.msra.mxu0 0.0
      %497 = vmatprep.subr.mxu0 0.0
      %498 = vmatpush2.msra.mxu0 0.0
      %499 = vmatprep.subr.mxu0 0.0
      %500 = vmatpush2.msra.mxu0 0.0
      %501 = vmatprep.subr.mxu0 0.0
      %502 = vmatpush2.msra.mxu0 0.0
      %503 = vmatprep.subr.mxu0 0.0
      %504 = vmatpush2.msra.mxu0 0.0
      %505 = vmatprep.subr.mxu0 0.0
      %506 = vmatpush2.msra.mxu0 0.0
      %507 = vmatprep.subr.mxu0 0.0
      %508 = vmatpush2.msra.mxu0 0.0
      %509 = vmatprep.subr.mxu0 0.0
      %510 = vmatpush2.msra.mxu0 0.0
      %511 = vmatprep.subr.mxu0 0.0
      %512 = vmatpush2.msra.mxu0 0.0
      %513 = vmatprep.subr.mxu0 0.0
      %514 = vmatpush2.msra.mxu0 0.0
      %515 = vmatprep.subr.mxu0 0.0
      %516 = vmatpush2.msra.mxu0 0.0
      %517 = vmatprep.subr.mxu0 0.0
      %518 = vmatpush2.msra.mxu0 0.0
      %519 = vmatprep.subr.mxu0 0.0
      %520 = vmatpush2.msra.mxu0 %v354
      %521 = vmatprep.subr.mxu0 0.0
      %522 = vmatpush2.msra.mxu0 %v329
      %523 = vmatprep.subr.mxu0 0.0
      %524 = vmatpush2.msra.mxu0 %v328
      %525 = vmatprep.mubr.f32.mxu0 %v450
      %526 = vmatmul.mubr.f32.gmra.mxu0 %v441
      %v527 = vpop.f32.mrf.mxu0
      %v528 = vadd.f32 0.0, %v527
      %v529 = vpop.f32.mrf.mxu0
      %530 = vmatprep.mubr.f32.mxu0 %v453
      %531 = vmatmul.mubr.f32.gmra.mxu0 %v443
      %v532 = vpop.f32.mrf.mxu0
      %v533 = vadd.f32 0.0, %v532
      %v534 = vpop.f32.mrf.mxu0
      %535 = vmatprep.mubr.f32.mxu0 %v456
      %536 = vmatmul.mubr.f32.gmra.mxu0 %v445
      %v537 = vpop.f32.mrf.mxu0
      %v538 = vadd.f32 0.0, %v537
      %v539 = vpop.f32.mrf.mxu0
      %540 = vmatprep.mubr.f32.mxu0 %v459
      %541 = vmatmul.mubr.f32.gmra.mxu0 %v447
      %v542 = vpop.f32.mrf.mxu0
      %v543 = vadd.f32 0.0, %v542
      %v544 = vpop.f32.mrf.mxu0
      %545 = vdwg.mxu0
      %v546 = vmax.f32 %v423, %v528
      %v547 = vmax.f32 %v428, %v533
      %v548 = vmax.f32 %v433, %v538
      %v549 = vmax.f32 %v438, %v543
      %v550 = vld [vmem:[%s301] sm:$0xff]
      %v551 = vld [vmem:[%s301 + $0x8] sm:$0xff]
      %v552 = vld [vmem:[%s301 + $0x10] sm:$0xff]
      %v553 = vld [vmem:[%s301 + $0x18] sm:$0xff]
      %v554 = vld [vmem:[%s301 + $0x20] sm:$0xff]
      %v555 = vld [vmem:[%s301 + $0x28] sm:$0xff]
      %v556 = vld [vmem:[%s301 + $0x30] sm:$0x1]
      %v557 = vld [vmem:[%s301 + $0x38] sm:$0x1]
      %v559 = vsel %vm339, %v551, 0
      %v562 = vsel %vm339, %v553, 0
      %v565 = vsel %vm339, %v555, 0
      %v568 = vsel %vm339, %v557, 0
      %570 = vmatprep.subr.mxu0 0.0
      %571 = vmatpush1.msra.mxu0 %v327
      %572 = vmatprep.subr.mxu0 0.0
      %573 = vmatpush1.msra.mxu0 %v326
      %574 = vmatprep.subr.mxu0 0.0
      %575 = vmatpush1.msra.mxu0 %v325
      %576 = vmatprep.subr.mxu0 0.0
      %577 = vmatpush1.msra.mxu0 %v324
      %578 = vmatprep.subr.mxu0 0.0
      %579 = vmatpush1.msra.mxu0 %v323
      %580 = vmatprep.subr.mxu0 0.0
      %581 = vmatpush1.msra.mxu0 %v322
      %582 = vmatprep.subr.mxu0 0.0
      %583 = vmatpush1.msra.mxu0 %v321
      %584 = vmatprep.subr.mxu0 0.0
      %585 = vmatpush1.msra.mxu0 %v320
      %586 = vmatprep.subr.mxu0 0.0
      %587 = vmatpush1.msra.mxu0 %v319
      %588 = vmatprep.subr.mxu0 0.0
      %589 = vmatpush1.msra.mxu0 %v318
      %590 = vmatprep.subr.mxu0 0.0
      %591 = vmatpush1.msra.mxu0 %v317
      %592 = vmatprep.subr.mxu0 0.0
      %593 = vmatpush1.msra.mxu0 %v316
      %594 = vmatprep.subr.mxu0 0.0
      %595 = vmatpush1.msra.mxu0 %v315
      %596 = vmatprep.subr.mxu0 0.0
      %597 = vmatpush1.msra.mxu0 %v314
      %598 = vmatprep.subr.mxu0 0.0
      %599 = vmatpush1.msra.mxu0 %v313
      %600 = vmatprep.subr.mxu0 0.0
      %601 = vmatpush1.msra.mxu0 %v312
      %602 = vmatprep.subr.mxu0 0.0
      %603 = vmatpush2.msra.mxu0 0.0
      %604 = vmatprep.subr.mxu0 0.0
      %605 = vmatpush2.msra.mxu0 0.0
      %606 = vmatprep.subr.mxu0 0.0
      %607 = vmatpush2.msra.mxu0 0.0
      %608 = vmatprep.subr.mxu0 0.0
      %609 = vmatpush2.msra.mxu0 0.0
      %610 = vmatprep.subr.mxu0 0.0
      %611 = vmatpush2.msra.mxu0 0.0
      %612 = vmatprep.subr.mxu0 0.0
      %613 = vmatpush2.msra.mxu0 0.0
      %614 = vmatprep.subr.mxu0 0.0
      %615 = vmatpush2.msra.mxu0 0.0
      %616 = vmatprep.subr.mxu0 0.0
      %617 = vmatpush2.msra.mxu0 0.0
      %618 = vmatprep.subr.mxu0 0.0
      %619 = vmatpush2.msra.mxu0 0.0
      %620 = vmatprep.subr.mxu0 0.0
      %621 = vmatpush2.msra.mxu0 0.0
      %622 = vmatprep.subr.mxu0 0.0
      %623 = vmatpush2.msra.mxu0 0.0
      %624 = vmatprep.subr.mxu0 0.0
      %625 = vmatpush2.msra.mxu0 0.0
      %626 = vmatprep.subr.mxu0 0.0
      %627 = vmatpush2.msra.mxu0 0.0
      %628 = vmatprep.subr.mxu0 0.0
      %629 = vmatpush2.msra.mxu0 %v354
      %630 = vmatprep.subr.mxu0 0.0
      %631 = vmatpush2.msra.mxu0 %v329
      %632 = vmatprep.subr.mxu0 0.0
      %633 = vmatpush2.msra.mxu0 %v328
      %634 = vmatprep.mubr.f32.mxu0 %v559
      %635 = vmatmul.mubr.f32.gmra.mxu0 %v550
      %v636 = vpop.f32.mrf.mxu0
      %v637 = vadd.f32 0.0, %v636
      %v638 = vpop.f32.mrf.mxu0
      %639 = vmatprep.mubr.f32.mxu0 %v562
      %640 = vmatmul.mubr.f32.gmra.mxu0 %v552
      %v641 = vpop.f32.mrf.mxu0
      %v642 = vadd.f32 0.0, %v641
      %v643 = vpop.f32.mrf.mxu0
      %644 = vmatprep.mubr.f32.mxu0 %v565
      %645 = vmatmul.mubr.f32.gmra.mxu0 %v554
      %v646 = vpop.f32.mrf.mxu0
      %v647 = vadd.f32 0.0, %v646
      %v648 = vpop.f32.mrf.mxu0
      %649 = vmatprep.mubr.f32.mxu0 %v568
      %650 = vmatmul.mubr.f32.gmra.mxu0 %v556
      %v651 = vpop.f32.mrf.mxu0
      %v652 = vadd.f32 0.0, %v651
      %v653 = vpop.f32.mrf.mxu0
      %654 = vdwg.mxu0
      %v655 = vld [vmem:[%s306] sm:$0xff]
      %v656 = vld [vmem:[%s306 + $0x8] sm:$0xff]
      %v657 = vld [vmem:[%s306 + $0x10] sm:$0xff]
      %v658 = vld [vmem:[%s306 + $0x18] sm:$0xff]
      %v659 = vld [vmem:[%s306 + $0x20] sm:$0xff]
      %v660 = vld [vmem:[%s306 + $0x28] sm:$0xff]
      %v661 = vld [vmem:[%s306 + $0x30] sm:$0x1]
      %v662 = vld [vmem:[%s306 + $0x38] sm:$0x1]
      %v664 = vsel %vm339, %v656, 0
      %v667 = vsel %vm339, %v658, 0
      %v670 = vsel %vm339, %v660, 0
      %v673 = vsel %vm339, %v662, 0
      %675 = vmatprep.subr.mxu0 0.0
      %676 = vmatpush1.msra.mxu0 %v327
      %677 = vmatprep.subr.mxu0 0.0
      %678 = vmatpush1.msra.mxu0 %v326
      %679 = vmatprep.subr.mxu0 0.0
      %680 = vmatpush1.msra.mxu0 %v325
      %681 = vmatprep.subr.mxu0 0.0
      %682 = vmatpush1.msra.mxu0 %v324
      %683 = vmatprep.subr.mxu0 0.0
      %684 = vmatpush1.msra.mxu0 %v323
      %685 = vmatprep.subr.mxu0 0.0
      %686 = vmatpush1.msra.mxu0 %v322
      %687 = vmatprep.subr.mxu0 0.0
      %688 = vmatpush1.msra.mxu0 %v321
      %689 = vmatprep.subr.mxu0 0.0
      %690 = vmatpush1.msra.mxu0 %v320
      %691 = vmatprep.subr.mxu0 0.0
      %692 = vmatpush1.msra.mxu0 %v319
      %693 = vmatprep.subr.mxu0 0.0
      %694 = vmatpush1.msra.mxu0 %v318
      %695 = vmatprep.subr.mxu0 0.0
      %696 = vmatpush1.msra.mxu0 %v317
      %697 = vmatprep.subr.mxu0 0.0
      %698 = vmatpush1.msra.mxu0 %v316
      %699 = vmatprep.subr.mxu0 0.0
      %700 = vmatpush1.msra.mxu0 %v315
      %701 = vmatprep.subr.mxu0 0.0
      %702 = vmatpush1.msra.mxu0 %v314
      %703 = vmatprep.subr.mxu0 0.0
      %704 = vmatpush1.msra.mxu0 %v313
      %705 = vmatprep.subr.mxu0 0.0
      %706 = vmatpush1.msra.mxu0 %v312
      %707 = vmatprep.subr.mxu0 0.0
      %708 = vmatpush2.msra.mxu0 0.0
      %709 = vmatprep.subr.mxu0 0.0
      %710 = vmatpush2.msra.mxu0 0.0
      %711 = vmatprep.subr.mxu0 0.0
      %712 = vmatpush2.msra.mxu0 0.0
      %713 = vmatprep.subr.mxu0 0.0
      %714 = vmatpush2.msra.mxu0 0.0
      %715 = vmatprep.subr.mxu0 0.0
      %716 = vmatpush2.msra.mxu0 0.0
      %717 = vmatprep.subr.mxu0 0.0
      %718 = vmatpush2.msra.mxu0 0.0
      %719 = vmatprep.subr.mxu0 0.0
      %720 = vmatpush2.msra.mxu0 0.0
      %721 = vmatprep.subr.mxu0 0.0
      %722 = vmatpush2.msra.mxu0 0.0
      %723 = vmatprep.subr.mxu0 0.0
      %724 = vmatpush2.msra.mxu0 0.0
      %725 = vmatprep.subr.mxu0 0.0
      %726 = vmatpush2.msra.mxu0 0.0
      %727 = vmatprep.subr.mxu0 0.0
      %728 = vmatpush2.msra.mxu0 0.0
      %729 = vmatprep.subr.mxu0 0.0
      %730 = vmatpush2.msra.mxu0 0.0
      %731 = vmatprep.subr.mxu0 0.0
      %732 = vmatpush2.msra.mxu0 0.0
      %733 = vmatprep.subr.mxu0 0.0
      %734 = vmatpush2.msra.mxu0 %v354
      %735 = vmatprep.subr.mxu0 0.0
      %736 = vmatpush2.msra.mxu0 %v329
      %737 = vmatprep.subr.mxu0 0.0
      %738 = vmatpush2.msra.mxu0 %v328
      %739 = vmatprep.mubr.f32.mxu0 %v664
      %740 = vmatmul.mubr.f32.gmra.mxu0 %v655
      %v741 = vpop.f32.mrf.mxu0
      %v742 = vadd.f32 0.0, %v741
      %v743 = vpop.f32.mrf.mxu0
      %744 = vmatprep.mubr.f32.mxu0 %v667
      %745 = vmatmul.mubr.f32.gmra.mxu0 %v657
      %v746 = vpop.f32.mrf.mxu0
      %v747 = vadd.f32 0.0, %v746
      %v748 = vpop.f32.mrf.mxu0
      %749 = vmatprep.mubr.f32.mxu0 %v670
      %750 = vmatmul.mubr.f32.gmra.mxu0 %v659
      %v751 = vpop.f32.mrf.mxu0
      %v752 = vadd.f32 0.0, %v751
      %v753 = vpop.f32.mrf.mxu0
      %754 = vmatprep.mubr.f32.mxu0 %v673
      %755 = vmatmul.mubr.f32.gmra.mxu0 %v661
      %v756 = vpop.f32.mrf.mxu0
      %v757 = vadd.f32 0.0, %v756
      %v758 = vpop.f32.mrf.mxu0
      %759 = vdwg.mxu0
      %v760 = vmax.f32 %v637, %v742
      %v761 = vmax.f32 %v642, %v747
      %v762 = vmax.f32 %v647, %v752
      %v763 = vmax.f32 %v652, %v757
      %v764 = vmax.f32 %v546, %v760
      %v765 = vmax.f32 %v547, %v761
      %v766 = vmax.f32 %v548, %v762
      %v767 = vmax.f32 %v549, %v763
      %v768 = vld [vmem:[%s5] sm:$0x1]
      %v770 = vlaneseq
      %v771 = vshrl.u32 %v770, 7
      %v772 = vsub.s32 0, %v771
      %v773 = vrot.slane %v768, %v772
      %v775 = vadd.f32 %v764, %v773
      %v776 = vadd.f32 %v765, %v773
      %v777 = vadd.f32 %v766, %v773
      %v778 = vadd.f32 %v767, %v773
      %v779 = vmax.f32 %v775, 0.0
      %v780 = vmax.f32 %v776, 0.0
      %v781 = vmax.f32 %v777, 0.0
      %v782 = vmax.f32 %v778, 0.0
      %783 = vst [vmem:[%s311] sm:$0xff] %v779
      %784 = vst [vmem:[%s311 + $0x8] sm:$0xff] %v780
      %785 = vst [vmem:[%s311 + $0x10] sm:$0xff] %v781
      %786 = vst [vmem:[%s311 + $0x18] sm:$0x1] %v782
      %p787 = scmp.lt.s32.totalorder %s17, 1
      %s788 = scalar_select %p787, %s17, 1
      %s789 = smul.addr %s788, 4
      %s790 = smul.addr %s789, 8
      %s791 = scalar_lea.vmem %s6, %s790
      // Predicated region
      $region45: #{net_forward.4} parent=43 // pred_check
        %p792 = pneg %p181
      $region46: #{net_forward.4} parent=43 // pred_check_branch
        %794 = sbr.rel (%p792) target = $region48
      $region47: #{net_forward.4} parent=43 // pred_region
        _
      $region48: #{net_forward.4} parent=43 // pred_fallthru
        _
    $region44: #{net_forward.4} parent=5 // pred_fallthru
      _
    %p795 = scmp.le.s32.totalorder 2, %s12
    // Predicated region
    $region49: #{net_forward.4} parent=5 // pred_check
      %p796 = pneg %p795
    $region50: #{net_forward.4} parent=5 // pred_check_branch
      %798 = sbr.rel (%p796) target = $region52
    $region51: #{net_forward.4} parent=5 // pred_region
      %s799 = ssub.s32 %s12, 2
      // Predicated region
      $region53: #{net_forward.4} parent=51 // pred_check
        %p800 = pneg %p187
      $region54: #{net_forward.4} parent=51 // pred_check_branch
        %802 = sbr.rel (%p800) target = $region56
      $region55: #{net_forward.4} parent=51 // pred_region
        %p803 = scmp.lt.s32.totalorder %s18, 1
        %s804 = scalar_select %p803, %s18, 1
        %s805 = smul.addr %s804, 4
        %s806 = smul.addr %s805, 8
        %s807 = scalar_lea.vmem %s6, %s806
      $region56: #{net_forward.4} parent=51 // pred_fallthru
        _
    $region52: #{net_forward.4} parent=5 // pred_fallthru
      _
  $region6: #{net_forward.4} parent=0 // loop_footer
    %s16 = sadd.s32 1, %s12
  $region7: #{net_forward.4} parent=0 // loop_footer_branch
    %11 = sbr.rel target = $region3
  $region8: #{net_forward.4} parent=0 // loop_exit
    _

// kernel: net_forward.5
$region0: #{net_forward.5}
  #allocation0 [shape = 'u32[]', space=smem, size = 0x4, offset = 0x4, fixed_abs, tag = 'smem constant byte address 0x4 - core index']
  #allocation1 [shape = 'u32[144,128]{1,0:T(1,128)}', space=vmem, size = 0x12000, scoped, tag = 'internal scratch']
  %s0 = inlined_call_operand.vmem [shape: f32[2,3200], index: 0, kind: input, shape index: {}]
  %s1 = inlined_call_operand.vmem [shape: f32[3200,128], index: 1, kind: input, shape index: {}]
  %s2 = inlined_call_operand.vmem [shape: f32[1,128], index: 2, kind: input, shape index: {}]
  %s3 = inlined_call_operand.vmem [shape: f32[128,128], index: 3, kind: input, shape index: {}]
  %s4 = inlined_call_operand.vmem [shape: f32[1,128], index: 4, kind: input, shape index: {}]
  %s5 = inlined_call_operand.vmem [shape: f32[128,128], index: 5, kind: input, shape index: {}]
  %s6 = inlined_call_operand.vmem [shape: f32[1,128], index: 6, kind: input, shape index: {}]
  %s7 = inlined_call_operand.hbm [shape: f32[2,128], index: 7, kind: output, shape index: {}]
  %s8 = sld [smem:[#allocation0]]
  $region38: #{net_forward.5} parent=0
    _
  %s10 = ssub.s32 1, %s8
  %s11 = scalar_select 0, %s10, %s8
  $region1: #{net_forward.5} parent=0
    #allocation2 [shape = 'u8[1024]{0}', space=vmem, size = 0x400, scoped, tag = 'output window, operand 0, single buffered']
    #allocation3 [shape = 's32[1]{0}', space=sflag, size = 0x4, scoped, tag = 'scoped memory for net_forward.5']
    %12 = vsyncpa [#allocation3], 0
    // Predicated region
    $region2: #{net_forward.5} parent=1 // pred_check
      _
    $region3: #{net_forward.5} parent=1 // pred_check_branch
      %14 = sbr.rel (0) target = $region5
    $region4: #{net_forward.5} parent=1 // pred_region
      _
    $region5: #{net_forward.5} parent=1 // pred_fallthru
      _
    // Predicated region
    $region6: #{net_forward.5} parent=1 // pred_check
      _
    $region7: #{net_forward.5} parent=1 // pred_check_branch
      %16 = sbr.rel (0) target = $region9
    $region8: #{net_forward.5} parent=1 // pred_region
      _
    $region9: #{net_forward.5} parent=1 // pred_fallthru
      _
    // Predicated region
    $region10: #{net_forward.5} parent=1 // pred_check
      _
    $region11: #{net_forward.5} parent=1 // pred_check_branch
      %18 = sbr.rel (0) target = $region13
    $region12: #{net_forward.5} parent=1 // pred_region
      _
    $region13: #{net_forward.5} parent=1 // pred_fallthru
      _
    // Predicated region
    $region14: #{net_forward.5} parent=1 // pred_check
      _
    $region15: #{net_forward.5} parent=1 // pred_check_branch
      %20 = sbr.rel (0) target = $region17
    $region16: #{net_forward.5} parent=1 // pred_region
      _
    $region17: #{net_forward.5} parent=1 // pred_fallthru
      _
    // Predicated region
    $region18: #{net_forward.5} parent=1 // pred_check
      _
    $region19: #{net_forward.5} parent=1 // pred_check_branch
      %22 = sbr.rel (0) target = $region21
    $region20: #{net_forward.5} parent=1 // pred_region
      _
    $region21: #{net_forward.5} parent=1 // pred_fallthru
      _
    // Predicated region
    $region22: #{net_forward.5} parent=1 // pred_check
      _
    $region23: #{net_forward.5} parent=1 // pred_check_branch
      %24 = sbr.rel (0) target = $region25
    $region24: #{net_forward.5} parent=1 // pred_region
      _
    $region25: #{net_forward.5} parent=1 // pred_fallthru
      _
    // Predicated region
    $region26: #{net_forward.5} parent=1 // pred_check
      _
    $region27: #{net_forward.5} parent=1 // pred_check_branch
      %26 = sbr.rel (0) target = $region29
    $region28: #{net_forward.5} parent=1 // pred_region
      _
    $region29: #{net_forward.5} parent=1 // pred_fallthru
      _
    %v27 = vld [vmem:[%s0] sm:$0xff]
    %v28 = vld [vmem:[%s0 + $0x8] sm:$0xff]
    %v29 = vld [vmem:[%s0 + $0x10] sm:$0xff]
    %v30 = vld [vmem:[%s0 + $0x18] sm:$0xff]
    %v31 = vld [vmem:[%s0 + $0x20] sm:$0xff]
    %v32 = vld [vmem:[%s0 + $0x28] sm:$0xff]
    %v33 = vld [vmem:[%s0 + $0x30] sm:$0x3]
    %v34 = vld [vmem:[%s1] sm:$0xff]
    %v35 = vld [vmem:[%s1 + $0x8] sm:$0xff]
    %v36 = vld [vmem:[%s1 + $0x10] sm:$0xff]
    %v37 = vld [vmem:[%s1 + $0x18] sm:$0xff]
    %v38 = vld [vmem:[%s1 + $0x20] sm:$0xff]
    %v39 = vld [vmem:[%s1 + $0x28] sm:$0xff]
    %v40 = vld [vmem:[%s1 + $0x30] sm:$0xff]
    %v41 = vld [vmem:[%s1 + $0x38] sm:$0xff]
    %v42 = vld [vmem:[%s1 + $0x40] sm:$0xff]
    %v43 = vld [vmem:[%s1 + $0x48] sm:$0xff]
    %v44 = vld [vmem:[%s1 + $0x50] sm:$0xff]
    %v45 = vld [vmem:[%s1 + $0x58] sm:$0xff]
    %v46 = vld [vmem:[%s1 + $0x60] sm:$0xff]
    %v47 = vld [vmem:[%s1 + $0x68] sm:$0xff]
    %v48 = vld [vmem:[%s1 + $0x70] sm:$0xff]
    %v49 = vld [vmem:[%s1 + $0x78] sm:$0xff]
    %v50 = vld [vmem:[%s1 + $0x80] sm:$0xff]
    %v51 = vld [vmem:[%s1 + $0x88] sm:$0xff]
    %v52 = vld [vmem:[%s1 + $0x90] sm:$0xff]
    %v53 = vld [vmem:[%s1 + $0x98] sm:$0xff]
    %v54 = vld [vmem:[%s1 + $0xa0] sm:$0xff]
    %v55 = vld [vmem:[%s1 + $0xa8] sm:$0xff]
    %v56 = vld [vmem:[%s1 + $0xb0] sm:$0xff]
    %v57 = vld [vmem:[%s1 + $0xb8] sm:$0xff]
    %v58 = vld [vmem:[%s1 + $0xc0] sm:$0xff]
    %v59 = vld [vmem:[%s1 + $0xc8] sm:$0xff]
    %v60 = vld [vmem:[%s1 + $0xd0] sm:$0xff]
    %v61 = vld [vmem:[%s1 + $0xd8] sm:$0xff]
    %v62 = vld [vmem:[%s1 + $0xe0] sm:$0xff]
    %v63 = vld [vmem:[%s1 + $0xe8] sm:$0xff]
    %v64 = vld [vmem:[%s1 + $0xf0] sm:$0xff]
    %v65 = vld [vmem:[%s1 + $0xf8] sm:$0xff]
    %v66 = vld [vmem:[%s1 + $0x100] sm:$0xff]
    %v67 = vld [vmem:[%s1 + $0x108] sm:$0xff]
    %v68 = vld [vmem:[%s1 + $0x110] sm:$0xff]
    %v69 = vld [vmem:[%s1 + $0x118] sm:$0xff]
    %v70 = vld [vmem:[%s1 + $0x120] sm:$0xff]
    %v71 = vld [vmem:[%s1 + $0x128] sm:$0xff]
    %v72 = vld [vmem:[%s1 + $0x130] sm:$0xff]
    %v73 = vld [vmem:[%s1 + $0x138] sm:$0xff]
    %v74 = vld [vmem:[%s1 + $0x140] sm:$0xff]
    %v75 = vld [vmem:[%s1 + $0x148] sm:$0xff]
    %v76 = vld [vmem:[%s1 + $0x150] sm:$0xff]
    %v77 = vld [vmem:[%s1 + $0x158] sm:$0xff]
    %v78 = vld [vmem:[%s1 + $0x160] sm:$0xff]
    %v79 = vld [vmem:[%s1 + $0x168] sm:$0xff]
    %v80 = vld [vmem:[%s1 + $0x170] sm:$0xff]
    %v81 = vld [vmem:[%s1 + $0x178] sm:$0xff]
    %v82 = vld [vmem:[%s1 + $0x180] sm:$0xff]
    %v83 = vld [vmem:[%s1 + $0x188] sm:$0xff]
    %v84 = vld [vmem:[%s1 + $0x190] sm:$0xff]
    %v85 = vld [vmem:[%s1 + $0x198] sm:$0xff]
    %v86 = vld [vmem:[%s1 + $0x1a0] sm:$0xff]
    %v87 = vld [vmem:[%s1 + $0x1a8] sm:$0xff]
    %v88 = vld [vmem:[%s1 + $0x1b0] sm:$0xff]
    %v89 = vld [vmem:[%s1 + $0x1b8] sm:$0xff]
    %v90 = vld [vmem:[%s1 + $0x1c0] sm:$0xff]
    %v91 = vld [vmem:[%s1 + $0x1c8] sm:$0xff]
    %v92 = vld [vmem:[%s1 + $0x1d0] sm:$0xff]
    %v93 = vld [vmem:[%s1 + $0x1d8] sm:$0xff]
    %v94 = vld [vmem:[%s1 + $0x1e0] sm:$0xff]
    %v95 = vld [vmem:[%s1 + $0x1e8] sm:$0xff]
    %v96 = vld [vmem:[%s1 + $0x1f0] sm:$0xff]
    %v97 = vld [vmem:[%s1 + $0x1f8] sm:$0xff]
    %v98 = vld [vmem:[%s1 + $0x200] sm:$0xff]
    %v99 = vld [vmem:[%s1 + $0x208] sm:$0xff]
    %v100 = vld [vmem:[%s1 + $0x210] sm:$0xff]
    %v101 = vld [vmem:[%s1 + $0x218] sm:$0xff]
    %v102 = vld [vmem:[%s1 + $0x220] sm:$0xff]
    %v103 = vld [vmem:[%s1 + $0x228] sm:$0xff]
    %v104 = vld [vmem:[%s1 + $0x230] sm:$0xff]
    %v105 = vld [vmem:[%s1 + $0x238] sm:$0xff]
    %v106 = vld [vmem:[%s1 + $0x240] sm:$0xff]
    %v107 = vld [vmem:[%s1 + $0x248] sm:$0xff]
    %v108 = vld [vmem:[%s1 + $0x250] sm:$0xff]
    %v109 = vld [vmem:[%s1 + $0x258] sm:$0xff]
    %v110 = vld [vmem:[%s1 + $0x260] sm:$0xff]
    %v111 = vld [vmem:[%s1 + $0x268] sm:$0xff]
    %v112 = vld [vmem:[%s1 + $0x270] sm:$0xff]
    %v113 = vld [vmem:[%s1 + $0x278] sm:$0xff]
    %v114 = vld [vmem:[%s1 + $0x280] sm:$0xff]
    %v115 = vld [vmem:[%s1 + $0x288] sm:$0xff]
    %v116 = vld [vmem:[%s1 + $0x290] sm:$0xff]
    %v117 = vld [vmem:[%s1 + $0x298] sm:$0xff]
    %v118 = vld [vmem:[%s1 + $0x2a0] sm:$0xff]
    %v119 = vld [vmem:[%s1 + $0x2a8] sm:$0xff]
    %v120 = vld [vmem:[%s1 + $0x2b0] sm:$0xff]
    %v121 = vld [vmem:[%s1 + $0x2b8] sm:$0xff]
    %v122 = vld [vmem:[%s1 + $0x2c0] sm:$0xff]
    %v123 = vld [vmem:[%s1 + $0x2c8] sm:$0xff]
    %v124 = vld [vmem:[%s1 + $0x2d0] sm:$0xff]
    %v125 = vld [vmem:[%s1 + $0x2d8] sm:$0xff]
    %v126 = vld [vmem:[%s1 + $0x2e0] sm:$0xff]
    %v127 = vld [vmem:[%s1 + $0x2e8] sm:$0xff]
    %v128 = vld [vmem:[%s1 + $0x2f0] sm:$0xff]
    %v129 = vld [vmem:[%s1 + $0x2f8] sm:$0xff]
    %v130 = vld [vmem:[%s1 + $0x300] sm:$0xff]
    %v131 = vld [vmem:[%s1 + $0x308] sm:$0xff]
    %v132 = vld [vmem:[%s1 + $0x310] sm:$0xff]
    %v133 = vld [vmem:[%s1 + $0x318] sm:$0xff]
    %v134 = vld [vmem:[%s1 + $0x320] sm:$0xff]
    %v135 = vld [vmem:[%s1 + $0x328] sm:$0xff]
    %v136 = vld [vmem:[%s1 + $0x330] sm:$0xff]
    %v137 = vld [vmem:[%s1 + $0x338] sm:$0xff]
    %v138 = vld [vmem:[%s1 + $0x340] sm:$0xff]
    %v139 = vld [vmem:[%s1 + $0x348] sm:$0xff]
    %v140 = vld [vmem:[%s1 + $0x350] sm:$0xff]
    %v141 = vld [vmem:[%s1 + $0x358] sm:$0xff]
    %v142 = vld [vmem:[%s1 + $0x360] sm:$0xff]
    %v143 = vld [vmem:[%s1 + $0x368] sm:$0xff]
    %v144 = vld [vmem:[%s1 + $0x370] sm:$0xff]
    %v145 = vld [vmem:[%s1 + $0x378] sm:$0xff]
    %v146 = vld [vmem:[%s1 + $0x380] sm:$0xff]
    %v147 = vld [vmem:[%s1 + $0x388] sm:$0xff]
    %v148 = vld [vmem:[%s1 + $0x390] sm:$0xff]
    %v149 = vld [vmem:[%s1 + $0x398] sm:$0xff]
    %v150 = vld [vmem:[%s1 + $0x3a0] sm:$0xff]
    %v151 = vld [vmem:[%s1 + $0x3a8] sm:$0xff]
    %v152 = vld [vmem:[%s1 + $0x3b0] sm:$0xff]
    %v153 = vld [vmem:[%s1 + $0x3b8] sm:$0xff]
    %v154 = vld [vmem:[%s1 + $0x3c0] sm:$0xff]
    %v155 = vld [vmem:[%s1 + $0x3c8] sm:$0xff]
    %v156 = vld [vmem:[%s1 + $0x3d0] sm:$0xff]
    %v157 = vld [vmem:[%s1 + $0x3d8] sm:$0xff]
    %v158 = vld [vmem:[%s1 + $0x3e0] sm:$0xff]
    %v159 = vld [vmem:[%s1 + $0x3e8] sm:$0xff]
    %v160 = vld [vmem:[%s1 + $0x3f0] sm:$0xff]
    %v161 = vld [vmem:[%s1 + $0x3f8] sm:$0xff]
    %v162 = vld [vmem:[%s1 + $0x400] sm:$0xff]
    %v163 = vld [vmem:[%s1 + $0x408] sm:$0xff]
    %v164 = vld [vmem:[%s1 + $0x410] sm:$0xff]
    %v165 = vld [vmem:[%s1 + $0x418] sm:$0xff]
    %v166 = vld [vmem:[%s1 + $0x420] sm:$0xff]
    %v167 = vld [vmem:[%s1 + $0x428] sm:$0xff]
    %v168 = vld [vmem:[%s1 + $0x430] sm:$0xff]
    %v169 = vld [vmem:[%s1 + $0x438] sm:$0xff]
    %v170 = vld [vmem:[%s1 + $0x440] sm:$0xff]
    %v171 = vld [vmem:[%s1 + $0x448] sm:$0xff]
    %v172 = vld [vmem:[%s1 + $0x450] sm:$0xff]
    %v173 = vld [vmem:[%s1 + $0x458] sm:$0xff]
    %v174 = vld [vmem:[%s1 + $0x460] sm:$0xff]
    %v175 = vld [vmem:[%s1 + $0x468] sm:$0xff]
    %v176 = vld [vmem:[%s1 + $0x470] sm:$0xff]
    %v177 = vld [vmem:[%s1 + $0x478] sm:$0xff]
    %v178 = vld [vmem:[%s1 + $0x480] sm:$0xff]
    %v179 = vld [vmem:[%s1 + $0x488] sm:$0xff]
    %v180 = vld [vmem:[%s1 + $0x490] sm:$0xff]
    %v181 = vld [vmem:[%s1 + $0x498] sm:$0xff]
    %v182 = vld [vmem:[%s1 + $0x4a0] sm:$0xff]
    %v183 = vld [vmem:[%s1 + $0x4a8] sm:$0xff]
    %v184 = vld [vmem:[%s1 + $0x4b0] sm:$0xff]
    %v185 = vld [vmem:[%s1 + $0x4b8] sm:$0xff]
    %v186 = vld [vmem:[%s1 + $0x4c0] sm:$0xff]
    %v187 = vld [vmem:[%s1 + $0x4c8] sm:$0xff]
    %v188 = vld [vmem:[%s1 + $0x4d0] sm:$0xff]
    %v189 = vld [vmem:[%s1 + $0x4d8] sm:$0xff]
    %v190 = vld [vmem:[%s1 + $0x4e0] sm:$0xff]
    %v191 = vld [vmem:[%s1 + $0x4e8] sm:$0xff]
    %v192 = vld [vmem:[%s1 + $0x4f0] sm:$0xff]
    %v193 = vld [vmem:[%s1 + $0x4f8] sm:$0xff]
    %v194 = vld [vmem:[%s1 + $0x500] sm:$0xff]
    %v195 = vld [vmem:[%s1 + $0x508] sm:$0xff]
    %v196 = vld [vmem:[%s1 + $0x510] sm:$0xff]
    %v197 = vld [vmem:[%s1 + $0x518] sm:$0xff]
    %v198 = vld [vmem:[%s1 + $0x520] sm:$0xff]
    %v199 = vld [vmem:[%s1 + $0x528] sm:$0xff]
    %v200 = vld [vmem:[%s1 + $0x530] sm:$0xff]
    %v201 = vld [vmem:[%s1 + $0x538] sm:$0xff]
    %v202 = vld [vmem:[%s1 + $0x540] sm:$0xff]
    %v203 = vld [vmem:[%s1 + $0x548] sm:$0xff]
    %v204 = vld [vmem:[%s1 + $0x550] sm:$0xff]
    %v205 = vld [vmem:[%s1 + $0x558] sm:$0xff]
    %v206 = vld [vmem:[%s1 + $0x560] sm:$0xff]
    %v207 = vld [vmem:[%s1 + $0x568] sm:$0xff]
    %v208 = vld [vmem:[%s1 + $0x570] sm:$0xff]
    %v209 = vld [vmem:[%s1 + $0x578] sm:$0xff]
    %v210 = vld [vmem:[%s1 + $0x580] sm:$0xff]
    %v211 = vld [vmem:[%s1 + $0x588] sm:$0xff]
    %v212 = vld [vmem:[%s1 + $0x590] sm:$0xff]
    %v213 = vld [vmem:[%s1 + $0x598] sm:$0xff]
    %v214 = vld [vmem:[%s1 + $0x5a0] sm:$0xff]
    %v215 = vld [vmem:[%s1 + $0x5a8] sm:$0xff]
    %v216 = vld [vmem:[%s1 + $0x5b0] sm:$0xff]
    %v217 = vld [vmem:[%s1 + $0x5b8] sm:$0xff]
    %v218 = vld [vmem:[%s1 + $0x5c0] sm:$0xff]
    %v219 = vld [vmem:[%s1 + $0x5c8] sm:$0xff]
    %v220 = vld [vmem:[%s1 + $0x5d0] sm:$0xff]
    %v221 = vld [vmem:[%s1 + $0x5d8] sm:$0xff]
    %v222 = vld [vmem:[%s1 + $0x5e0] sm:$0xff]
    %v223 = vld [vmem:[%s1 + $0x5e8] sm:$0xff]
    %v224 = vld [vmem:[%s1 + $0x5f0] sm:$0xff]
    %v225 = vld [vmem:[%s1 + $0x5f8] sm:$0xff]
    %v226 = vld [vmem:[%s1 + $0x600] sm:$0xff]
    %v227 = vld [vmem:[%s1 + $0x608] sm:$0xff]
    %v228 = vld [vmem:[%s1 + $0x610] sm:$0xff]
    %v229 = vld [vmem:[%s1 + $0x618] sm:$0xff]
    %v230 = vld [vmem:[%s1 + $0x620] sm:$0xff]
    %v231 = vld [vmem:[%s1 + $0x628] sm:$0xff]
    %v232 = vld [vmem:[%s1 + $0x630] sm:$0xff]
    %v233 = vld [vmem:[%s1 + $0x638] sm:$0xff]
    %v234 = vld [vmem:[%s1 + $0x640] sm:$0xff]
    %v235 = vld [vmem:[%s1 + $0x648] sm:$0xff]
    %v236 = vld [vmem:[%s1 + $0x650] sm:$0xff]
    %v237 = vld [vmem:[%s1 + $0x658] sm:$0xff]
    %v238 = vld [vmem:[%s1 + $0x660] sm:$0xff]
    %v239 = vld [vmem:[%s1 + $0x668] sm:$0xff]
    %v240 = vld [vmem:[%s1 + $0x670] sm:$0xff]
    %v241 = vld [vmem:[%s1 + $0x678] sm:$0xff]
    %v242 = vld [vmem:[%s1 + $0x680] sm:$0xff]
    %v243 = vld [vmem:[%s1 + $0x688] sm:$0xff]
    %v244 = vld [vmem:[%s1 + $0x690] sm:$0xff]
    %v245 = vld [vmem:[%s1 + $0x698] sm:$0xff]
    %v246 = vld [vmem:[%s1 + $0x6a0] sm:$0xff]
    %v247 = vld [vmem:[%s1 + $0x6a8] sm:$0xff]
    %v248 = vld [vmem:[%s1 + $0x6b0] sm:$0xff]
    %v249 = vld [vmem:[%s1 + $0x6b8] sm:$0xff]
    %v250 = vld [vmem:[%s1 + $0x6c0] sm:$0xff]
    %v251 = vld [vmem:[%s1 + $0x6c8] sm:$0xff]
    %v252 = vld [vmem:[%s1 + $0x6d0] sm:$0xff]
    %v253 = vld [vmem:[%s1 + $0x6d8] sm:$0xff]
    %v254 = vld [vmem:[%s1 + $0x6e0] sm:$0xff]
    %v255 = vld [vmem:[%s1 + $0x6e8] sm:$0xff]
    %v256 = vld [vmem:[%s1 + $0x6f0] sm:$0xff]
    %v257 = vld [vmem:[%s1 + $0x6f8] sm:$0xff]
    %v258 = vld [vmem:[%s1 + $0x700] sm:$0xff]
    %v259 = vld [vmem:[%s1 + $0x708] sm:$0xff]
    %v260 = vld [vmem:[%s1 + $0x710] sm:$0xff]
    %v261 = vld [vmem:[%s1 + $0x718] sm:$0xff]
    %v262 = vld [vmem:[%s1 + $0x720] sm:$0xff]
    %v263 = vld [vmem:[%s1 + $0x728] sm:$0xff]
    %v264 = vld [vmem:[%s1 + $0x730] sm:$0xff]
    %v265 = vld [vmem:[%s1 + $0x738] sm:$0xff]
    %v266 = vld [vmem:[%s1 + $0x740] sm:$0xff]
    %v267 = vld [vmem:[%s1 + $0x748] sm:$0xff]
    %v268 = vld [vmem:[%s1 + $0x750] sm:$0xff]
    %v269 = vld [vmem:[%s1 + $0x758] sm:$0xff]
    %v270 = vld [vmem:[%s1 + $0x760] sm:$0xff]
    %v271 = vld [vmem:[%s1 + $0x768] sm:$0xff]
    %v272 = vld [vmem:[%s1 + $0x770] sm:$0xff]
    %v273 = vld [vmem:[%s1 + $0x778] sm:$0xff]
    %v274 = vld [vmem:[%s1 + $0x780] sm:$0xff]
    %v275 = vld [vmem:[%s1 + $0x788] sm:$0xff]
    %v276 = vld [vmem:[%s1 + $0x790] sm:$0xff]
    %v277 = vld [vmem:[%s1 + $0x798] sm:$0xff]
    %v278 = vld [vmem:[%s1 + $0x7a0] sm:$0xff]
    %v279 = vld [vmem:[%s1 + $0x7a8] sm:$0xff]
    %v280 = vld [vmem:[%s1 + $0x7b0] sm:$0xff]
    %v281 = vld [vmem:[%s1 + $0x7b8] sm:$0xff]
    %v282 = vld [vmem:[%s1 + $0x7c0] sm:$0xff]
    %v283 = vld [vmem:[%s1 + $0x7c8] sm:$0xff]
    %v284 = vld [vmem:[%s1 + $0x7d0] sm:$0xff]
    %v285 = vld [vmem:[%s1 + $0x7d8] sm:$0xff]
    %v286 = vld [vmem:[%s1 + $0x7e0] sm:$0xff]
    %v287 = vld [vmem:[%s1 + $0x7e8] sm:$0xff]
    %v288 = vld [vmem:[%s1 + $0x7f0] sm:$0xff]
    %v289 = vld [vmem:[%s1 + $0x7f8] sm:$0xff]
    %v290 = vld [vmem:[%s1 + $0x800] sm:$0xff]
    %v291 = vld [vmem:[%s1 + $0x808] sm:$0xff]
    %v292 = vld [vmem:[%s1 + $0x810] sm:$0xff]
    %v293 = vld [vmem:[%s1 + $0x818] sm:$0xff]
    %v294 = vld [vmem:[%s1 + $0x820] sm:$0xff]
    %v295 = vld [vmem:[%s1 + $0x828] sm:$0xff]
    %v296 = vld [vmem:[%s1 + $0x830] sm:$0xff]
    %v297 = vld [vmem:[%s1 + $0x838] sm:$0xff]
    %v298 = vld [vmem:[%s1 + $0x840] sm:$0xff]
    %v299 = vld [vmem:[%s1 + $0x848] sm:$0xff]
    %v300 = vld [vmem:[%s1 + $0x850] sm:$0xff]
    %v301 = vld [vmem:[%s1 + $0x858] sm:$0xff]
    %v302 = vld [vmem:[%s1 + $0x860] sm:$0xff]
    %v303 = vld [vmem:[%s1 + $0x868] sm:$0xff]
    %v304 = vld [vmem:[%s1 + $0x870] sm:$0xff]
    %v305 = vld [vmem:[%s1 + $0x878] sm:$0xff]
    %v306 = vld [vmem:[%s1 + $0x880] sm:$0xff]
    %v307 = vld [vmem:[%s1 + $0x888] sm:$0xff]
    %v308 = vld [vmem:[%s1 + $0x890] sm:$0xff]
    %v309 = vld [vmem:[%s1 + $0x898] sm:$0xff]
    %v310 = vld [vmem:[%s1 + $0x8a0] sm:$0xff]
    %v311 = vld [vmem:[%s1 + $0x8a8] sm:$0xff]
    %v312 = vld [vmem:[%s1 + $0x8b0] sm:$0xff]
    %v313 = vld [vmem:[%s1 + $0x8b8] sm:$0xff]
    %v314 = vld [vmem:[%s1 + $0x8c0] sm:$0xff]
    %v315 = vld [vmem:[%s1 + $0x8c8] sm:$0xff]
    %v316 = vld [vmem:[%s1 + $0x8d0] sm:$0xff]
    %v317 = vld [vmem:[%s1 + $0x8d8] sm:$0xff]
    %v318 = vld [vmem:[%s1 + $0x8e0] sm:$0xff]
    %v319 = vld [vmem:[%s1 + $0x8e8] sm:$0xff]
    %v320 = vld [vmem:[%s1 + $0x8f0] sm:$0xff]
    %v321 = vld [vmem:[%s1 + $0x8f8] sm:$0xff]
    %v322 = vld [vmem:[%s1 + $0x900] sm:$0xff]
    %v323 = vld [vmem:[%s1 + $0x908] sm:$0xff]
    %v324 = vld [vmem:[%s1 + $0x910] sm:$0xff]
    %v325 = vld [vmem:[%s1 + $0x918] sm:$0xff]
    %v326 = vld [vmem:[%s1 + $0x920] sm:$0xff]
    %v327 = vld [vmem:[%s1 + $0x928] sm:$0xff]
    %v328 = vld [vmem:[%s1 + $0x930] sm:$0xff]
    %v329 = vld [vmem:[%s1 + $0x938] sm:$0xff]
    %v330 = vld [vmem:[%s1 + $0x940] sm:$0xff]
    %v331 = vld [vmem:[%s1 + $0x948] sm:$0xff]
    %v332 = vld [vmem:[%s1 + $0x950] sm:$0xff]
    %v333 = vld [vmem:[%s1 + $0x958] sm:$0xff]
    %v334 = vld [vmem:[%s1 + $0x960] sm:$0xff]
    %v335 = vld [vmem:[%s1 + $0x968] sm:$0xff]
    %v336 = vld [vmem:[%s1 + $0x970] sm:$0xff]
    %v337 = vld [vmem:[%s1 + $0x978] sm:$0xff]
    %v338 = vld [vmem:[%s1 + $0x980] sm:$0xff]
    %v339 = vld [vmem:[%s1 + $0x988] sm:$0xff]
    %v340 = vld [vmem:[%s1 + $0x990] sm:$0xff]
    %v341 = vld [vmem:[%s1 + $0x998] sm:$0xff]
    %v342 = vld [vmem:[%s1 + $0x9a0] sm:$0xff]
    %v343 = vld [vmem:[%s1 + $0x9a8] sm:$0xff]
    %v344 = vld [vmem:[%s1 + $0x9b0] sm:$0xff]
    %v345 = vld [vmem:[%s1 + $0x9b8] sm:$0xff]
    %v346 = vld [vmem:[%s1 + $0x9c0] sm:$0xff]
    %v347 = vld [vmem:[%s1 + $0x9c8] sm:$0xff]
    %v348 = vld [vmem:[%s1 + $0x9d0] sm:$0xff]
    %v349 = vld [vmem:[%s1 + $0x9d8] sm:$0xff]
    %v350 = vld [vmem:[%s1 + $0x9e0] sm:$0xff]
    %v351 = vld [vmem:[%s1 + $0x9e8] sm:$0xff]
    %v352 = vld [vmem:[%s1 + $0x9f0] sm:$0xff]
    %v353 = vld [vmem:[%s1 + $0x9f8] sm:$0xff]
    %v354 = vld [vmem:[%s1 + $0xa00] sm:$0xff]
    %v355 = vld [vmem:[%s1 + $0xa08] sm:$0xff]
    %v356 = vld [vmem:[%s1 + $0xa10] sm:$0xff]
    %v357 = vld [vmem:[%s1 + $0xa18] sm:$0xff]
    %v358 = vld [vmem:[%s1 + $0xa20] sm:$0xff]
    %v359 = vld [vmem:[%s1 + $0xa28] sm:$0xff]
    %v360 = vld [vmem:[%s1 + $0xa30] sm:$0xff]
    %v361 = vld [vmem:[%s1 + $0xa38] sm:$0xff]
    %v362 = vld [vmem:[%s1 + $0xa40] sm:$0xff]
    %v363 = vld [vmem:[%s1 + $0xa48] sm:$0xff]
    %v364 = vld [vmem:[%s1 + $0xa50] sm:$0xff]
    %v365 = vld [vmem:[%s1 + $0xa58] sm:$0xff]
    %v366 = vld [vmem:[%s1 + $0xa60] sm:$0xff]
    %v367 = vld [vmem:[%s1 + $0xa68] sm:$0xff]
    %v368 = vld [vmem:[%s1 + $0xa70] sm:$0xff]
    %v369 = vld [vmem:[%s1 + $0xa78] sm:$0xff]
    %v370 = vld [vmem:[%s1 + $0xa80] sm:$0xff]
    %v371 = vld [vmem:[%s1 + $0xa88] sm:$0xff]
    %v372 = vld [vmem:[%s1 + $0xa90] sm:$0xff]
    %v373 = vld [vmem:[%s1 + $0xa98] sm:$0xff]
    %v374 = vld [vmem:[%s1 + $0xaa0] sm:$0xff]
    %v375 = vld [vmem:[%s1 + $0xaa8] sm:$0xff]
    %v376 = vld [vmem:[%s1 + $0xab0] sm:$0xff]
    %v377 = vld [vmem:[%s1 + $0xab8] sm:$0xff]
    %v378 = vld [vmem:[%s1 + $0xac0] sm:$0xff]
    %v379 = vld [vmem:[%s1 + $0xac8] sm:$0xff]
    %v380 = vld [vmem:[%s1 + $0xad0] sm:$0xff]
    %v381 = vld [vmem:[%s1 + $0xad8] sm:$0xff]
    %v382 = vld [vmem:[%s1 + $0xae0] sm:$0xff]
    %v383 = vld [vmem:[%s1 + $0xae8] sm:$0xff]
    %v384 = vld [vmem:[%s1 + $0xaf0] sm:$0xff]
    %v385 = vld [vmem:[%s1 + $0xaf8] sm:$0xff]
    %v386 = vld [vmem:[%s1 + $0xb00] sm:$0xff]
    %v387 = vld [vmem:[%s1 + $0xb08] sm:$0xff]
    %v388 = vld [vmem:[%s1 + $0xb10] sm:$0xff]
    %v389 = vld [vmem:[%s1 + $0xb18] sm:$0xff]
    %v390 = vld [vmem:[%s1 + $0xb20] sm:$0xff]
    %v391 = vld [vmem:[%s1 + $0xb28] sm:$0xff]
    %v392 = vld [vmem:[%s1 + $0xb30] sm:$0xff]
    %v393 = vld [vmem:[%s1 + $0xb38] sm:$0xff]
    %v394 = vld [vmem:[%s1 + $0xb40] sm:$0xff]
    %v395 = vld [vmem:[%s1 + $0xb48] sm:$0xff]
    %v396 = vld [vmem:[%s1 + $0xb50] sm:$0xff]
    %v397 = vld [vmem:[%s1 + $0xb58] sm:$0xff]
    %v398 = vld [vmem:[%s1 + $0xb60] sm:$0xff]
    %v399 = vld [vmem:[%s1 + $0xb68] sm:$0xff]
    %v400 = vld [vmem:[%s1 + $0xb70] sm:$0xff]
    %v401 = vld [vmem:[%s1 + $0xb78] sm:$0xff]
    %v402 = vld [vmem:[%s1 + $0xb80] sm:$0xff]
    %v403 = vld [vmem:[%s1 + $0xb88] sm:$0xff]
    %v404 = vld [vmem:[%s1 + $0xb90] sm:$0xff]
    %v405 = vld [vmem:[%s1 + $0xb98] sm:$0xff]
    %v406 = vld [vmem:[%s1 + $0xba0] sm:$0xff]
    %v407 = vld [vmem:[%s1 + $0xba8] sm:$0xff]
    %v408 = vld [vmem:[%s1 + $0xbb0] sm:$0xff]
    %v409 = vld [vmem:[%s1 + $0xbb8] sm:$0xff]
    %v410 = vld [vmem:[%s1 + $0xbc0] sm:$0xff]
    %v411 = vld [vmem:[%s1 + $0xbc8] sm:$0xff]
    %v412 = vld [vmem:[%s1 + $0xbd0] sm:$0xff]
    %v413 = vld [vmem:[%s1 + $0xbd8] sm:$0xff]
    %v414 = vld [vmem:[%s1 + $0xbe0] sm:$0xff]
    %v415 = vld [vmem:[%s1 + $0xbe8] sm:$0xff]
    %v416 = vld [vmem:[%s1 + $0xbf0] sm:$0xff]
    %v417 = vld [vmem:[%s1 + $0xbf8] sm:$0xff]
    %v418 = vld [vmem:[%s1 + $0xc00] sm:$0xff]
    %v419 = vld [vmem:[%s1 + $0xc08] sm:$0xff]
    %v420 = vld [vmem:[%s1 + $0xc10] sm:$0xff]
    %v421 = vld [vmem:[%s1 + $0xc18] sm:$0xff]
    %v422 = vld [vmem:[%s1 + $0xc20] sm:$0xff]
    %v423 = vld [vmem:[%s1 + $0xc28] sm:$0xff]
    %v424 = vld [vmem:[%s1 + $0xc30] sm:$0xff]
    %v425 = vld [vmem:[%s1 + $0xc38] sm:$0xff]
    %v426 = vld [vmem:[%s1 + $0xc40] sm:$0xff]
    %v427 = vld [vmem:[%s1 + $0xc48] sm:$0xff]
    %v428 = vld [vmem:[%s1 + $0xc50] sm:$0xff]
    %v429 = vld [vmem:[%s1 + $0xc58] sm:$0xff]
    %v430 = vld [vmem:[%s1 + $0xc60] sm:$0xff]
    %v431 = vld [vmem:[%s1 + $0xc68] sm:$0xff]
    %v432 = vld [vmem:[%s1 + $0xc70] sm:$0xff]
    %v433 = vld [vmem:[%s1 + $0xc78] sm:$0xff]
    %v434 = vld [vmem:[%s2] sm:$0x1]
    %v436 = vlaneseq
    %v437 = vshrl.u32 %v436, 7
    %v438 = vsub.s32 0, %v437
    %v439 = vrot.slane %v434, %v438
    %v448 = vcombine.high %v27, %v27
    %v450 = vunpack.c.l.s4 1983009808
    %v451 = vunpack.c.0.s8 %v450
    %v452 = vlaneseq
    %v453 = vshrl.u32 %v452, 7
    %v454 = vsub.s32 %v451, %v453
    %v455 = vrot.slane %v27, %v454
    %v457 = vunpack.c.l.s4 1983009808
    %v458 = vunpack.c.0.s8 %v457
    %v459 = vlaneseq
    %v460 = vshrl.u32 %v459, 7
    %v461 = vsub.s32 %v458, %v460
    %v462 = vrot.slane %v448, %v461
    %v463 = vcombine.high %v455, %v455
    %v464 = vcombine.high %v462, %v462
    %v465 = vcombine.high %v28, %v28
    %v467 = vunpack.c.l.s4 1983009808
    %v468 = vunpack.c.0.s8 %v467
    %v469 = vlaneseq
    %v470 = vshrl.u32 %v469, 7
    %v471 = vsub.s32 %v468, %v470
    %v472 = vrot.slane %v28, %v471
    %v474 = vunpack.c.l.s4 1983009808
    %v475 = vunpack.c.0.s8 %v474
    %v476 = vlaneseq
    %v477 = vshrl.u32 %v476, 7
    %v478 = vsub.s32 %v475, %v477
    %v479 = vrot.slane %v465, %v478
    %v480 = vcombine.high %v472, %v472
    %v481 = vcombine.high %v479, %v479
    %v482 = vcombine.high %v29, %v29
    %v484 = vunpack.c.l.s4 1983009808
    %v485 = vunpack.c.0.s8 %v484
    %v486 = vlaneseq
    %v487 = vshrl.u32 %v486, 7
    %v488 = vsub.s32 %v485, %v487
    %v489 = vrot.slane %v29, %v488
    %v491 = vunpack.c.l.s4 1983009808
    %v492 = vunpack.c.0.s8 %v491
    %v493 = vlaneseq
    %v494 = vshrl.u32 %v493, 7
    %v495 = vsub.s32 %v492, %v494
    %v496 = vrot.slane %v482, %v495
    %v497 = vcombine.high %v489, %v489
    %v498 = vcombine.high %v496, %v496
    %v499 = vcombine.high %v30, %v30
    %v501 = vunpack.c.l.s4 1983009808
    %v502 = vunpack.c.0.s8 %v501
    %v503 = vlaneseq
    %v504 = vshrl.u32 %v503, 7
    %v505 = vsub.s32 %v502, %v504
    %v506 = vrot.slane %v30, %v505
    %v508 = vunpack.c.l.s4 1983009808
    %v509 = vunpack.c.0.s8 %v508
    %v510 = vlaneseq
    %v511 = vshrl.u32 %v510, 7
    %v512 = vsub.s32 %v509, %v511
    %v513 = vrot.slane %v499, %v512
    %v514 = vcombine.high %v506, %v506
    %v515 = vcombine.high %v513, %v513
    %v516 = vcombine.high %v31, %v31
    %v518 = vunpack.c.l.s4 1983009808
    %v519 = vunpack.c.0.s8 %v518
    %v520 = vlaneseq
    %v521 = vshrl.u32 %v520, 7
    %v522 = vsub.s32 %v519, %v521
    %v523 = vrot.slane %v31, %v522
    %v525 = vunpack.c.l.s4 1983009808
    %v526 = vunpack.c.0.s8 %v525
    %v527 = vlaneseq
    %v528 = vshrl.u32 %v527, 7
    %v529 = vsub.s32 %v526, %v528
    %v530 = vrot.slane %v516, %v529
    %v531 = vcombine.high %v523, %v523
    %v532 = vcombine.high %v530, %v530
    %v533 = vcombine.high %v32, %v32
    %v535 = vunpack.c.l.s4 1983009808
    %v536 = vunpack.c.0.s8 %v535
    %v537 = vlaneseq
    %v538 = vshrl.u32 %v537, 7
    %v539 = vsub.s32 %v536, %v538
    %v540 = vrot.slane %v32, %v539
    %v542 = vunpack.c.l.s4 1983009808
    %v543 = vunpack.c.0.s8 %v542
    %v544 = vlaneseq
    %v545 = vshrl.u32 %v544, 7
    %v546 = vsub.s32 %v543, %v545
    %v547 = vrot.slane %v533, %v546
    %v548 = vcombine.high %v540, %v540
    %v549 = vcombine.high %v547, %v547
    %v551 = vunpack.c.l.s4 1983009808
    %v552 = vunpack.c.0.s8 %v551
    %v553 = vlaneseq
    %v554 = vshrl.u32 %v553, 7
    %v555 = vsub.s32 %v552, %v554
    %v556 = vrot.slane %v33, %v555
    %582 = vmatprep.subr.mxu0 0.0
    %583 = vmatpush1.msra.mxu0 %v49
    %584 = vmatprep.subr.mxu0 0.0
    %585 = vmatpush1.msra.mxu0 %v48
    %586 = vmatprep.subr.mxu0 0.0
    %587 = vmatpush1.msra.mxu0 %v47
    %588 = vmatprep.subr.mxu0 0.0
    %589 = vmatpush1.msra.mxu0 %v46
    %590 = vmatprep.subr.mxu0 0.0
    %591 = vmatpush1.msra.mxu0 %v45
    %592 = vmatprep.subr.mxu0 0.0
    %593 = vmatpush1.msra.mxu0 %v44
    %594 = vmatprep.subr.mxu0 0.0
    %595 = vmatpush1.msra.mxu0 %v43
    %596 = vmatprep.subr.mxu0 0.0
    %597 = vmatpush1.msra.mxu0 %v42
    %598 = vmatprep.subr.mxu0 0.0
    %599 = vmatpush1.msra.mxu0 %v41
    %600 = vmatprep.subr.mxu0 0.0
    %601 = vmatpush1.msra.mxu0 %v40
    %602 = vmatprep.subr.mxu0 0.0
    %603 = vmatpush1.msra.mxu0 %v39
    %604 = vmatprep.subr.mxu0 0.0
    %605 = vmatpush1.msra.mxu0 %v38
    %606 = vmatprep.subr.mxu0 0.0
    %607 = vmatpush1.msra.mxu0 %v37
    %608 = vmatprep.subr.mxu0 0.0
    %609 = vmatpush1.msra.mxu0 %v36
    %610 = vmatprep.subr.mxu0 0.0
    %611 = vmatpush1.msra.mxu0 %v35
    %612 = vmatprep.subr.mxu0 0.0
    %613 = vmatpush1.msra.mxu0 %v34
    %614 = vmatprep.subr.mxu0 0.0
    %615 = vmatpush2.msra.mxu0 %v65
    %616 = vmatprep.subr.mxu0 0.0
    %617 = vmatpush2.msra.mxu0 %v64
    %618 = vmatprep.subr.mxu0 0.0
    %619 = vmatpush2.msra.mxu0 %v63
    %620 = vmatprep.subr.mxu0 0.0
    %621 = vmatpush2.msra.mxu0 %v62
    %622 = vmatprep.subr.mxu0 0.0
    %623 = vmatpush2.msra.mxu0 %v61
    %624 = vmatprep.subr.mxu0 0.0
    %625 = vmatpush2.msra.mxu0 %v60
    %626 = vmatprep.subr.mxu0 0.0
    %627 = vmatpush2.msra.mxu0 %v59
    %628 = vmatprep.subr.mxu0 0.0
    %629 = vmatpush2.msra.mxu0 %v58
    %630 = vmatprep.subr.mxu0 0.0
    %631 = vmatpush2.msra.mxu0 %v57
    %632 = vmatprep.subr.mxu0 0.0
    %633 = vmatpush2.msra.mxu0 %v56
    %634 = vmatprep.subr.mxu0 0.0
    %635 = vmatpush2.msra.mxu0 %v55
    %636 = vmatprep.subr.mxu0 0.0
    %637 = vmatpush2.msra.mxu0 %v54
    %638 = vmatprep.subr.mxu0 0.0
    %639 = vmatpush2.msra.mxu0 %v53
    %640 = vmatprep.subr.mxu0 0.0
    %641 = vmatpush2.msra.mxu0 %v52
    %642 = vmatprep.subr.mxu0 0.0
    %643 = vmatpush2.msra.mxu0 %v51
    %644 = vmatprep.subr.mxu0 0.0
    %645 = vmatpush2.msra.mxu0 %v50
    %646 = vmatprep.mubr.f32.mxu0 %v463
    %647 = vmatmul.mubr.f32.gmra.mxu0 %v455
    %v648 = vpop.f32.mrf.mxu0
    %v649 = vadd.f32 %v439, %v648
    %v650 = vpop.f32.mrf.mxu0
    %651 = vdwg.mxu0
    %652 = vmatprep.subr.mxu0 0.0
    %653 = vmatpush1.msra.mxu0 %v81
    %654 = vmatprep.subr.mxu0 0.0
    %655 = vmatpush1.msra.mxu0 %v80
    %656 = vmatprep.subr.mxu0 0.0
    %657 = vmatpush1.msra.mxu0 %v79
    %658 = vmatprep.subr.mxu0 0.0
    %659 = vmatpush1.msra.mxu0 %v78
    %660 = vmatprep.subr.mxu0 0.0
    %661 = vmatpush1.msra.mxu0 %v77
    %662 = vmatprep.subr.mxu0 0.0
    %663 = vmatpush1.msra.mxu0 %v76
    %664 = vmatprep.subr.mxu0 0.0
    %665 = vmatpush1.msra.mxu0 %v75
    %666 = vmatprep.subr.mxu0 0.0
    %667 = vmatpush1.msra.mxu0 %v74
    %668 = vmatprep.subr.mxu0 0.0
    %669 = vmatpush1.msra.mxu0 %v73
    %670 = vmatprep.subr.mxu0 0.0
    %671 = vmatpush1.msra.mxu0 %v72
    %672 = vmatprep.subr.mxu0 0.0
    %673 = vmatpush1.msra.mxu0 %v71
    %674 = vmatprep.subr.mxu0 0.0
    %675 = vmatpush1.msra.mxu0 %v70
    %676 = vmatprep.subr.mxu0 0.0
    %677 = vmatpush1.msra.mxu0 %v69
    %678 = vmatprep.subr.mxu0 0.0
    %679 = vmatpush1.msra.mxu0 %v68
    %680 = vmatprep.subr.mxu0 0.0
    %681 = vmatpush1.msra.mxu0 %v67
    %682 = vmatprep.subr.mxu0 0.0
    %683 = vmatpush1.msra.mxu0 %v66
    %684 = vmatprep.subr.mxu0 0.0
    %685 = vmatpush2.msra.mxu0 %v97
    %686 = vmatprep.subr.mxu0 0.0
    %687 = vmatpush2.msra.mxu0 %v96
    %688 = vmatprep.subr.mxu0 0.0
    %689 = vmatpush2.msra.mxu0 %v95
    %690 = vmatprep.subr.mxu0 0.0
    %691 = vmatpush2.msra.mxu0 %v94
    %692 = vmatprep.subr.mxu0 0.0
    %693 = vmatpush2.msra.mxu0 %v93
    %694 = vmatprep.subr.mxu0 0.0
    %695 = vmatpush2.msra.mxu0 %v92
    %696 = vmatprep.subr.mxu0 0.0
    %697 = vmatpush2.msra.mxu0 %v91
    %698 = vmatprep.subr.mxu0 0.0
    %699 = vmatpush2.msra.mxu0 %v90
    %700 = vmatprep.subr.mxu0 0.0
    %701 = vmatpush2.msra.mxu0 %v89
    %702 = vmatprep.subr.mxu0 0.0
    %703 = vmatpush2.msra.mxu0 %v88
    %704 = vmatprep.subr.mxu0 0.0
    %705 = vmatpush2.msra.mxu0 %v87
    %706 = vmatprep.subr.mxu0 0.0
    %707 = vmatpush2.msra.mxu0 %v86
    %708 = vmatprep.subr.mxu0 0.0
    %709 = vmatpush2.msra.mxu0 %v85
    %710 = vmatprep.subr.mxu0 0.0
    %711 = vmatpush2.msra.mxu0 %v84
    %712 = vmatprep.subr.mxu0 0.0
    %713 = vmatpush2.msra.mxu0 %v83
    %714 = vmatprep.subr.mxu0 0.0
    %715 = vmatpush2.msra.mxu0 %v82
    %716 = vmatprep.mubr.f32.mxu0 %v464
    %717 = vmatmul.mubr.f32.gmra.mxu0 %v462
    %v718 = vpop.f32.mrf.mxu0
    %v719 = vadd.f32 %v649, %v718
    %v720 = vpop.f32.mrf.mxu0
    %721 = vdwg.mxu0
    %722 = vmatprep.subr.mxu0 0.0
    %723 = vmatpush1.msra.mxu0 %v113
    %724 = vmatprep.subr.mxu0 0.0
    %725 = vmatpush1.msra.mxu0 %v112
    %726 = vmatprep.subr.mxu0 0.0
    %727 = vmatpush1.msra.mxu0 %v111
    %728 = vmatprep.subr.mxu0 0.0
    %729 = vmatpush1.msra.mxu0 %v110
    %730 = vmatprep.subr.mxu0 0.0
    %731 = vmatpush1.msra.mxu0 %v109
    %732 = vmatprep.subr.mxu0 0.0
    %733 = vmatpush1.msra.mxu0 %v108
    %734 = vmatprep.subr.mxu0 0.0
    %735 = vmatpush1.msra.mxu0 %v107
    %736 = vmatprep.subr.mxu0 0.0
    %737 = vmatpush1.msra.mxu0 %v106
    %738 = vmatprep.subr.mxu0 0.0
    %739 = vmatpush1.msra.mxu0 %v105
    %740 = vmatprep.subr.mxu0 0.0
    %741 = vmatpush1.msra.mxu0 %v104
    %742 = vmatprep.subr.mxu0 0.0
    %743 = vmatpush1.msra.mxu0 %v103
    %744 = vmatprep.subr.mxu0 0.0
    %745 = vmatpush1.msra.mxu0 %v102
    %746 = vmatprep.subr.mxu0 0.0
    %747 = vmatpush1.msra.mxu0 %v101
    %748 = vmatprep.subr.mxu0 0.0
    %749 = vmatpush1.msra.mxu0 %v100
    %750 = vmatprep.subr.mxu0 0.0
    %751 = vmatpush1.msra.mxu0 %v99
    %752 = vmatprep.subr.mxu0 0.0
    %753 = vmatpush1.msra.mxu0 %v98
    %754 = vmatprep.subr.mxu0 0.0
    %755 = vmatpush2.msra.mxu0 %v129
    %756 = vmatprep.subr.mxu0 0.0
    %757 = vmatpush2.msra.mxu0 %v128
    %758 = vmatprep.subr.mxu0 0.0
    %759 = vmatpush2.msra.mxu0 %v127
    %760 = vmatprep.subr.mxu0 0.0
    %761 = vmatpush2.msra.mxu0 %v126
    %762 = vmatprep.subr.mxu0 0.0
    %763 = vmatpush2.msra.mxu0 %v125
    %764 = vmatprep.subr.mxu0 0.0
    %765 = vmatpush2.msra.mxu0 %v124
    %766 = vmatprep.subr.mxu0 0.0
    %767 = vmatpush2.msra.mxu0 %v123
    %768 = vmatprep.subr.mxu0 0.0
    %769 = vmatpush2.msra.mxu0 %v122
    %770 = vmatprep.subr.mxu0 0.0
    %771 = vmatpush2.msra.mxu0 %v121
    %772 = vmatprep.subr.mxu0 0.0
    %773 = vmatpush2.msra.mxu0 %v120
    %774 = vmatprep.subr.mxu0 0.0
    %775 = vmatpush2.msra.mxu0 %v119
    %776 = vmatprep.subr.mxu0 0.0
    %777 = vmatpush2.msra.mxu0 %v118
    %778 = vmatprep.subr.mxu0 0.0
    %779 = vmatpush2.msra.mxu0 %v117
    %780 = vmatprep.subr.mxu0 0.0
    %781 = vmatpush2.msra.mxu0 %v116
    %782 = vmatprep.subr.mxu0 0.0
    %783 = vmatpush2.msra.mxu0 %v115
    %784 = vmatprep.subr.mxu0 0.0
    %785 = vmatpush2.msra.mxu0 %v114
    %786 = vmatprep.mubr.f32.mxu0 %v480
    %787 = vmatmul.mubr.f32.gmra.mxu0 %v472
    %v788 = vpop.f32.mrf.mxu0
    %v789 = vadd.f32 %v719, %v788
    %v790 = vpop.f32.mrf.mxu0
    %791 = vdwg.mxu0
    %792 = vmatprep.subr.mxu0 0.0
    %793 = vmatpush1.msra.mxu0 %v145
    %794 = vmatprep.subr.mxu0 0.0
    %795 = vmatpush1.msra.mxu0 %v144
    %796 = vmatprep.subr.mxu0 0.0
    %797 = vmatpush1.msra.mxu0 %v143
    %798 = vmatprep.subr.mxu0 0.0
    %799 = vmatpush1.msra.mxu0 %v142
    %800 = vmatprep.subr.mxu0 0.0
    %801 = vmatpush1.msra.mxu0 %v141
    %802 = vmatprep.subr.mxu0 0.0
    %803 = vmatpush1.msra.mxu0 %v140
    %804 = vmatprep.subr.mxu0 0.0
    %805 = vmatpush1.msra.mxu0 %v139
    %806 = vmatprep.subr.mxu0 0.0
    %807 = vmatpush1.msra.mxu0 %v138
    %808 = vmatprep.subr.mxu0 0.0
    %809 = vmatpush1.msra.mxu0 %v137
    %810 = vmatprep.subr.mxu0 0.0
    %811 = vmatpush1.msra.mxu0 %v136
    %812 = vmatprep.subr.mxu0 0.0
    %813 = vmatpush1.msra.mxu0 %v135
    %814 = vmatprep.subr.mxu0 0.0
    %815 = vmatpush1.msra.mxu0 %v134
    %816 = vmatprep.subr.mxu0 0.0
    %817 = vmatpush1.msra.mxu0 %v133
    %818 = vmatprep.subr.mxu0 0.0
    %819 = vmatpush1.msra.mxu0 %v132
    %820 = vmatprep.subr.mxu0 0.0
    %821 = vmatpush1.msra.mxu0 %v131
    %822 = vmatprep.subr.mxu0 0.0
    %823 = vmatpush1.msra.mxu0 %v130
    %824 = vmatprep.subr.mxu0 0.0
    %825 = vmatpush2.msra.mxu0 %v161
    %826 = vmatprep.subr.mxu0 0.0
    %827 = vmatpush2.msra.mxu0 %v160
    %828 = vmatprep.subr.mxu0 0.0
    %829 = vmatpush2.msra.mxu0 %v159
    %830 = vmatprep.subr.mxu0 0.0
    %831 = vmatpush2.msra.mxu0 %v158
    %832 = vmatprep.subr.mxu0 0.0
    %833 = vmatpush2.msra.mxu0 %v157
    %834 = vmatprep.subr.mxu0 0.0
    %835 = vmatpush2.msra.mxu0 %v156
    %836 = vmatprep.subr.mxu0 0.0
    %837 = vmatpush2.msra.mxu0 %v155
    %838 = vmatprep.subr.mxu0 0.0
    %839 = vmatpush2.msra.mxu0 %v154
    %840 = vmatprep.subr.mxu0 0.0
    %841 = vmatpush2.msra.mxu0 %v153
    %842 = vmatprep.subr.mxu0 0.0
    %843 = vmatpush2.msra.mxu0 %v152
    %844 = vmatprep.subr.mxu0 0.0
    %845 = vmatpush2.msra.mxu0 %v151
    %846 = vmatprep.subr.mxu0 0.0
    %847 = vmatpush2.msra.mxu0 %v150
    %848 = vmatprep.subr.mxu0 0.0
    %849 = vmatpush2.msra.mxu0 %v149
    %850 = vmatprep.subr.mxu0 0.0
    %851 = vmatpush2.msra.mxu0 %v148
    %852 = vmatprep.subr.mxu0 0.0
    %853 = vmatpush2.msra.mxu0 %v147
    %854 = vmatprep.subr.mxu0 0.0
    %855 = vmatpush2.msra.mxu0 %v146
    %856 = vmatprep.mubr.f32.mxu0 %v481
    %857 = vmatmul.mubr.f32.gmra.mxu0 %v479
    %v858 = vpop.f32.mrf.mxu0
    %v859 = vadd.f32 %v789, %v858
    %v860 = vpop.f32.mrf.mxu0
    %861 = vdwg.mxu0
    %862 = vmatprep.subr.mxu0 0.0
    %863 = vmatpush1.msra.mxu0 %v177
    %864 = vmatprep.subr.mxu0 0.0
    %865 = vmatpush1.msra.mxu0 %v176
    %866 = vmatprep.subr.mxu0 0.0
    %867 = vmatpush1.msra.mxu0 %v175
    %868 = vmatprep.subr.mxu0 0.0
    %869 = vmatpush1.msra.mxu0 %v174
    %870 = vmatprep.subr.mxu0 0.0
    %871 = vmatpush1.msra.mxu0 %v173
    %872 = vmatprep.subr.mxu0 0.0
    %873 = vmatpush1.msra.mxu0 %v172
    %874 = vmatprep.subr.mxu0 0.0
    %875 = vmatpush1.msra.mxu0 %v171
    %876 = vmatprep.subr.mxu0 0.0
    %877 = vmatpush1.msra.mxu0 %v170
    %878 = vmatprep.subr.mxu0 0.0
    %879 = vmatpush1.msra.mxu0 %v169
    %880 = vmatprep.subr.mxu0 0.0
    %881 = vmatpush1.msra.mxu0 %v168
    %882 = vmatprep.subr.mxu0 0.0
    %883 = vmatpush1.msra.mxu0 %v167
    %884 = vmatprep.subr.mxu0 0.0
    %885 = vmatpush1.msra.mxu0 %v166
    %886 = vmatprep.subr.mxu0 0.0
    %887 = vmatpush1.msra.mxu0 %v165
    %888 = vmatprep.subr.mxu0 0.0
    %889 = vmatpush1.msra.mxu0 %v164
    %890 = vmatprep.subr.mxu0 0.0
    %891 = vmatpush1.msra.mxu0 %v163
    %892 = vmatprep.subr.mxu0 0.0
    %893 = vmatpush1.msra.mxu0 %v162
    %894 = vmatprep.subr.mxu0 0.0
    %895 = vmatpush2.msra.mxu0 %v193
    %896 = vmatprep.subr.mxu0 0.0
    %897 = vmatpush2.msra.mxu0 %v192
    %898 = vmatprep.subr.mxu0 0.0
    %899 = vmatpush2.msra.mxu0 %v191
    %900 = vmatprep.subr.mxu0 0.0
    %901 = vmatpush2.msra.mxu0 %v190
    %902 = vmatprep.subr.mxu0 0.0
    %903 = vmatpush2.msra.mxu0 %v189
    %904 = vmatprep.subr.mxu0 0.0
    %905 = vmatpush2.msra.mxu0 %v188
    %906 = vmatprep.subr.mxu0 0.0
    %907 = vmatpush2.msra.mxu0 %v187
    %908 = vmatprep.subr.mxu0 0.0
    %909 = vmatpush2.msra.mxu0 %v186
    %910 = vmatprep.subr.mxu0 0.0
    %911 = vmatpush2.msra.mxu0 %v185
    %912 = vmatprep.subr.mxu0 0.0
    %913 = vmatpush2.msra.mxu0 %v184
    %914 = vmatprep.subr.mxu0 0.0
    %915 = vmatpush2.msra.mxu0 %v183
    %916 = vmatprep.subr.mxu0 0.0
    %917 = vmatpush2.msra.mxu0 %v182
    %918 = vmatprep.subr.mxu0 0.0
    %919 = vmatpush2.msra.mxu0 %v181
    %920 = vmatprep.subr.mxu0 0.0
    %921 = vmatpush2.msra.mxu0 %v180
    %922 = vmatprep.subr.mxu0 0.0
    %923 = vmatpush2.msra.mxu0 %v179
    %924 = vmatprep.subr.mxu0 0.0
    %925 = vmatpush2.msra.mxu0 %v178
    %926 = vmatprep.mubr.f32.mxu0 %v497
    %927 = vmatmul.mubr.f32.gmra.mxu0 %v489
    %v928 = vpop.f32.mrf.mxu0
    %v929 = vadd.f32 %v859, %v928
    %v930 = vpop.f32.mrf.mxu0
    %931 = vdwg.mxu0
    %932 = vmatprep.subr.mxu0 0.0
    %933 = vmatpush1.msra.mxu0 %v209
    %934 = vmatprep.subr.mxu0 0.0
    %935 = vmatpush1.msra.mxu0 %v208
    %936 = vmatprep.subr.mxu0 0.0
    %937 = vmatpush1.msra.mxu0 %v207
    %938 = vmatprep.subr.mxu0 0.0
    %939 = vmatpush1.msra.mxu0 %v206
    %940 = vmatprep.subr.mxu0 0.0
    %941 = vmatpush1.msra.mxu0 %v205
    %942 = vmatprep.subr.mxu0 0.0
    %943 = vmatpush1.msra.mxu0 %v204
    %944 = vmatprep.subr.mxu0 0.0
    %945 = vmatpush1.msra.mxu0 %v203
    %946 = vmatprep.subr.mxu0 0.0
    %947 = vmatpush1.msra.mxu0 %v202
    %948 = vmatprep.subr.mxu0 0.0
    %949 = vmatpush1.msra.mxu0 %v201
    %950 = vmatprep.subr.mxu0 0.0
    %951 = vmatpush1.msra.mxu0 %v200
    %952 = vmatprep.subr.mxu0 0.0
    %953 = vmatpush1.msra.mxu0 %v199
    %954 = vmatprep.subr.mxu0 0.0
    %955 = vmatpush1.msra.mxu0 %v198
    %956 = vmatprep.subr.mxu0 0.0
    %957 = vmatpush1.msra.mxu0 %v197
    %958 = vmatprep.subr.mxu0 0.0
    %959 = vmatpush1.msra.mxu0 %v196
    %960 = vmatprep.subr.mxu0 0.0
    %961 = vmatpush1.msra.mxu0 %v195
    %962 = vmatprep.subr.mxu0 0.0
    %963 = vmatpush1.msra.mxu0 %v194
    %964 = vmatprep.subr.mxu0 0.0
    %965 = vmatpush2.msra.mxu0 %v225
    %966 = vmatprep.subr.mxu0 0.0
    %967 = vmatpush2.msra.mxu0 %v224
    %968 = vmatprep.subr.mxu0 0.0
    %969 = vmatpush2.msra.mxu0 %v223
    %970 = vmatprep.subr.mxu0 0.0
    %971 = vmatpush2.msra.mxu0 %v222
    %972 = vmatprep.subr.mxu0 0.0
    %973 = vmatpush2.msra.mxu0 %v221
    %974 = vmatprep.subr.mxu0 0.0
    %975 = vmatpush2.msra.mxu0 %v220
    %976 = vmatprep.subr.mxu0 0.0
    %977 = vmatpush2.msra.mxu0 %v219
    %978 = vmatprep.subr.mxu0 0.0
    %979 = vmatpush2.msra.mxu0 %v218
    %980 = vmatprep.subr.mxu0 0.0
    %981 = vmatpush2.msra.mxu0 %v217
    %982 = vmatprep.subr.mxu0 0.0
    %983 = vmatpush2.msra.mxu0 %v216
    %984 = vmatprep.subr.mxu0 0.0
    %985 = vmatpush2.msra.mxu0 %v215
    %986 = vmatprep.subr.mxu0 0.0
    %987 = vmatpush2.msra.mxu0 %v214
    %988 = vmatprep.subr.mxu0 0.0
    %989 = vmatpush2.msra.mxu0 %v213
    %990 = vmatprep.subr.mxu0 0.0
    %991 = vmatpush2.msra.mxu0 %v212
    %992 = vmatprep.subr.mxu0 0.0
    %993 = vmatpush2.msra.mxu0 %v211
    %994 = vmatprep.subr.mxu0 0.0
    %995 = vmatpush2.msra.mxu0 %v210
    %996 = vmatprep.mubr.f32.mxu0 %v498
    %997 = vmatmul.mubr.f32.gmra.mxu0 %v496
    %v998 = vpop.f32.mrf.mxu0
    %v999 = vadd.f32 %v929, %v998
    %v1000 = vpop.f32.mrf.mxu0
    %1001 = vdwg.mxu0
    %1002 = vmatprep.subr.mxu0 0.0
    %1003 = vmatpush1.msra.mxu0 %v241
    %1004 = vmatprep.subr.mxu0 0.0
    %1005 = vmatpush1.msra.mxu0 %v240
    %1006 = vmatprep.subr.mxu0 0.0
    %1007 = vmatpush1.msra.mxu0 %v239
    %1008 = vmatprep.subr.mxu0 0.0
    %1009 = vmatpush1.msra.mxu0 %v238
    %1010 = vmatprep.subr.mxu0 0.0
    %1011 = vmatpush1.msra.mxu0 %v237
    %1012 = vmatprep.subr.mxu0 0.0
    %1013 = vmatpush1.msra.mxu0 %v236
    %1014 = vmatprep.subr.mxu0 0.0
    %1015 = vmatpush1.msra.mxu0 %v235
    %1016 = vmatprep.subr.mxu0 0.0
    %1017 = vmatpush1.msra.mxu0 %v234
    %1018 = vmatprep.subr.mxu0 0.0
    %1019 = vmatpush1.msra.mxu0 %v233
    %1020 = vmatprep.subr.mxu0 0.0
    %1021 = vmatpush1.msra.mxu0 %v232
    %1022 = vmatprep.subr.mxu0 0.0
    %1023 = vmatpush1.msra.mxu0 %v231
    %1024 = vmatprep.subr.mxu0 0.0
    %1025 = vmatpush1.msra.mxu0 %v230
    %1026 = vmatprep.subr.mxu0 0.0
    %1027 = vmatpush1.msra.mxu0 %v229
    %1028 = vmatprep.subr.mxu0 0.0
    %1029 = vmatpush1.msra.mxu0 %v228
    %1030 = vmatprep.subr.mxu0 0.0
    %1031 = vmatpush1.msra.mxu0 %v227
    %1032 = vmatprep.subr.mxu0 0.0
    %1033 = vmatpush1.msra.mxu0 %v226
    %1034 = vmatprep.subr.mxu0 0.0
    %1035 = vmatpush2.msra.mxu0 %v257
    %1036 = vmatprep.subr.mxu0 0.0
    %1037 = vmatpush2.msra.mxu0 %v256
    %1038 = vmatprep.subr.mxu0 0.0
    %1039 = vmatpush2.msra.mxu0 %v255
    %1040 = vmatprep.subr.mxu0 0.0
    %1041 = vmatpush2.msra.mxu0 %v254
    %1042 = vmatprep.subr.mxu0 0.0
    %1043 = vmatpush2.msra.mxu0 %v253
    %1044 = vmatprep.subr.mxu0 0.0
    %1045 = vmatpush2.msra.mxu0 %v252
    %1046 = vmatprep.subr.mxu0 0.0
    %1047 = vmatpush2.msra.mxu0 %v251
    %1048 = vmatprep.subr.mxu0 0.0
    %1049 = vmatpush2.msra.mxu0 %v250
    %1050 = vmatprep.subr.mxu0 0.0
    %1051 = vmatpush2.msra.mxu0 %v249
    %1052 = vmatprep.subr.mxu0 0.0
    %1053 = vmatpush2.msra.mxu0 %v248
    %1054 = vmatprep.subr.mxu0 0.0
    %1055 = vmatpush2.msra.mxu0 %v247
    %1056 = vmatprep.subr.mxu0 0.0
    %1057 = vmatpush2.msra.mxu0 %v246
    %1058 = vmatprep.subr.mxu0 0.0
    %1059 = vmatpush2.msra.mxu0 %v245
    %1060 = vmatprep.subr.mxu0 0.0
    %1061 = vmatpush2.msra.mxu0 %v244
    %1062 = vmatprep.subr.mxu0 0.0
    %1063 = vmatpush2.msra.mxu0 %v243
    %1064 = vmatprep.subr.mxu0 0.0
    %1065 = vmatpush2.msra.mxu0 %v242
    %1066 = vmatprep.mubr.f32.mxu0 %v514
    %1067 = vmatmul.mubr.f32.gmra.mxu0 %v506
    %v1068 = vpop.f32.mrf.mxu0
    %v1069 = vadd.f32 %v999, %v1068
    %v1070 = vpop.f32.mrf.mxu0
    %1071 = vdwg.mxu0
    %1072 = vmatprep.subr.mxu0 0.0
    %1073 = vmatpush1.msra.mxu0 %v273
    %1074 = vmatprep.subr.mxu0 0.0
    %1075 = vmatpush1.msra.mxu0 %v272
    %1076 = vmatprep.subr.mxu0 0.0
    %1077 = vmatpush1.msra.mxu0 %v271
    %1078 = vmatprep.subr.mxu0 0.0
    %1079 = vmatpush1.msra.mxu0 %v270
    %1080 = vmatprep.subr.mxu0 0.0
    %1081 = vmatpush1.msra.mxu0 %v269
    %1082 = vmatprep.subr.mxu0 0.0
    %1083 = vmatpush1.msra.mxu0 %v268
    %1084 = vmatprep.subr.mxu0 0.0
    %1085 = vmatpush1.msra.mxu0 %v267
    %1086 = vmatprep.subr.mxu0 0.0
    %1087 = vmatpush1.msra.mxu0 %v266
    %1088 = vmatprep.subr.mxu0 0.0
    %1089 = vmatpush1.msra.mxu0 %v265
    %1090 = vmatprep.subr.mxu0 0.0
    %1091 = vmatpush1.msra.mxu0 %v264
    %1092 = vmatprep.subr.mxu0 0.0
    %1093 = vmatpush1.msra.mxu0 %v263
    %1094 = vmatprep.subr.mxu0 0.0
    %1095 = vmatpush1.msra.mxu0 %v262
    %1096 = vmatprep.subr.mxu0 0.0
    %1097 = vmatpush1.msra.mxu0 %v261
    %1098 = vmatprep.subr.mxu0 0.0
    %1099 = vmatpush1.msra.mxu0 %v260
    %1100 = vmatprep.subr.mxu0 0.0
    %1101 = vmatpush1.msra.mxu0 %v259
    %1102 = vmatprep.subr.mxu0 0.0
    %1103 = vmatpush1.msra.mxu0 %v258
    %1104 = vmatprep.subr.mxu0 0.0
    %1105 = vmatpush2.msra.mxu0 %v289
    %1106 = vmatprep.subr.mxu0 0.0
    %1107 = vmatpush2.msra.mxu0 %v288
    %1108 = vmatprep.subr.mxu0 0.0
    %1109 = vmatpush2.msra.mxu0 %v287
    %1110 = vmatprep.subr.mxu0 0.0
    %1111 = vmatpush2.msra.mxu0 %v286
    %1112 = vmatprep.subr.mxu0 0.0
    %1113 = vmatpush2.msra.mxu0 %v285
    %1114 = vmatprep.subr.mxu0 0.0
    %1115 = vmatpush2.msra.mxu0 %v284
    %1116 = vmatprep.subr.mxu0 0.0
    %1117 = vmatpush2.msra.mxu0 %v283
    %1118 = vmatprep.subr.mxu0 0.0
    %1119 = vmatpush2.msra.mxu0 %v282
    %1120 = vmatprep.subr.mxu0 0.0
    %1121 = vmatpush2.msra.mxu0 %v281
    %1122 = vmatprep.subr.mxu0 0.0
    %1123 = vmatpush2.msra.mxu0 %v280
    %1124 = vmatprep.subr.mxu0 0.0
    %1125 = vmatpush2.msra.mxu0 %v279
    %1126 = vmatprep.subr.mxu0 0.0
    %1127 = vmatpush2.msra.mxu0 %v278
    %1128 = vmatprep.subr.mxu0 0.0
    %1129 = vmatpush2.msra.mxu0 %v277
    %1130 = vmatprep.subr.mxu0 0.0
    %1131 = vmatpush2.msra.mxu0 %v276
    %1132 = vmatprep.subr.mxu0 0.0
    %1133 = vmatpush2.msra.mxu0 %v275
    %1134 = vmatprep.subr.mxu0 0.0
    %1135 = vmatpush2.msra.mxu0 %v274
    %1136 = vmatprep.mubr.f32.mxu0 %v515
    %1137 = vmatmul.mubr.f32.gmra.mxu0 %v513
    %v1138 = vpop.f32.mrf.mxu0
    %v1139 = vadd.f32 %v1069, %v1138
    %v1140 = vpop.f32.mrf.mxu0
    %1141 = vdwg.mxu0
    %1142 = vmatprep.subr.mxu0 0.0
    %1143 = vmatpush1.msra.mxu0 %v305
    %1144 = vmatprep.subr.mxu0 0.0
    %1145 = vmatpush1.msra.mxu0 %v304
    %1146 = vmatprep.subr.mxu0 0.0
    %1147 = vmatpush1.msra.mxu0 %v303
    %1148 = vmatprep.subr.mxu0 0.0
    %1149 = vmatpush1.msra.mxu0 %v302
    %1150 = vmatprep.subr.mxu0 0.0
    %1151 = vmatpush1.msra.mxu0 %v301
    %1152 = vmatprep.subr.mxu0 0.0
    %1153 = vmatpush1.msra.mxu0 %v300
    %1154 = vmatprep.subr.mxu0 0.0
    %1155 = vmatpush1.msra.mxu0 %v299
    %1156 = vmatprep.subr.mxu0 0.0
    %1157 = vmatpush1.msra.mxu0 %v298
    %1158 = vmatprep.subr.mxu0 0.0
    %1159 = vmatpush1.msra.mxu0 %v297
    %1160 = vmatprep.subr.mxu0 0.0
    %1161 = vmatpush1.msra.mxu0 %v296
    %1162 = vmatprep.subr.mxu0 0.0
    %1163 = vmatpush1.msra.mxu0 %v295
    %1164 = vmatprep.subr.mxu0 0.0
    %1165 = vmatpush1.msra.mxu0 %v294
    %1166 = vmatprep.subr.mxu0 0.0
    %1167 = vmatpush1.msra.mxu0 %v293
    %1168 = vmatprep.subr.mxu0 0.0
    %1169 = vmatpush1.msra.mxu0 %v292
    %1170 = vmatprep.subr.mxu0 0.0
    %1171 = vmatpush1.msra.mxu0 %v291
    %1172 = vmatprep.subr.mxu0 0.0
    %1173 = vmatpush1.msra.mxu0 %v290
    %1174 = vmatprep.subr.mxu0 0.0
    %1175 = vmatpush2.msra.mxu0 %v321
    %1176 = vmatprep.subr.mxu0 0.0
    %1177 = vmatpush2.msra.mxu0 %v320
    %1178 = vmatprep.subr.mxu0 0.0
    %1179 = vmatpush2.msra.mxu0 %v319
    %1180 = vmatprep.subr.mxu0 0.0
    %1181 = vmatpush2.msra.mxu0 %v318
    %1182 = vmatprep.subr.mxu0 0.0
    %1183 = vmatpush2.msra.mxu0 %v317
    %1184 = vmatprep.subr.mxu0 0.0
    %1185 = vmatpush2.msra.mxu0 %v316
    %1186 = vmatprep.subr.mxu0 0.0
    %1187 = vmatpush2.msra.mxu0 %v315
    %1188 = vmatprep.subr.mxu0 0.0
    %1189 = vmatpush2.msra.mxu0 %v314
    %1190 = vmatprep.subr.mxu0 0.0
    %1191 = vmatpush2.msra.mxu0 %v313
    %1192 = vmatprep.subr.mxu0 0.0
    %1193 = vmatpush2.msra.mxu0 %v312
    %1194 = vmatprep.subr.mxu0 0.0
    %1195 = vmatpush2.msra.mxu0 %v311
    %1196 = vmatprep.subr.mxu0 0.0
    %1197 = vmatpush2.msra.mxu0 %v310
    %1198 = vmatprep.subr.mxu0 0.0
    %1199 = vmatpush2.msra.mxu0 %v309
    %1200 = vmatprep.subr.mxu0 0.0
    %1201 = vmatpush2.msra.mxu0 %v308
    %1202 = vmatprep.subr.mxu0 0.0
    %1203 = vmatpush2.msra.mxu0 %v307
    %1204 = vmatprep.subr.mxu0 0.0
    %1205 = vmatpush2.msra.mxu0 %v306
    %1206 = vmatprep.mubr.f32.mxu0 %v531
    %1207 = vmatmul.mubr.f32.gmra.mxu0 %v523
    %v1208 = vpop.f32.mrf.mxu0
    %v1209 = vadd.f32 %v1139, %v1208
    %v1210 = vpop.f32.mrf.mxu0
    %1211 = vdwg.mxu0
    %1212 = vmatprep.subr.mxu0 0.0
    %1213 = vmatpush1.msra.mxu0 %v337
    %1214 = vmatprep.subr.mxu0 0.0
    %1215 = vmatpush1.msra.mxu0 %v336
    %1216 = vmatprep.subr.mxu0 0.0
    %1217 = vmatpush1.msra.mxu0 %v335
    %1218 = vmatprep.subr.mxu0 0.0
    %1219 = vmatpush1.msra.mxu0 %v334
    %1220 = vmatprep.subr.mxu0 0.0
    %1221 = vmatpush1.msra.mxu0 %v333
    %1222 = vmatprep.subr.mxu0 0.0
    %1223 = vmatpush1.msra.mxu0 %v332
    %1224 = vmatprep.subr.mxu0 0.0
    %1225 = vmatpush1.msra.mxu0 %v331
    %1226 = vmatprep.subr.mxu0 0.0
    %1227 = vmatpush1.msra.mxu0 %v330
    %1228 = vmatprep.subr.mxu0 0.0
    %1229 = vmatpush1.msra.mxu0 %v329
    %1230 = vmatprep.subr.mxu0 0.0
    %1231 = vmatpush1.msra.mxu0 %v328
    %1232 = vmatprep.subr.mxu0 0.0
    %1233 = vmatpush1.msra.mxu0 %v327
    %1234 = vmatprep.subr.mxu0 0.0
    %1235 = vmatpush1.msra.mxu0 %v326
    %1236 = vmatprep.subr.mxu0 0.0
    %1237 = vmatpush1.msra.mxu0 %v325
    %1238 = vmatprep.subr.mxu0 0.0
    %1239 = vmatpush1.msra.mxu0 %v324
    %1240 = vmatprep.subr.mxu0 0.0
    %1241 = vmatpush1.msra.mxu0 %v323
    %1242 = vmatprep.subr.mxu0 0.0
    %1243 = vmatpush1.msra.mxu0 %v322
    %1244 = vmatprep.subr.mxu0 0.0
    %1245 = vmatpush2.msra.mxu0 %v353
    %1246 = vmatprep.subr.mxu0 0.0
    %1247 = vmatpush2.msra.mxu0 %v352
    %1248 = vmatprep.subr.mxu0 0.0
    %1249 = vmatpush2.msra.mxu0 %v351
    %1250 = vmatprep.subr.mxu0 0.0
    %1251 = vmatpush2.msra.mxu0 %v350
    %1252 = vmatprep.subr.mxu0 0.0
    %1253 = vmatpush2.msra.mxu0 %v349
    %1254 = vmatprep.subr.mxu0 0.0
    %1255 = vmatpush2.msra.mxu0 %v348
    %1256 = vmatprep.subr.mxu0 0.0
    %1257 = vmatpush2.msra.mxu0 %v347
    %1258 = vmatprep.subr.mxu0 0.0
    %1259 = vmatpush2.msra.mxu0 %v346
    %1260 = vmatprep.subr.mxu0 0.0
    %1261 = vmatpush2.msra.mxu0 %v345
    %1262 = vmatprep.subr.mxu0 0.0
    %1263 = vmatpush2.msra.mxu0 %v344
    %1264 = vmatprep.subr.mxu0 0.0
    %1265 = vmatpush2.msra.mxu0 %v343
    %1266 = vmatprep.subr.mxu0 0.0
    %1267 = vmatpush2.msra.mxu0 %v342
    %1268 = vmatprep.subr.mxu0 0.0
    %1269 = vmatpush2.msra.mxu0 %v341
    %1270 = vmatprep.subr.mxu0 0.0
    %1271 = vmatpush2.msra.mxu0 %v340
    %1272 = vmatprep.subr.mxu0 0.0
    %1273 = vmatpush2.msra.mxu0 %v339
    %1274 = vmatprep.subr.mxu0 0.0
    %1275 = vmatpush2.msra.mxu0 %v338
    %1276 = vmatprep.mubr.f32.mxu0 %v532
    %1277 = vmatmul.mubr.f32.gmra.mxu0 %v530
    %v1278 = vpop.f32.mrf.mxu0
    %v1279 = vadd.f32 %v1209, %v1278
    %v1280 = vpop.f32.mrf.mxu0
    %1281 = vdwg.mxu0
    %1282 = vmatprep.subr.mxu0 0.0
    %1283 = vmatpush1.msra.mxu0 %v369
    %1284 = vmatprep.subr.mxu0 0.0
    %1285 = vmatpush1.msra.mxu0 %v368
    %1286 = vmatprep.subr.mxu0 0.0
    %1287 = vmatpush1.msra.mxu0 %v367
    %1288 = vmatprep.subr.mxu0 0.0
    %1289 = vmatpush1.msra.mxu0 %v366
    %1290 = vmatprep.subr.mxu0 0.0
    %1291 = vmatpush1.msra.mxu0 %v365
    %1292 = vmatprep.subr.mxu0 0.0
    %1293 = vmatpush1.msra.mxu0 %v364
    %1294 = vmatprep.subr.mxu0 0.0
    %1295 = vmatpush1.msra.mxu0 %v363
    %1296 = vmatprep.subr.mxu0 0.0
    %1297 = vmatpush1.msra.mxu0 %v362
    %1298 = vmatprep.subr.mxu0 0.0
    %1299 = vmatpush1.msra.mxu0 %v361
    %1300 = vmatprep.subr.mxu0 0.0
    %1301 = vmatpush1.msra.mxu0 %v360
    %1302 = vmatprep.subr.mxu0 0.0
    %1303 = vmatpush1.msra.mxu0 %v359
    %1304 = vmatprep.subr.mxu0 0.0
    %1305 = vmatpush1.msra.mxu0 %v358
    %1306 = vmatprep.subr.mxu0 0.0
    %1307 = vmatpush1.msra.mxu0 %v357
    %1308 = vmatprep.subr.mxu0 0.0
    %1309 = vmatpush1.msra.mxu0 %v356
    %1310 = vmatprep.subr.mxu0 0.0
    %1311 = vmatpush1.msra.mxu0 %v355
    %1312 = vmatprep.subr.mxu0 0.0
    %1313 = vmatpush1.msra.mxu0 %v354
    %1314 = vmatprep.subr.mxu0 0.0
    %1315 = vmatpush2.msra.mxu0 %v385
    %1316 = vmatprep.subr.mxu0 0.0
    %1317 = vmatpush2.msra.mxu0 %v384
    %1318 = vmatprep.subr.mxu0 0.0
    %1319 = vmatpush2.msra.mxu0 %v383
    %1320 = vmatprep.subr.mxu0 0.0
    %1321 = vmatpush2.msra.mxu0 %v382
    %1322 = vmatprep.subr.mxu0 0.0
    %1323 = vmatpush2.msra.mxu0 %v381
    %1324 = vmatprep.subr.mxu0 0.0
    %1325 = vmatpush2.msra.mxu0 %v380
    %1326 = vmatprep.subr.mxu0 0.0
    %1327 = vmatpush2.msra.mxu0 %v379
    %1328 = vmatprep.subr.mxu0 0.0
    %1329 = vmatpush2.msra.mxu0 %v378
    %1330 = vmatprep.subr.mxu0 0.0
    %1331 = vmatpush2.msra.mxu0 %v377
    %1332 = vmatprep.subr.mxu0 0.0
    %1333 = vmatpush2.msra.mxu0 %v376
    %1334 = vmatprep.subr.mxu0 0.0
    %1335 = vmatpush2.msra.mxu0 %v375
    %1336 = vmatprep.subr.mxu0 0.0
    %1337 = vmatpush2.msra.mxu0 %v374
    %1338 = vmatprep.subr.mxu0 0.0
    %1339 = vmatpush2.msra.mxu0 %v373
    %1340 = vmatprep.subr.mxu0 0.0
    %1341 = vmatpush2.msra.mxu0 %v372
    %1342 = vmatprep.subr.mxu0 0.0
    %1343 = vmatpush2.msra.mxu0 %v371
    %1344 = vmatprep.subr.mxu0 0.0
    %1345 = vmatpush2.msra.mxu0 %v370
    %1346 = vmatprep.mubr.f32.mxu0 %v548
    %1347 = vmatmul.mubr.f32.gmra.mxu0 %v540
    %v1348 = vpop.f32.mrf.mxu0
    %v1349 = vadd.f32 %v1279, %v1348
    %v1350 = vpop.f32.mrf.mxu0
    %1351 = vdwg.mxu0
    %1352 = vmatprep.subr.mxu0 0.0
    %1353 = vmatpush1.msra.mxu0 %v401
    %1354 = vmatprep.subr.mxu0 0.0
    %1355 = vmatpush1.msra.mxu0 %v400
    %1356 = vmatprep.subr.mxu0 0.0
    %1357 = vmatpush1.msra.mxu0 %v399
    %1358 = vmatprep.subr.mxu0 0.0
    %1359 = vmatpush1.msra.mxu0 %v398
    %1360 = vmatprep.subr.mxu0 0.0
    %1361 = vmatpush1.msra.mxu0 %v397
    %1362 = vmatprep.subr.mxu0 0.0
    %1363 = vmatpush1.msra.mxu0 %v396
    %1364 = vmatprep.subr.mxu0 0.0
    %1365 = vmatpush1.msra.mxu0 %v395
    %1366 = vmatprep.subr.mxu0 0.0
    %1367 = vmatpush1.msra.mxu0 %v394
    %1368 = vmatprep.subr.mxu0 0.0
    %1369 = vmatpush1.msra.mxu0 %v393
    %1370 = vmatprep.subr.mxu0 0.0
    %1371 = vmatpush1.msra.mxu0 %v392
    %1372 = vmatprep.subr.mxu0 0.0
    %1373 = vmatpush1.msra.mxu0 %v391
    %1374 = vmatprep.subr.mxu0 0.0
    %1375 = vmatpush1.msra.mxu0 %v390
    %1376 = vmatprep.subr.mxu0 0.0
    %1377 = vmatpush1.msra.mxu0 %v389
    %1378 = vmatprep.subr.mxu0 0.0
    %1379 = vmatpush1.msra.mxu0 %v388
    %1380 = vmatprep.subr.mxu0 0.0
    %1381 = vmatpush1.msra.mxu0 %v387
    %1382 = vmatprep.subr.mxu0 0.0
    %1383 = vmatpush1.msra.mxu0 %v386
    %1384 = vmatprep.subr.mxu0 0.0
    %1385 = vmatpush2.msra.mxu0 %v417
    %1386 = vmatprep.subr.mxu0 0.0
    %1387 = vmatpush2.msra.mxu0 %v416
    %1388 = vmatprep.subr.mxu0 0.0
    %1389 = vmatpush2.msra.mxu0 %v415
    %1390 = vmatprep.subr.mxu0 0.0
    %1391 = vmatpush2.msra.mxu0 %v414
    %1392 = vmatprep.subr.mxu0 0.0
    %1393 = vmatpush2.msra.mxu0 %v413
    %1394 = vmatprep.subr.mxu0 0.0
    %1395 = vmatpush2.msra.mxu0 %v412
    %1396 = vmatprep.subr.mxu0 0.0
    %1397 = vmatpush2.msra.mxu0 %v411
    %1398 = vmatprep.subr.mxu0 0.0
    %1399 = vmatpush2.msra.mxu0 %v410
    %1400 = vmatprep.subr.mxu0 0.0
    %1401 = vmatpush2.msra.mxu0 %v409
    %1402 = vmatprep.subr.mxu0 0.0
    %1403 = vmatpush2.msra.mxu0 %v408
    %1404 = vmatprep.subr.mxu0 0.0
    %1405 = vmatpush2.msra.mxu0 %v407
    %1406 = vmatprep.subr.mxu0 0.0
    %1407 = vmatpush2.msra.mxu0 %v406
    %1408 = vmatprep.subr.mxu0 0.0
    %1409 = vmatpush2.msra.mxu0 %v405
    %1410 = vmatprep.subr.mxu0 0.0
    %1411 = vmatpush2.msra.mxu0 %v404
    %1412 = vmatprep.subr.mxu0 0.0
    %1413 = vmatpush2.msra.mxu0 %v403
    %1414 = vmatprep.subr.mxu0 0.0
    %1415 = vmatpush2.msra.mxu0 %v402
    %1416 = vmatprep.mubr.f32.mxu0 %v549
    %1417 = vmatmul.mubr.f32.gmra.mxu0 %v547
    %v1418 = vpop.f32.mrf.mxu0
    %v1419 = vadd.f32 %v1349, %v1418
    %v1420 = vpop.f32.mrf.mxu0
    %1421 = vdwg.mxu0
    %1422 = vmatprep.subr.mxu0 0.0
    %1423 = vmatpush1.msra.mxu0 %v433
    %1424 = vmatprep.subr.mxu0 0.0
    %1425 = vmatpush1.msra.mxu0 %v432
    %1426 = vmatprep.subr.mxu0 0.0
    %1427 = vmatpush1.msra.mxu0 %v431
    %1428 = vmatprep.subr.mxu0 0.0
    %1429 = vmatpush1.msra.mxu0 %v430
    %1430 = vmatprep.subr.mxu0 0.0
    %1431 = vmatpush1.msra.mxu0 %v429
    %1432 = vmatprep.subr.mxu0 0.0
    %1433 = vmatpush1.msra.mxu0 %v428
    %1434 = vmatprep.subr.mxu0 0.0
    %1435 = vmatpush1.msra.mxu0 %v427
    %1436 = vmatprep.subr.mxu0 0.0
    %1437 = vmatpush1.msra.mxu0 %v426
    %1438 = vmatprep.subr.mxu0 0.0
    %1439 = vmatpush1.msra.mxu0 %v425
    %1440 = vmatprep.subr.mxu0 0.0
    %1441 = vmatpush1.msra.mxu0 %v424
    %1442 = vmatprep.subr.mxu0 0.0
    %1443 = vmatpush1.msra.mxu0 %v423
    %1444 = vmatprep.subr.mxu0 0.0
    %1445 = vmatpush1.msra.mxu0 %v422
    %1446 = vmatprep.subr.mxu0 0.0
    %1447 = vmatpush1.msra.mxu0 %v421
    %1448 = vmatprep.subr.mxu0 0.0
    %1449 = vmatpush1.msra.mxu0 %v420
    %1450 = vmatprep.subr.mxu0 0.0
    %1451 = vmatpush1.msra.mxu0 %v419
    %1452 = vmatprep.subr.mxu0 0.0
    %1453 = vmatpush1.msra.mxu0 %v418
    %1454 = vmatprep.subr.mxu0 0.0
    %1455 = vmatpush2.msra.mxu0 0.0
    %1456 = vmatprep.subr.mxu0 0.0
    %1457 = vmatpush2.msra.mxu0 0.0
    %1458 = vmatprep.subr.mxu0 0.0
    %1459 = vmatpush2.msra.mxu0 0.0
    %1460 = vmatprep.subr.mxu0 0.0
    %1461 = vmatpush2.msra.mxu0 0.0
    %1462 = vmatprep.subr.mxu0 0.0
    %1463 = vmatpush2.msra.mxu0 0.0
    %1464 = vmatprep.subr.mxu0 0.0
    %1465 = vmatpush2.msra.mxu0 0.0
    %1466 = vmatprep.subr.mxu0 0.0
    %1467 = vmatpush2.msra.mxu0 0.0
    %1468 = vmatprep.subr.mxu0 0.0
    %1469 = vmatpush2.msra.mxu0 0.0
    %1470 = vmatprep.subr.mxu0 0.0
    %1471 = vmatpush2.msra.mxu0 0.0
    %1472 = vmatprep.subr.mxu0 0.0
    %1473 = vmatpush2.msra.mxu0 0.0
    %1474 = vmatprep.subr.mxu0 0.0
    %1475 = vmatpush2.msra.mxu0 0.0
    %1476 = vmatprep.subr.mxu0 0.0
    %1477 = vmatpush2.msra.mxu0 0.0
    %1478 = vmatprep.subr.mxu0 0.0
    %1479 = vmatpush2.msra.mxu0 0.0
    %1480 = vmatprep.subr.mxu0 0.0
    %1481 = vmatpush2.msra.mxu0 0.0
    %1482 = vmatprep.subr.mxu0 0.0
    %1483 = vmatpush2.msra.mxu0 0.0
    %1484 = vmatprep.subr.mxu0 0.0
    %1485 = vmatpush2.msra.mxu0 0.0
    %1486 = vmatprep.mubr.f32.mxu0 0.0
    %1487 = vmatmul.mubr.f32.gmra.mxu0 %v556
    %v1488 = vpop.f32.mrf.mxu0
    %v1489 = vadd.f32 %v1419, %v1488
    %v1490 = vpop.f32.mrf.mxu0
    %1491 = vdwg.mxu0
    %v1492 = vmax.f32 %v1489, 0.0
    %v1493 = vld [vmem:[%s3] sm:$0xff]
    %v1494 = vld [vmem:[%s3 + $0x8] sm:$0xff]
    %v1495 = vld [vmem:[%s3 + $0x10] sm:$0xff]
    %v1496 = vld [vmem:[%s3 + $0x18] sm:$0xff]
    %v1497 = vld [vmem:[%s3 + $0x20] sm:$0xff]
    %v1498 = vld [vmem:[%s3 + $0x28] sm:$0xff]
    %v1499 = vld [vmem:[%s3 + $0x30] sm:$0xff]
    %v1500 = vld [vmem:[%s3 + $0x38] sm:$0xff]
    %v1501 = vld [vmem:[%s3 + $0x40] sm:$0xff]
    %v1502 = vld [vmem:[%s3 + $0x48] sm:$0xff]
    %v1503 = vld [vmem:[%s3 + $0x50] sm:$0xff]
    %v1504 = vld [vmem:[%s3 + $0x58] sm:$0xff]
    %v1505 = vld [vmem:[%s3 + $0x60] sm:$0xff]
    %v1506 = vld [vmem:[%s3 + $0x68] sm:$0xff]
    %v1507 = vld [vmem:[%s3 + $0x70] sm:$0xff]
    %v1508 = vld [vmem:[%s3 + $0x78] sm:$0xff]
    %v1509 = vld [vmem:[%s4] sm:$0x1]
    %v1511 = vlaneseq
    %v1512 = vshrl.u32 %v1511, 7
    %v1513 = vsub.s32 0, %v1512
    %v1514 = vrot.slane %v1509, %v1513
    %1516 = vmatprep.subr.mxu0 0.0
    %1517 = vmatpush1.msra.mxu0 %v1508
    %1518 = vmatprep.subr.mxu0 0.0
    %1519 = vmatpush1.msra.mxu0 %v1507
    %1520 = vmatprep.subr.mxu0 0.0
    %1521 = vmatpush1.msra.mxu0 %v1506
    %1522 = vmatprep.subr.mxu0 0.0
    %1523 = vmatpush1.msra.mxu0 %v1505
    %1524 = vmatprep.subr.mxu0 0.0
    %1525 = vmatpush1.msra.mxu0 %v1504
    %1526 = vmatprep.subr.mxu0 0.0
    %1527 = vmatpush1.msra.mxu0 %v1503
    %1528 = vmatprep.subr.mxu0 0.0
    %1529 = vmatpush1.msra.mxu0 %v1502
    %1530 = vmatprep.subr.mxu0 0.0
    %1531 = vmatpush1.msra.mxu0 %v1501
    %1532 = vmatprep.subr.mxu0 0.0
    %1533 = vmatpush1.msra.mxu0 %v1500
    %1534 = vmatprep.subr.mxu0 0.0
    %1535 = vmatpush1.msra.mxu0 %v1499
    %1536 = vmatprep.subr.mxu0 0.0
    %1537 = vmatpush1.msra.mxu0 %v1498
    %1538 = vmatprep.subr.mxu0 0.0
    %1539 = vmatpush1.msra.mxu0 %v1497
    %1540 = vmatprep.subr.mxu0 0.0
    %1541 = vmatpush1.msra.mxu0 %v1496
    %1542 = vmatprep.subr.mxu0 0.0
    %1543 = vmatpush1.msra.mxu0 %v1495
    %1544 = vmatprep.subr.mxu0 0.0
    %1545 = vmatpush1.msra.mxu0 %v1494
    %1546 = vmatprep.subr.mxu0 0.0
    %1547 = vmatpush1.msra.mxu0 %v1493
    %1548 = vmatprep.subr.mxu0 0.0
    %1549 = vmatpush2.msra.mxu0 0.0
    %1550 = vmatprep.subr.mxu0 0.0
    %1551 = vmatpush2.msra.mxu0 0.0
    %1552 = vmatprep.subr.mxu0 0.0
    %1553 = vmatpush2.msra.mxu0 0.0
    %1554 = vmatprep.subr.mxu0 0.0
    %1555 = vmatpush2.msra.mxu0 0.0
    %1556 = vmatprep.subr.mxu0 0.0
    %1557 = vmatpush2.msra.mxu0 0.0
    %1558 = vmatprep.subr.mxu0 0.0
    %1559 = vmatpush2.msra.mxu0 0.0
    %1560 = vmatprep.subr.mxu0 0.0
    %1561 = vmatpush2.msra.mxu0 0.0
    %1562 = vmatprep.subr.mxu0 0.0
    %1563 = vmatpush2.msra.mxu0 0.0
    %1564 = vmatprep.subr.mxu0 0.0
    %1565 = vmatpush2.msra.mxu0 0.0
    %1566 = vmatprep.subr.mxu0 0.0
    %1567 = vmatpush2.msra.mxu0 0.0
    %1568 = vmatprep.subr.mxu0 0.0
    %1569 = vmatpush2.msra.mxu0 0.0
    %1570 = vmatprep.subr.mxu0 0.0
    %1571 = vmatpush2.msra.mxu0 0.0
    %1572 = vmatprep.subr.mxu0 0.0
    %1573 = vmatpush2.msra.mxu0 0.0
    %1574 = vmatprep.subr.mxu0 0.0
    %1575 = vmatpush2.msra.mxu0 0.0
    %1576 = vmatprep.subr.mxu0 0.0
    %1577 = vmatpush2.msra.mxu0 0.0
    %1578 = vmatprep.subr.mxu0 0.0
    %1579 = vmatpush2.msra.mxu0 0.0
    %1580 = vmatprep.mubr.f32.mxu0 0.0
    %1581 = vmatmul.mubr.f32.gmra.mxu0 %v1492
    %v1582 = vpop.f32.mrf.mxu0
    %v1583 = vadd.f32 %v1514, %v1582
    %v1584 = vpop.f32.mrf.mxu0
    %1585 = vdwg.mxu0
    %v1586 = vmax.f32 %v1583, 0.0
    %v1587 = vld [vmem:[%s5] sm:$0xff]
    %v1588 = vld [vmem:[%s5 + $0x8] sm:$0xff]
    %v1589 = vld [vmem:[%s5 + $0x10] sm:$0xff]
    %v1590 = vld [vmem:[%s5 + $0x18] sm:$0xff]
    %v1591 = vld [vmem:[%s5 + $0x20] sm:$0xff]
    %v1592 = vld [vmem:[%s5 + $0x28] sm:$0xff]
    %v1593 = vld [vmem:[%s5 + $0x30] sm:$0xff]
    %v1594 = vld [vmem:[%s5 + $0x38] sm:$0xff]
    %v1595 = vld [vmem:[%s5 + $0x40] sm:$0xff]
    %v1596 = vld [vmem:[%s5 + $0x48] sm:$0xff]
    %v1597 = vld [vmem:[%s5 + $0x50] sm:$0xff]
    %v1598 = vld [vmem:[%s5 + $0x58] sm:$0xff]
    %v1599 = vld [vmem:[%s5 + $0x60] sm:$0xff]
    %v1600 = vld [vmem:[%s5 + $0x68] sm:$0xff]
    %v1601 = vld [vmem:[%s5 + $0x70] sm:$0xff]
    %v1602 = vld [vmem:[%s5 + $0x78] sm:$0xff]
    %v1603 = vld [vmem:[%s6] sm:$0x1]
    %v1605 = vlaneseq
    %v1606 = vshrl.u32 %v1605, 7
    %v1607 = vsub.s32 0, %v1606
    %v1608 = vrot.slane %v1603, %v1607
    %1610 = vmatprep.subr.mxu0 0.0
    %1611 = vmatpush1.msra.mxu0 %v1602
    %1612 = vmatprep.subr.mxu0 0.0
    %1613 = vmatpush1.msra.mxu0 %v1601
    %1614 = vmatprep.subr.mxu0 0.0
    %1615 = vmatpush1.msra.mxu0 %v1600
    %1616 = vmatprep.subr.mxu0 0.0
    %1617 = vmatpush1.msra.mxu0 %v1599
    %1618 = vmatprep.subr.mxu0 0.0
    %1619 = vmatpush1.msra.mxu0 %v1598
    %1620 = vmatprep.subr.mxu0 0.0
    %1621 = vmatpush1.msra.mxu0 %v1597
    %1622 = vmatprep.subr.mxu0 0.0
    %1623 = vmatpush1.msra.mxu0 %v1596
    %1624 = vmatprep.subr.mxu0 0.0
    %1625 = vmatpush1.msra.mxu0 %v1595
    %1626 = vmatprep.subr.mxu0 0.0
    %1627 = vmatpush1.msra.mxu0 %v1594
    %1628 = vmatprep.subr.mxu0 0.0
    %1629 = vmatpush1.msra.mxu0 %v1593
    %1630 = vmatprep.subr.mxu0 0.0
    %1631 = vmatpush1.msra.mxu0 %v1592
    %1632 = vmatprep.subr.mxu0 0.0
    %1633 = vmatpush1.msra.mxu0 %v1591
    %1634 = vmatprep.subr.mxu0 0.0
    %1635 = vmatpush1.msra.mxu0 %v1590
    %1636 = vmatprep.subr.mxu0 0.0
    %1637 = vmatpush1.msra.mxu0 %v1589
    %1638 = vmatprep.subr.mxu0 0.0
    %1639 = vmatpush1.msra.mxu0 %v1588
    %1640 = vmatprep.subr.mxu0 0.0
    %1641 = vmatpush1.msra.mxu0 %v1587
    %1642 = vmatprep.subr.mxu0 0.0
    %1643 = vmatpush2.msra.mxu0 0.0
    %1644 = vmatprep.subr.mxu0 0.0
    %1645 = vmatpush2.msra.mxu0 0.0
    %1646 = vmatprep.subr.mxu0 0.0
    %1647 = vmatpush2.msra.mxu0 0.0
    %1648 = vmatprep.subr.mxu0 0.0
    %1649 = vmatpush2.msra.mxu0 0.0
    %1650 = vmatprep.subr.mxu0 0.0
    %1651 = vmatpush2.msra.mxu0 0.0
    %1652 = vmatprep.subr.mxu0 0.0
    %1653 = vmatpush2.msra.mxu0 0.0
    %1654 = vmatprep.subr.mxu0 0.0
    %1655 = vmatpush2.msra.mxu0 0.0
    %1656 = vmatprep.subr.mxu0 0.0
    %1657 = vmatpush2.msra.mxu0 0.0
    %1658 = vmatprep.subr.mxu0 0.0
    %1659 = vmatpush2.msra.mxu0 0.0
    %1660 = vmatprep.subr.mxu0 0.0
    %1661 = vmatpush2.msra.mxu0 0.0
    %1662 = vmatprep.subr.mxu0 0.0
    %1663 = vmatpush2.msra.mxu0 0.0
    %1664 = vmatprep.subr.mxu0 0.0
    %1665 = vmatpush2.msra.mxu0 0.0
    %1666 = vmatprep.subr.mxu0 0.0
    %1667 = vmatpush2.msra.mxu0 0.0
    %1668 = vmatprep.subr.mxu0 0.0
    %1669 = vmatpush2.msra.mxu0 0.0
    %1670 = vmatprep.subr.mxu0 0.0
    %1671 = vmatpush2.msra.mxu0 0.0
    %1672 = vmatprep.subr.mxu0 0.0
    %1673 = vmatpush2.msra.mxu0 0.0
    %1674 = vmatprep.mubr.f32.mxu0 0.0
    %1675 = vmatmul.mubr.f32.gmra.mxu0 %v1586
    %v1676 = vpop.f32.mrf.mxu0
    %v1677 = vadd.f32 %v1608, %v1676
    %v1678 = vpop.f32.mrf.mxu0
    %1679 = vdwg.mxu0
    %1680 = vst [vmem:[#allocation2] sm:$0x3] %v1677
    // Predicated region
    $region30: #{net_forward.5} parent=1 // pred_check
      _
    $region31: #{net_forward.5} parent=1 // pred_check_branch
      %1682 = sbr.rel (0) target = $region33
    $region32: #{net_forward.5} parent=1 // pred_region
      %s1684 = ssub.s32 32, 32
      %1685 = vsyncadd [#allocation3], %s1684
      %s1687 = sshll.u32 [#allocation2], 4
      %s1688 = int_to_ptr.vmem [resolvable:$true] %s1687
      %1690 = dma.vmem_to_hbm [thread:$0]  %s1688, 32, %s7, [#allocation3]
    $region33: #{net_forward.5} parent=1 // pred_fallthru
      _
    // Predicated region
    $region34: #{net_forward.5} parent=1 // pred_check
      _
    $region35: #{net_forward.5} parent=1 // pred_check_branch
      %1692 = sbr.rel (0) target = $region37
    $region36: #{net_forward.5} parent=1 // pred_region
      %1693 = dma.done [#allocation3], 32
    $region37: #{net_forward.5} parent=1 // pred_fallthru
      _
    %1694 = vsyncpa [#allocation3], 1

</llo_original>
